<compile_context>
chip_gen: v6e
topology: v6e:2x2x1
jax: 0.10.0
libtpu: 0.0.40
codegen_flags: <defaults>
</compile_context>

<pallas_src>
import math

import jax
import jax.numpy as jnp
from jax.experimental import pallas as pl
from jax.experimental.pallas import tpu as pltpu

# ---------------------------------------------------------------------------
# Small problem configuration consistent with DiscreteContinuousEncoder.__init__
# ---------------------------------------------------------------------------
B = 2                       # batch
CIN = 4                     # inp_chans
COUT = 4                    # out_chans
HIN, WIN = 16, 32           # in_shape  (nlat_in, nlon_in)
HOUT, WOUT = 8, 16          # out_shape (nlat_out, nlon_out)
KERNEL_SHAPE = (3, 3)
BASIS_TYPE = "morlet"
K = KERNEL_SHAPE[0] * KERNEL_SHAPE[1]   # morlet basis -> kernel_size = kx*ky
PSCALE = WIN // WOUT                    # longitudinal scale of the contraction

CDIM = CIN * HIN * WIN                  # 2048  contraction length (c, hi, wi)
ODIM = COUT * HOUT * WOUT               # 512   flattened output per batch (o, ho, wo)


def _compute_cutoff_radius(nlat, kernel_shape, basis_type):
    theta_cutoff_factor = {"piecewise linear": 0.5, "morlet": 0.5,
                           "zernike": math.sqrt(2.0)}
    return (kernel_shape[0] + 1) * theta_cutoff_factor[basis_type] * math.pi / float(nlat - 1)


# ---------------------------------------------------------------------------
# Pallas kernel: one batch per grid step, single MXU matmul, lane-dense output.
# ---------------------------------------------------------------------------
def disco_encoder_kernel(x_ref, m_ref, o_ref):
    # x_ref : (1, 1, CDIM)  bf16  flattened (c, hi, wi) activation row for this batch
    # m_ref : (CDIM, ODIM)  bf16  folded qw * psi * weight operator (roll folded in), resident
    # o_ref : (1, 1, ODIM)  output slab (o, ho, wo) for this batch, lane-dense (512 lanes)
    acc = jnp.dot(x_ref[0], m_ref[...], preferred_element_type=jnp.float32)   # (1, ODIM) f32
    o_ref[0] = acc.astype(o_ref.dtype)


def fold_operator(quad_weights, psi, weight):
    """Parameter-side precompute (independent of x, done once):
    M^T[(c,hi,wi), (o,ho,wo)] = sum_k weight[o,c,k] * psi[k,ho,hi,(wi - wo*pscale) % WIN] * qw[hi]
    """
    psi_q = psi.astype(jnp.float32) * quad_weights.astype(jnp.float32)[None, None, :, None]
    # fold the channel/basis weight:  m[o, ho, c, hi, wi] = sum_k w[o,c,k] * psi_q[k,ho,hi,wi]
    m = jnp.einsum("ock,kqhw->oqchw", weight.astype(jnp.float32), psi_q)
    # fold the per-output-longitude roll of the DISCO contraction into the operator
    m_roll = jnp.stack([jnp.roll(m, wo * PSCALE, axis=-1) for wo in range(WOUT)], axis=2)
    # rows: (o, ho, wo)   cols: (c, hi, wi)   -> transpose so the kernel RHS is (CDIM, ODIM)
    m_mat = m_roll.reshape(ODIM, CDIM).T
    # bf16 MXU inputs, f32 accumulation in-kernel (validated against the f32 reference below)
    return m_mat.astype(jnp.bfloat16)


def disco_encoder_forward(x, quad_weights, psi, weight):
    """x: (B, CIN, HIN, WIN) NCHW. Returns (B, COUT, HOUT, WOUT) in x.dtype."""
    m_mat = fold_operator(quad_weights, psi, weight)              # (CDIM, ODIM) bf16
    x_flat = x.reshape(B, 1, CDIM).astype(jnp.bfloat16)           # (B, 1, CDIM)

    out = pl.pallas_call(
        disco_encoder_kernel,
        out_shape=jax.ShapeDtypeStruct((B, 1, ODIM), x.dtype),
        grid_spec=pltpu.PrefetchScalarGridSpec(
            num_scalar_prefetch=0,
            grid=(B,),
            in_specs=[
                pl.BlockSpec((1, 1, CDIM), lambda b: (b, 0, 0)),
                pl.BlockSpec((CDIM, ODIM), lambda b: (0, 0)),      # constant -> stays resident
            ],
            out_specs=pl.BlockSpec((1, 1, ODIM), lambda b: (b, 0, 0)),
        ),
        compiler_params=pltpu.CompilerParams(
            dimension_semantics=("parallel",)),
    )(x_flat, m_mat)

    # layout plumbing only: (B, 1, ODIM) -> NCHW (B, COUT, HOUT, WOUT)
    return out.reshape(B, COUT, HOUT, WOUT)


# ---------------------------------------------------------------------------
# Pure-JAX reference (mirrors the torch fallback path of the S2 DISCO conv, f32 compute)
# ---------------------------------------------------------------------------
def reference_forward(x, quad_weights, psi, weight):
    xf = x.astype(jnp.float32) * quad_weights[None, None, :, None]
    ys = []
    for wo in range(WOUT):
        xr = jnp.roll(xf, -wo * PSCALE, axis=-1)
        ys.append(jnp.einsum("kqhw,bchw->bckq", psi, xr))
    y = jnp.stack(ys, axis=-1)                             # (B, CIN, K, HOUT, WOUT)
    out = jnp.einsum("bckqw,ock->boqw", y, weight)         # (B, COUT, HOUT, WOUT)
    return out.astype(x.dtype)


if __name__ == "__main__":
    key = jax.random.PRNGKey(0)
    k1, k2, k3 = jax.random.split(key, 3)

    # input (NCHW), bf16 to exercise the float32-compute / cast-back behaviour
    x = jax.random.normal(k1, (B, CIN, HIN, WIN), jnp.float32).astype(jnp.bfloat16)

    # deterministic parameters (shapes from DiscreteContinuousConvS2.__init__)
    weight = jax.random.normal(k2, (COUT, CIN, K), jnp.float32) / math.sqrt(CIN * K)

    # equiangular quadrature weights (sin(theta) * dtheta * dphi)
    theta_in = jnp.linspace(0.0, math.pi, HIN)
    quad_weights = jnp.sin(theta_in) * (math.pi / (HIN - 1)) * (2.0 * math.pi / WIN)

    # synthetic DISCO filter tensor psi with the morlet theta-cutoff support mask
    # TODO(synk): the exact Morlet S2 filter-basis precomputation from torch_harmonics
    # is not replicated; a deterministic dense stand-in with identical shape and
    # compact (theta_cutoff) support is used instead.
    theta_cutoff = _compute_cutoff_radius(HIN, KERNEL_SHAPE, BASIS_TYPE)
    theta_out = jnp.linspace(0.0, math.pi, HOUT)
    phi_in = jnp.linspace(0.0, 2.0 * math.pi, WIN, endpoint=False)
    cos_d = (jnp.cos(theta_out)[:, None, None] * jnp.cos(theta_in)[None, :, None]
             + jnp.sin(theta_out)[:, None, None] * jnp.sin(theta_in)[None, :, None]
             * jnp.cos(phi_in)[None, None, :])
    dist = jnp.arccos(jnp.clip(cos_d, -1.0, 1.0))          # (HOUT, HIN, WIN)
    mask = (dist <= theta_cutoff).astype(jnp.float32)
    psi = jax.random.normal(k3, (K, HOUT, HIN, WIN), jnp.float32) * mask[None]

    out = jax.block_until_ready(disco_encoder_forward(x, quad_weights, psi, weight))
    assert out.shape == (B, COUT, HOUT, WOUT) and out.dtype == x.dtype

    ref = reference_forward(x, quad_weights, psi, weight)
    err = float(jnp.max(jnp.abs(out.astype(jnp.float32) - ref.astype(jnp.float32))))
    # bf16 MXU inputs (f32 accumulation) + bf16 output cast; slightly looser than pure-f32 path
    assert err < 3e-2, f"max abs err vs reference: {err}"

    print("KERNEL_OK")
</pallas_src>

<mosaic_0001>
module attributes {stable_mosaic.version = 11 : i64} {
  func.func @disco_encoder_kernel(%arg0: i32, %arg1: memref<1x1x2048xbf16, #tpu.memory_space<vmem>>, %arg2: memref<2048x512xbf16, #tpu.memory_space<vmem>>, %arg3: memref<1x1x512xbf16, #tpu.memory_space<vmem>>) attributes {dimension_semantics = [#tpu.dimension_semantics<parallel>], iteration_bounds = array<i64: 2>, scalar_prefetch = 0 : i64, scratch_operands = 0 : i64, tpu.core_type = #tpu.core_type<tc>, window_params = [{transform_indices = @transform_0, window_bounds = array<i64: 1, 1, 2048>}, {pipeline_mode = #tpu.pipeline_mode<synchronous>, transform_indices = @transform_1, window_bounds = array<i64: 2048, 512>}, {transform_indices = @transform_2, window_bounds = array<i64: 1, 1, 512>}]} {
    %c0 = arith.constant 0 : index
    %c0_0 = arith.constant 0 : index
    %c0_1 = arith.constant 0 : index
    %0 = vector.load %arg1[%c0, %c0_0, %c0_1] : memref<1x1x2048xbf16, #tpu.memory_space<vmem>>, vector<1x1x2048xbf16>
    %1 = vector.shape_cast %0 : vector<1x1x2048xbf16> to vector<1x2048xbf16>
    %c0_2 = arith.constant 0 : index
    %c0_3 = arith.constant 0 : index
    %2 = vector.load %arg2[%c0_2, %c0_3] : memref<2048x512xbf16, #tpu.memory_space<vmem>>, vector<2048x512xbf16>
    %cst = arith.constant dense<0.000000e+00> : vector<1x512xf32>
    %3 = tpu.matmul %1, %2, %cst {dimension_numbers = #tpu.dot_dimension_numbers<[1], [0], [0], [1], [0, 0, 1, 1], [], []>} : vector<1x2048xbf16>, vector<2048x512xbf16>, vector<1x512xf32> -> vector<1x512xf32>
    %4 = arith.truncf %3 : vector<1x512xf32> to vector<1x512xbf16>
    %c0_4 = arith.constant 0 : index
    %c0_5 = arith.constant 0 : index
    %c0_6 = arith.constant 0 : index
    %5 = vector.load %arg3[%c0_4, %c0_5, %c0_6] : memref<1x1x512xbf16, #tpu.memory_space<vmem>>, vector<1x1x512xbf16>
    %6 = vector.shape_cast %5 : vector<1x1x512xbf16> to vector<1x512xbf16>
    %7 = vector.shape_cast %4 : vector<1x512xbf16> to vector<1x1x512xbf16>
    tpu.vector_store %arg3[%c0_4, %c0_5, %c0_6], %7 {strides = array<i32>} : memref<1x1x512xbf16, #tpu.memory_space<vmem>>, vector<1x1x512xbf16>,
    return
  }
  func.func @transform_0(%arg0: i32) -> (i32, i32, i32) {
    %c0_i32 = arith.constant 0 : i32
    %c0_i32_0 = arith.constant 0 : i32
    %c0_i32_1 = arith.constant 0 : i32
    return %arg0, %c0_i32, %c0_i32_0 : i32, i32, i32
  }
  func.func @transform_1(%arg0: i32) -> (i32, i32) {
    %c0_i32 = arith.constant 0 : i32
    %c0_i32_0 = arith.constant 0 : i32
    %c0_i32_1 = arith.constant 0 : i32
    return %c0_i32, %c0_i32_0 : i32, i32
  }
  func.func @transform_2(%arg0: i32) -> (i32, i32, i32) {
    %c0_i32 = arith.constant 0 : i32
    %c0_i32_0 = arith.constant 0 : i32
    %c0_i32_1 = arith.constant 0 : i32
    return %arg0, %c0_i32, %c0_i32_0 : i32, i32, i32
  }
}

</mosaic_0001>

<llo_original>
// kernel: tpu_custom_call.1
$region0: #{tpu_custom_call.1}
  #allocation0 [shape = 'u32[]', space=smem, size = 0x4, offset = 0x4, fixed_abs, tag = 'smem constant byte address 0x4 - core index']
  #allocation1 [shape = 'u32[144,128]{1,0:T(1,128)}', space=vmem, size = 0x12000, scoped, tag = 'internal scratch']
  %s0 = inlined_call_operand.vmem [shape: bf16[2,1,2048], index: 0, kind: input, shape index: {}]
  %s1 = inlined_call_operand.hbm [shape: bf16[2048,512], index: 1, kind: input, shape index: {}]
  %s2 = inlined_call_operand.vmem [shape: bf16[2,1,512], index: 2, kind: output, shape index: {}]
  %s3 = sld [smem:[#allocation0]]
  $region45: #{tpu_custom_call.1} parent=0
    _
  %s5 = ssub.s32 1, %s3
  %s6 = scalar_select 0, %s5, %s3
  $region1: #{tpu_custom_call.1} parent=0
    #allocation2 [shape = 'u8[2097152]{0}', space=vmem, size = 0x200000, scoped, tag = 'input window, operand 1, single buffered']
    #allocation3 [shape = 's32[2]{0}', space=sflag, size = 0x8, scoped, tag = 'scoped memory for tpu_custom_call.1']
    %7 = vsyncpa [#allocation3], 0
    loop: start=0, step=1, limit=4
    $region2: #{tpu_custom_call.1} parent=1 // loop_pre_header
      _
    $region3: #{tpu_custom_call.1} parent=1 // loop_header
      %s9 = sphi 0, %s13
      %p10 = scmp.ge.s32.totalorder %s9, 4
      %s19 = sphi 0, %s21
      %s22 = sphi 0, %s19
      %s23 = sphi 0, %s22
      %s39 = sphi 0, %s23
      %s43 = sphi 0, %s43
      %s45 = sphi 0, %s43
      %s46 = sphi 0, %s45
      %s60 = sphi 0, %s46
      %s66 = sphi 0, %s68
      %s69 = sphi 0, %s66
      %s70 = sphi 0, %s69
      %s86 = sphi 0, %s70
    $region4: #{tpu_custom_call.1} parent=1 // loop_header_branch
      %12 = sbr.rel (%p10) target = $region8
    $region5: #{tpu_custom_call.1} parent=1 // loop_body
      %s14 = ssub.s32 %s9, 1
      %s15 = ssub.s32 %s9, 2
      %s16 = sadd.s32 %s9, 1
      %s17 = ssub.s32 %s9, %s16
      %p18 = scmp.eq.s32.totalorder %s17, 0
      %s20 = sadd.s32 %s19, 1
      %s21 = scalar_select %p18, %s19, %s20
      %p24 = pneg %p18
      %p25 = scmp.eq.s32.totalorder %s9, 1
      %p26 = por %p24, %p25
      %p27 = scmp.ne.s32.totalorder %s19, %s22
      %p28 = scmp.eq.s32.totalorder %s9, 0
      %p29 = por %p27, %p28
      %p30 = scmp.ne.s32.totalorder %s19, %s22
      %p31 = scmp.eq.s32.totalorder %s14, 1
      %p32 = por %p30, %p31
      %p33 = scmp.ne.s32.totalorder %s22, %s23
      %p34 = scmp.eq.s32.totalorder %s14, 0
      %p35 = por %p33, %p34
      %p36 = scmp.ne.s32.totalorder %s22, %s23
      %p37 = scmp.eq.s32.totalorder %s15, 1
      %p38 = por %p36, %p37
      %p40 = scmp.ne.s32.totalorder %s23, %s39
      %p41 = scmp.eq.s32.totalorder %s15, 0
      %p42 = por %p40, %p41
      %s44 = sadd.s32 %s43, 1
      %p47 = scmp.eq.s32.totalorder %s9, 1
      %p48 = scmp.ne.s32.totalorder %s43, %s45
      %p49 = scmp.eq.s32.totalorder %s9, 0
      %p50 = por %p48, %p49
      %p51 = scmp.ne.s32.totalorder %s43, %s45
      %p52 = scmp.eq.s32.totalorder %s14, 1
      %p53 = por %p51, %p52
      %p54 = scmp.ne.s32.totalorder %s45, %s46
      %p55 = scmp.eq.s32.totalorder %s14, 0
      %p56 = por %p54, %p55
      %p57 = scmp.ne.s32.totalorder %s45, %s46
      %p58 = scmp.eq.s32.totalorder %s15, 1
      %p59 = por %p57, %p58
      %p61 = scmp.ne.s32.totalorder %s46, %s60
      %p62 = scmp.eq.s32.totalorder %s15, 0
      %p63 = por %p61, %p62
      %s64 = ssub.s32 %s9, %s16
      %p65 = scmp.eq.s32.totalorder %s64, 0
      %s67 = sadd.s32 %s66, 1
      %s68 = scalar_select %p65, %s66, %s67
      %p71 = pneg %p65
      %p72 = scmp.eq.s32.totalorder %s9, 1
      %p73 = por %p71, %p72
      %p74 = scmp.ne.s32.totalorder %s66, %s69
      %p75 = scmp.eq.s32.totalorder %s9, 0
      %p76 = por %p74, %p75
      %p77 = scmp.ne.s32.totalorder %s66, %s69
      %p78 = scmp.eq.s32.totalorder %s14, 1
      %p79 = por %p77, %p78
      %p80 = scmp.ne.s32.totalorder %s69, %s70
      %p81 = scmp.eq.s32.totalorder %s14, 0
      %p82 = por %p80, %p81
      %p83 = scmp.ne.s32.totalorder %s69, %s70
      %p84 = scmp.eq.s32.totalorder %s15, 1
      %p85 = por %p83, %p84
      %p87 = scmp.ne.s32.totalorder %s70, %s86
      %p88 = scmp.eq.s32.totalorder %s15, 0
      %p89 = por %p87, %p88
      %p90 = scmp.le.s32.totalorder 1, %s9
      %p91 = scmp.lt.s32.totalorder %s9, 3
      %p92 = pnand %p90, %p91
      %p93 = pneg %p92
      // Predicated region
      $region9: #{tpu_custom_call.1} parent=5 // pred_check
        _
      $region10: #{tpu_custom_call.1} parent=5 // pred_check_branch
        %95 = sbr.rel (%p92) target = $region12
      $region11: #{tpu_custom_call.1} parent=5 // pred_region
        %s96 = ssub.s32 %s9, 1
        // Predicated region
        $region13: #{tpu_custom_call.1} parent=11 // pred_check
          %p97 = pneg %p56
        $region14: #{tpu_custom_call.1} parent=11 // pred_check_branch
          %99 = sbr.rel (%p97) target = $region16
        $region15: #{tpu_custom_call.1} parent=11 // pred_region
          %s101 = ssub.s32 65536, 65536
          %102 = vsyncadd [#allocation3], %s101
          %s103 = sshll.u32 [#allocation2], 4
          %s104 = int_to_ptr.vmem [resolvable:$true] %s103
          %109 = dma.hbm_to_vmem [thread:$0]  %s1, 65536, %s104, [#allocation3], 256, 256, 16
        $region16: #{tpu_custom_call.1} parent=11 // pred_fallthru
          _
      $region12: #{tpu_custom_call.1} parent=5 // pred_fallthru
        _
      %p110 = scmp.lt.s32.totalorder %s9, 2
      // Predicated region
      $region17: #{tpu_custom_call.1} parent=5 // pred_check
        %p111 = pneg %p110
      $region18: #{tpu_custom_call.1} parent=5 // pred_check_branch
        %113 = sbr.rel (%p111) target = $region20
      $region19: #{tpu_custom_call.1} parent=5 // pred_region
        // Predicated region
        $region21: #{tpu_custom_call.1} parent=19 // pred_check
          %p114 = pneg %p29
        $region22: #{tpu_custom_call.1} parent=19 // pred_check_branch
          %116 = sbr.rel (%p114) target = $region24
        $region23: #{tpu_custom_call.1} parent=19 // pred_region
          %p117 = scmp.lt.s32.totalorder %s9, 1
          %s118 = scalar_select %p117, %s9, 1
          %s119 = smul.addr %s118, 16
          %s120 = scalar_lea.vmem %s0, %s119
        $region24: #{tpu_custom_call.1} parent=19 // pred_fallthru
          _
      $region20: #{tpu_custom_call.1} parent=5 // pred_fallthru
        _
      %p121 = scmp.le.s32.totalorder 1, %s9
      %p122 = scmp.lt.s32.totalorder %s9, 3
      %p123 = pnand %p121, %p122
      %p124 = pneg %p123
      // Predicated region
      $region25: #{tpu_custom_call.1} parent=5 // pred_check
        _
      $region26: #{tpu_custom_call.1} parent=5 // pred_check_branch
        %126 = sbr.rel (%p123) target = $region28
      $region27: #{tpu_custom_call.1} parent=5 // pred_region
        %s127 = ssub.s32 %s9, 1
        // Predicated region
        $region29: #{tpu_custom_call.1} parent=27 // pred_check
          %p128 = pneg %p56
        $region30: #{tpu_custom_call.1} parent=27 // pred_check_branch
          %130 = sbr.rel (%p128) target = $region32
        $region31: #{tpu_custom_call.1} parent=27 // pred_region
          %131 = dma.done [#allocation3], 65536
        $region32: #{tpu_custom_call.1} parent=27 // pred_fallthru
          _
        %p132 = scmp.lt.s32.totalorder %s14, 1
        %s133 = scalar_select %p132, %s14, 1
        %s134 = smul.addr %s133, 16
        %s135 = scalar_lea.vmem %s0, %s134
        %p136 = pneg %p35
        %p137 = pneg %p32
        %p138 = pneg %p56
        %p139 = pneg %p53
        %p140 = pneg %p82
        %p141 = pneg %p79
        %p142 = scmp.lt.s32.totalorder %s14, 1
        %s143 = scalar_select %p142, %s14, 1
        %s144 = smul.addr %s143, 4
        %s145 = scalar_lea.vmem %s2, %s144
        %p146 = scmp.lt.s32.totalorder %s14, 1
        %s147 = scalar_select %p146, %s14, 1
        %s148 = smul.addr %s147, 16
        %s149 = scalar_lea.vmem %s0, %s148
        %p150 = scmp.lt.s32.totalorder %s14, 1
        %s151 = scalar_select %p150, %s14, 1
        %s152 = smul.addr %s151, 4
        %s153 = scalar_lea.vmem %s2, %s152
        %v154 = vld [vmem:[%s149] sm:$0xff]
        %v155 = vld [vmem:[%s149 + $0x8] sm:$0xff]
        %v156 = vld [vmem:[#allocation2] sm:$0xff]
        %v157 = vld [vmem:[#allocation2 + $0x8] sm:$0xff]
        %v158 = vld [vmem:[#allocation2 + $0x10] sm:$0xff]
        %v159 = vld [vmem:[#allocation2 + $0x18] sm:$0xff]
        %v160 = vld [vmem:[#allocation2 + $0x20] sm:$0xff]
        %v161 = vld [vmem:[#allocation2 + $0x28] sm:$0xff]
        %v162 = vld [vmem:[#allocation2 + $0x30] sm:$0xff]
        %v163 = vld [vmem:[#allocation2 + $0x38] sm:$0xff]
        %v164 = vld [vmem:[#allocation2 + $0x40] sm:$0xff]
        %v165 = vld [vmem:[#allocation2 + $0x48] sm:$0xff]
        %v166 = vld [vmem:[#allocation2 + $0x50] sm:$0xff]
        %v167 = vld [vmem:[#allocation2 + $0x58] sm:$0xff]
        %v168 = vld [vmem:[#allocation2 + $0x60] sm:$0xff]
        %v169 = vld [vmem:[#allocation2 + $0x68] sm:$0xff]
        %v170 = vld [vmem:[#allocation2 + $0x70] sm:$0xff]
        %v171 = vld [vmem:[#allocation2 + $0x78] sm:$0xff]
        %v172 = vld [vmem:[#allocation2 + $0x80] sm:$0xff]
        %v173 = vld [vmem:[#allocation2 + $0x88] sm:$0xff]
        %v174 = vld [vmem:[#allocation2 + $0x90] sm:$0xff]
        %v175 = vld [vmem:[#allocation2 + $0x98] sm:$0xff]
        %v176 = vld [vmem:[#allocation2 + $0xa0] sm:$0xff]
        %v177 = vld [vmem:[#allocation2 + $0xa8] sm:$0xff]
        %v178 = vld [vmem:[#allocation2 + $0xb0] sm:$0xff]
        %v179 = vld [vmem:[#allocation2 + $0xb8] sm:$0xff]
        %v180 = vld [vmem:[#allocation2 + $0xc0] sm:$0xff]
        %v181 = vld [vmem:[#allocation2 + $0xc8] sm:$0xff]
        %v182 = vld [vmem:[#allocation2 + $0xd0] sm:$0xff]
        %v183 = vld [vmem:[#allocation2 + $0xd8] sm:$0xff]
        %v184 = vld [vmem:[#allocation2 + $0xe0] sm:$0xff]
        %v185 = vld [vmem:[#allocation2 + $0xe8] sm:$0xff]
        %v186 = vld [vmem:[#allocation2 + $0xf0] sm:$0xff]
        %v187 = vld [vmem:[#allocation2 + $0xf8] sm:$0xff]
        %v188 = vld [vmem:[#allocation2 + $0x100] sm:$0xff]
        %v189 = vld [vmem:[#allocation2 + $0x108] sm:$0xff]
        %v190 = vld [vmem:[#allocation2 + $0x110] sm:$0xff]
        %v191 = vld [vmem:[#allocation2 + $0x118] sm:$0xff]
        %v192 = vld [vmem:[#allocation2 + $0x120] sm:$0xff]
        %v193 = vld [vmem:[#allocation2 + $0x128] sm:$0xff]
        %v194 = vld [vmem:[#allocation2 + $0x130] sm:$0xff]
        %v195 = vld [vmem:[#allocation2 + $0x138] sm:$0xff]
        %v196 = vld [vmem:[#allocation2 + $0x140] sm:$0xff]
        %v197 = vld [vmem:[#allocation2 + $0x148] sm:$0xff]
        %v198 = vld [vmem:[#allocation2 + $0x150] sm:$0xff]
        %v199 = vld [vmem:[#allocation2 + $0x158] sm:$0xff]
        %v200 = vld [vmem:[#allocation2 + $0x160] sm:$0xff]
        %v201 = vld [vmem:[#allocation2 + $0x168] sm:$0xff]
        %v202 = vld [vmem:[#allocation2 + $0x170] sm:$0xff]
        %v203 = vld [vmem:[#allocation2 + $0x178] sm:$0xff]
        %v204 = vld [vmem:[#allocation2 + $0x180] sm:$0xff]
        %v205 = vld [vmem:[#allocation2 + $0x188] sm:$0xff]
        %v206 = vld [vmem:[#allocation2 + $0x190] sm:$0xff]
        %v207 = vld [vmem:[#allocation2 + $0x198] sm:$0xff]
        %v208 = vld [vmem:[#allocation2 + $0x1a0] sm:$0xff]
        %v209 = vld [vmem:[#allocation2 + $0x1a8] sm:$0xff]
        %v210 = vld [vmem:[#allocation2 + $0x1b0] sm:$0xff]
        %v211 = vld [vmem:[#allocation2 + $0x1b8] sm:$0xff]
        %v212 = vld [vmem:[#allocation2 + $0x1c0] sm:$0xff]
        %v213 = vld [vmem:[#allocation2 + $0x1c8] sm:$0xff]
        %v214 = vld [vmem:[#allocation2 + $0x1d0] sm:$0xff]
        %v215 = vld [vmem:[#allocation2 + $0x1d8] sm:$0xff]
        %v216 = vld [vmem:[#allocation2 + $0x1e0] sm:$0xff]
        %v217 = vld [vmem:[#allocation2 + $0x1e8] sm:$0xff]
        %v218 = vld [vmem:[#allocation2 + $0x1f0] sm:$0xff]
        %v219 = vld [vmem:[#allocation2 + $0x1f8] sm:$0xff]
        %v220 = vld [vmem:[#allocation2 + $0x200] sm:$0xff]
        %v221 = vld [vmem:[#allocation2 + $0x208] sm:$0xff]
        %v222 = vld [vmem:[#allocation2 + $0x210] sm:$0xff]
        %v223 = vld [vmem:[#allocation2 + $0x218] sm:$0xff]
        %v224 = vld [vmem:[#allocation2 + $0x220] sm:$0xff]
        %v225 = vld [vmem:[#allocation2 + $0x228] sm:$0xff]
        %v226 = vld [vmem:[#allocation2 + $0x230] sm:$0xff]
        %v227 = vld [vmem:[#allocation2 + $0x238] sm:$0xff]
        %v228 = vld [vmem:[#allocation2 + $0x240] sm:$0xff]
        %v229 = vld [vmem:[#allocation2 + $0x248] sm:$0xff]
        %v230 = vld [vmem:[#allocation2 + $0x250] sm:$0xff]
        %v231 = vld [vmem:[#allocation2 + $0x258] sm:$0xff]
        %v232 = vld [vmem:[#allocation2 + $0x260] sm:$0xff]
        %v233 = vld [vmem:[#allocation2 + $0x268] sm:$0xff]
        %v234 = vld [vmem:[#allocation2 + $0x270] sm:$0xff]
        %v235 = vld [vmem:[#allocation2 + $0x278] sm:$0xff]
        %v236 = vld [vmem:[#allocation2 + $0x280] sm:$0xff]
        %v237 = vld [vmem:[#allocation2 + $0x288] sm:$0xff]
        %v238 = vld [vmem:[#allocation2 + $0x290] sm:$0xff]
        %v239 = vld [vmem:[#allocation2 + $0x298] sm:$0xff]
        %v240 = vld [vmem:[#allocation2 + $0x2a0] sm:$0xff]
        %v241 = vld [vmem:[#allocation2 + $0x2a8] sm:$0xff]
        %v242 = vld [vmem:[#allocation2 + $0x2b0] sm:$0xff]
        %v243 = vld [vmem:[#allocation2 + $0x2b8] sm:$0xff]
        %v244 = vld [vmem:[#allocation2 + $0x2c0] sm:$0xff]
        %v245 = vld [vmem:[#allocation2 + $0x2c8] sm:$0xff]
        %v246 = vld [vmem:[#allocation2 + $0x2d0] sm:$0xff]
        %v247 = vld [vmem:[#allocation2 + $0x2d8] sm:$0xff]
        %v248 = vld [vmem:[#allocation2 + $0x2e0] sm:$0xff]
        %v249 = vld [vmem:[#allocation2 + $0x2e8] sm:$0xff]
        %v250 = vld [vmem:[#allocation2 + $0x2f0] sm:$0xff]
        %v251 = vld [vmem:[#allocation2 + $0x2f8] sm:$0xff]
        %v252 = vld [vmem:[#allocation2 + $0x300] sm:$0xff]
        %v253 = vld [vmem:[#allocation2 + $0x308] sm:$0xff]
        %v254 = vld [vmem:[#allocation2 + $0x310] sm:$0xff]
        %v255 = vld [vmem:[#allocation2 + $0x318] sm:$0xff]
        %v256 = vld [vmem:[#allocation2 + $0x320] sm:$0xff]
        %v257 = vld [vmem:[#allocation2 + $0x328] sm:$0xff]
        %v258 = vld [vmem:[#allocation2 + $0x330] sm:$0xff]
        %v259 = vld [vmem:[#allocation2 + $0x338] sm:$0xff]
        %v260 = vld [vmem:[#allocation2 + $0x340] sm:$0xff]
        %v261 = vld [vmem:[#allocation2 + $0x348] sm:$0xff]
        %v262 = vld [vmem:[#allocation2 + $0x350] sm:$0xff]
        %v263 = vld [vmem:[#allocation2 + $0x358] sm:$0xff]
        %v264 = vld [vmem:[#allocation2 + $0x360] sm:$0xff]
        %v265 = vld [vmem:[#allocation2 + $0x368] sm:$0xff]
        %v266 = vld [vmem:[#allocation2 + $0x370] sm:$0xff]
        %v267 = vld [vmem:[#allocation2 + $0x378] sm:$0xff]
        %v268 = vld [vmem:[#allocation2 + $0x380] sm:$0xff]
        %v269 = vld [vmem:[#allocation2 + $0x388] sm:$0xff]
        %v270 = vld [vmem:[#allocation2 + $0x390] sm:$0xff]
        %v271 = vld [vmem:[#allocation2 + $0x398] sm:$0xff]
        %v272 = vld [vmem:[#allocation2 + $0x3a0] sm:$0xff]
        %v273 = vld [vmem:[#allocation2 + $0x3a8] sm:$0xff]
        %v274 = vld [vmem:[#allocation2 + $0x3b0] sm:$0xff]
        %v275 = vld [vmem:[#allocation2 + $0x3b8] sm:$0xff]
        %v276 = vld [vmem:[#allocation2 + $0x3c0] sm:$0xff]
        %v277 = vld [vmem:[#allocation2 + $0x3c8] sm:$0xff]
        %v278 = vld [vmem:[#allocation2 + $0x3d0] sm:$0xff]
        %v279 = vld [vmem:[#allocation2 + $0x3d8] sm:$0xff]
        %v280 = vld [vmem:[#allocation2 + $0x3e0] sm:$0xff]
        %v281 = vld [vmem:[#allocation2 + $0x3e8] sm:$0xff]
        %v282 = vld [vmem:[#allocation2 + $0x3f0] sm:$0xff]
        %v283 = vld [vmem:[#allocation2 + $0x3f8] sm:$0xff]
        %v284 = vld [vmem:[#allocation2 + $0x400] sm:$0xff]
        %v285 = vld [vmem:[#allocation2 + $0x408] sm:$0xff]
        %v286 = vld [vmem:[#allocation2 + $0x410] sm:$0xff]
        %v287 = vld [vmem:[#allocation2 + $0x418] sm:$0xff]
        %v288 = vld [vmem:[#allocation2 + $0x420] sm:$0xff]
        %v289 = vld [vmem:[#allocation2 + $0x428] sm:$0xff]
        %v290 = vld [vmem:[#allocation2 + $0x430] sm:$0xff]
        %v291 = vld [vmem:[#allocation2 + $0x438] sm:$0xff]
        %v292 = vld [vmem:[#allocation2 + $0x440] sm:$0xff]
        %v293 = vld [vmem:[#allocation2 + $0x448] sm:$0xff]
        %v294 = vld [vmem:[#allocation2 + $0x450] sm:$0xff]
        %v295 = vld [vmem:[#allocation2 + $0x458] sm:$0xff]
        %v296 = vld [vmem:[#allocation2 + $0x460] sm:$0xff]
        %v297 = vld [vmem:[#allocation2 + $0x468] sm:$0xff]
        %v298 = vld [vmem:[#allocation2 + $0x470] sm:$0xff]
        %v299 = vld [vmem:[#allocation2 + $0x478] sm:$0xff]
        %v300 = vld [vmem:[#allocation2 + $0x480] sm:$0xff]
        %v301 = vld [vmem:[#allocation2 + $0x488] sm:$0xff]
        %v302 = vld [vmem:[#allocation2 + $0x490] sm:$0xff]
        %v303 = vld [vmem:[#allocation2 + $0x498] sm:$0xff]
        %v304 = vld [vmem:[#allocation2 + $0x4a0] sm:$0xff]
        %v305 = vld [vmem:[#allocation2 + $0x4a8] sm:$0xff]
        %v306 = vld [vmem:[#allocation2 + $0x4b0] sm:$0xff]
        %v307 = vld [vmem:[#allocation2 + $0x4b8] sm:$0xff]
        %v308 = vld [vmem:[#allocation2 + $0x4c0] sm:$0xff]
        %v309 = vld [vmem:[#allocation2 + $0x4c8] sm:$0xff]
        %v310 = vld [vmem:[#allocation2 + $0x4d0] sm:$0xff]
        %v311 = vld [vmem:[#allocation2 + $0x4d8] sm:$0xff]
        %v312 = vld [vmem:[#allocation2 + $0x4e0] sm:$0xff]
        %v313 = vld [vmem:[#allocation2 + $0x4e8] sm:$0xff]
        %v314 = vld [vmem:[#allocation2 + $0x4f0] sm:$0xff]
        %v315 = vld [vmem:[#allocation2 + $0x4f8] sm:$0xff]
        %v316 = vld [vmem:[#allocation2 + $0x500] sm:$0xff]
        %v317 = vld [vmem:[#allocation2 + $0x508] sm:$0xff]
        %v318 = vld [vmem:[#allocation2 + $0x510] sm:$0xff]
        %v319 = vld [vmem:[#allocation2 + $0x518] sm:$0xff]
        %v320 = vld [vmem:[#allocation2 + $0x520] sm:$0xff]
        %v321 = vld [vmem:[#allocation2 + $0x528] sm:$0xff]
        %v322 = vld [vmem:[#allocation2 + $0x530] sm:$0xff]
        %v323 = vld [vmem:[#allocation2 + $0x538] sm:$0xff]
        %v324 = vld [vmem:[#allocation2 + $0x540] sm:$0xff]
        %v325 = vld [vmem:[#allocation2 + $0x548] sm:$0xff]
        %v326 = vld [vmem:[#allocation2 + $0x550] sm:$0xff]
        %v327 = vld [vmem:[#allocation2 + $0x558] sm:$0xff]
        %v328 = vld [vmem:[#allocation2 + $0x560] sm:$0xff]
        %v329 = vld [vmem:[#allocation2 + $0x568] sm:$0xff]
        %v330 = vld [vmem:[#allocation2 + $0x570] sm:$0xff]
        %v331 = vld [vmem:[#allocation2 + $0x578] sm:$0xff]
        %v332 = vld [vmem:[#allocation2 + $0x580] sm:$0xff]
        %v333 = vld [vmem:[#allocation2 + $0x588] sm:$0xff]
        %v334 = vld [vmem:[#allocation2 + $0x590] sm:$0xff]
        %v335 = vld [vmem:[#allocation2 + $0x598] sm:$0xff]
        %v336 = vld [vmem:[#allocation2 + $0x5a0] sm:$0xff]
        %v337 = vld [vmem:[#allocation2 + $0x5a8] sm:$0xff]
        %v338 = vld [vmem:[#allocation2 + $0x5b0] sm:$0xff]
        %v339 = vld [vmem:[#allocation2 + $0x5b8] sm:$0xff]
        %v340 = vld [vmem:[#allocation2 + $0x5c0] sm:$0xff]
        %v341 = vld [vmem:[#allocation2 + $0x5c8] sm:$0xff]
        %v342 = vld [vmem:[#allocation2 + $0x5d0] sm:$0xff]
        %v343 = vld [vmem:[#allocation2 + $0x5d8] sm:$0xff]
        %v344 = vld [vmem:[#allocation2 + $0x5e0] sm:$0xff]
        %v345 = vld [vmem:[#allocation2 + $0x5e8] sm:$0xff]
        %v346 = vld [vmem:[#allocation2 + $0x5f0] sm:$0xff]
        %v347 = vld [vmem:[#allocation2 + $0x5f8] sm:$0xff]
        %v348 = vld [vmem:[#allocation2 + $0x600] sm:$0xff]
        %v349 = vld [vmem:[#allocation2 + $0x608] sm:$0xff]
        %v350 = vld [vmem:[#allocation2 + $0x610] sm:$0xff]
        %v351 = vld [vmem:[#allocation2 + $0x618] sm:$0xff]
        %v352 = vld [vmem:[#allocation2 + $0x620] sm:$0xff]
        %v353 = vld [vmem:[#allocation2 + $0x628] sm:$0xff]
        %v354 = vld [vmem:[#allocation2 + $0x630] sm:$0xff]
        %v355 = vld [vmem:[#allocation2 + $0x638] sm:$0xff]
        %v356 = vld [vmem:[#allocation2 + $0x640] sm:$0xff]
        %v357 = vld [vmem:[#allocation2 + $0x648] sm:$0xff]
        %v358 = vld [vmem:[#allocation2 + $0x650] sm:$0xff]
        %v359 = vld [vmem:[#allocation2 + $0x658] sm:$0xff]
        %v360 = vld [vmem:[#allocation2 + $0x660] sm:$0xff]
        %v361 = vld [vmem:[#allocation2 + $0x668] sm:$0xff]
        %v362 = vld [vmem:[#allocation2 + $0x670] sm:$0xff]
        %v363 = vld [vmem:[#allocation2 + $0x678] sm:$0xff]
        %v364 = vld [vmem:[#allocation2 + $0x680] sm:$0xff]
        %v365 = vld [vmem:[#allocation2 + $0x688] sm:$0xff]
        %v366 = vld [vmem:[#allocation2 + $0x690] sm:$0xff]
        %v367 = vld [vmem:[#allocation2 + $0x698] sm:$0xff]
        %v368 = vld [vmem:[#allocation2 + $0x6a0] sm:$0xff]
        %v369 = vld [vmem:[#allocation2 + $0x6a8] sm:$0xff]
        %v370 = vld [vmem:[#allocation2 + $0x6b0] sm:$0xff]
        %v371 = vld [vmem:[#allocation2 + $0x6b8] sm:$0xff]
        %v372 = vld [vmem:[#allocation2 + $0x6c0] sm:$0xff]
        %v373 = vld [vmem:[#allocation2 + $0x6c8] sm:$0xff]
        %v374 = vld [vmem:[#allocation2 + $0x6d0] sm:$0xff]
        %v375 = vld [vmem:[#allocation2 + $0x6d8] sm:$0xff]
        %v376 = vld [vmem:[#allocation2 + $0x6e0] sm:$0xff]
        %v377 = vld [vmem:[#allocation2 + $0x6e8] sm:$0xff]
        %v378 = vld [vmem:[#allocation2 + $0x6f0] sm:$0xff]
        %v379 = vld [vmem:[#allocation2 + $0x6f8] sm:$0xff]
        %v380 = vld [vmem:[#allocation2 + $0x700] sm:$0xff]
        %v381 = vld [vmem:[#allocation2 + $0x708] sm:$0xff]
        %v382 = vld [vmem:[#allocation2 + $0x710] sm:$0xff]
        %v383 = vld [vmem:[#allocation2 + $0x718] sm:$0xff]
        %v384 = vld [vmem:[#allocation2 + $0x720] sm:$0xff]
        %v385 = vld [vmem:[#allocation2 + $0x728] sm:$0xff]
        %v386 = vld [vmem:[#allocation2 + $0x730] sm:$0xff]
        %v387 = vld [vmem:[#allocation2 + $0x738] sm:$0xff]
        %v388 = vld [vmem:[#allocation2 + $0x740] sm:$0xff]
        %v389 = vld [vmem:[#allocation2 + $0x748] sm:$0xff]
        %v390 = vld [vmem:[#allocation2 + $0x750] sm:$0xff]
        %v391 = vld [vmem:[#allocation2 + $0x758] sm:$0xff]
        %v392 = vld [vmem:[#allocation2 + $0x760] sm:$0xff]
        %v393 = vld [vmem:[#allocation2 + $0x768] sm:$0xff]
        %v394 = vld [vmem:[#allocation2 + $0x770] sm:$0xff]
        %v395 = vld [vmem:[#allocation2 + $0x778] sm:$0xff]
        %v396 = vld [vmem:[#allocation2 + $0x780] sm:$0xff]
        %v397 = vld [vmem:[#allocation2 + $0x788] sm:$0xff]
        %v398 = vld [vmem:[#allocation2 + $0x790] sm:$0xff]
        %v399 = vld [vmem:[#allocation2 + $0x798] sm:$0xff]
        %v400 = vld [vmem:[#allocation2 + $0x7a0] sm:$0xff]
        %v401 = vld [vmem:[#allocation2 + $0x7a8] sm:$0xff]
        %v402 = vld [vmem:[#allocation2 + $0x7b0] sm:$0xff]
        %v403 = vld [vmem:[#allocation2 + $0x7b8] sm:$0xff]
        %v404 = vld [vmem:[#allocation2 + $0x7c0] sm:$0xff]
        %v405 = vld [vmem:[#allocation2 + $0x7c8] sm:$0xff]
        %v406 = vld [vmem:[#allocation2 + $0x7d0] sm:$0xff]
        %v407 = vld [vmem:[#allocation2 + $0x7d8] sm:$0xff]
        %v408 = vld [vmem:[#allocation2 + $0x7e0] sm:$0xff]
        %v409 = vld [vmem:[#allocation2 + $0x7e8] sm:$0xff]
        %v410 = vld [vmem:[#allocation2 + $0x7f0] sm:$0xff]
        %v411 = vld [vmem:[#allocation2 + $0x7f8] sm:$0xff]
        %v412 = vld [vmem:[#allocation2 + $0x800] sm:$0xff]
        %v413 = vld [vmem:[#allocation2 + $0x808] sm:$0xff]
        %v414 = vld [vmem:[#allocation2 + $0x810] sm:$0xff]
        %v415 = vld [vmem:[#allocation2 + $0x818] sm:$0xff]
        %v416 = vld [vmem:[#allocation2 + $0x820] sm:$0xff]
        %v417 = vld [vmem:[#allocation2 + $0x828] sm:$0xff]
        %v418 = vld [vmem:[#allocation2 + $0x830] sm:$0xff]
        %v419 = vld [vmem:[#allocation2 + $0x838] sm:$0xff]
        %v420 = vld [vmem:[#allocation2 + $0x840] sm:$0xff]
        %v421 = vld [vmem:[#allocation2 + $0x848] sm:$0xff]
        %v422 = vld [vmem:[#allocation2 + $0x850] sm:$0xff]
        %v423 = vld [vmem:[#allocation2 + $0x858] sm:$0xff]
        %v424 = vld [vmem:[#allocation2 + $0x860] sm:$0xff]
        %v425 = vld [vmem:[#allocation2 + $0x868] sm:$0xff]
        %v426 = vld [vmem:[#allocation2 + $0x870] sm:$0xff]
        %v427 = vld [vmem:[#allocation2 + $0x878] sm:$0xff]
        %v428 = vld [vmem:[#allocation2 + $0x880] sm:$0xff]
        %v429 = vld [vmem:[#allocation2 + $0x888] sm:$0xff]
        %v430 = vld [vmem:[#allocation2 + $0x890] sm:$0xff]
        %v431 = vld [vmem:[#allocation2 + $0x898] sm:$0xff]
        %v432 = vld [vmem:[#allocation2 + $0x8a0] sm:$0xff]
        %v433 = vld [vmem:[#allocation2 + $0x8a8] sm:$0xff]
        %v434 = vld [vmem:[#allocation2 + $0x8b0] sm:$0xff]
        %v435 = vld [vmem:[#allocation2 + $0x8b8] sm:$0xff]
        %v436 = vld [vmem:[#allocation2 + $0x8c0] sm:$0xff]
        %v437 = vld [vmem:[#allocation2 + $0x8c8] sm:$0xff]
        %v438 = vld [vmem:[#allocation2 + $0x8d0] sm:$0xff]
        %v439 = vld [vmem:[#allocation2 + $0x8d8] sm:$0xff]
        %v440 = vld [vmem:[#allocation2 + $0x8e0] sm:$0xff]
        %v441 = vld [vmem:[#allocation2 + $0x8e8] sm:$0xff]
        %v442 = vld [vmem:[#allocation2 + $0x8f0] sm:$0xff]
        %v443 = vld [vmem:[#allocation2 + $0x8f8] sm:$0xff]
        %v444 = vld [vmem:[#allocation2 + $0x900] sm:$0xff]
        %v445 = vld [vmem:[#allocation2 + $0x908] sm:$0xff]
        %v446 = vld [vmem:[#allocation2 + $0x910] sm:$0xff]
        %v447 = vld [vmem:[#allocation2 + $0x918] sm:$0xff]
        %v448 = vld [vmem:[#allocation2 + $0x920] sm:$0xff]
        %v449 = vld [vmem:[#allocation2 + $0x928] sm:$0xff]
        %v450 = vld [vmem:[#allocation2 + $0x930] sm:$0xff]
        %v451 = vld [vmem:[#allocation2 + $0x938] sm:$0xff]
        %v452 = vld [vmem:[#allocation2 + $0x940] sm:$0xff]
        %v453 = vld [vmem:[#allocation2 + $0x948] sm:$0xff]
        %v454 = vld [vmem:[#allocation2 + $0x950] sm:$0xff]
        %v455 = vld [vmem:[#allocation2 + $0x958] sm:$0xff]
        %v456 = vld [vmem:[#allocation2 + $0x960] sm:$0xff]
        %v457 = vld [vmem:[#allocation2 + $0x968] sm:$0xff]
        %v458 = vld [vmem:[#allocation2 + $0x970] sm:$0xff]
        %v459 = vld [vmem:[#allocation2 + $0x978] sm:$0xff]
        %v460 = vld [vmem:[#allocation2 + $0x980] sm:$0xff]
        %v461 = vld [vmem:[#allocation2 + $0x988] sm:$0xff]
        %v462 = vld [vmem:[#allocation2 + $0x990] sm:$0xff]
        %v463 = vld [vmem:[#allocation2 + $0x998] sm:$0xff]
        %v464 = vld [vmem:[#allocation2 + $0x9a0] sm:$0xff]
        %v465 = vld [vmem:[#allocation2 + $0x9a8] sm:$0xff]
        %v466 = vld [vmem:[#allocation2 + $0x9b0] sm:$0xff]
        %v467 = vld [vmem:[#allocation2 + $0x9b8] sm:$0xff]
        %v468 = vld [vmem:[#allocation2 + $0x9c0] sm:$0xff]
        %v469 = vld [vmem:[#allocation2 + $0x9c8] sm:$0xff]
        %v470 = vld [vmem:[#allocation2 + $0x9d0] sm:$0xff]
        %v471 = vld [vmem:[#allocation2 + $0x9d8] sm:$0xff]
        %v472 = vld [vmem:[#allocation2 + $0x9e0] sm:$0xff]
        %v473 = vld [vmem:[#allocation2 + $0x9e8] sm:$0xff]
        %v474 = vld [vmem:[#allocation2 + $0x9f0] sm:$0xff]
        %v475 = vld [vmem:[#allocation2 + $0x9f8] sm:$0xff]
        %v476 = vld [vmem:[#allocation2 + $0xa00] sm:$0xff]
        %v477 = vld [vmem:[#allocation2 + $0xa08] sm:$0xff]
        %v478 = vld [vmem:[#allocation2 + $0xa10] sm:$0xff]
        %v479 = vld [vmem:[#allocation2 + $0xa18] sm:$0xff]
        %v480 = vld [vmem:[#allocation2 + $0xa20] sm:$0xff]
        %v481 = vld [vmem:[#allocation2 + $0xa28] sm:$0xff]
        %v482 = vld [vmem:[#allocation2 + $0xa30] sm:$0xff]
        %v483 = vld [vmem:[#allocation2 + $0xa38] sm:$0xff]
        %v484 = vld [vmem:[#allocation2 + $0xa40] sm:$0xff]
        %v485 = vld [vmem:[#allocation2 + $0xa48] sm:$0xff]
        %v486 = vld [vmem:[#allocation2 + $0xa50] sm:$0xff]
        %v487 = vld [vmem:[#allocation2 + $0xa58] sm:$0xff]
        %v488 = vld [vmem:[#allocation2 + $0xa60] sm:$0xff]
        %v489 = vld [vmem:[#allocation2 + $0xa68] sm:$0xff]
        %v490 = vld [vmem:[#allocation2 + $0xa70] sm:$0xff]
        %v491 = vld [vmem:[#allocation2 + $0xa78] sm:$0xff]
        %v492 = vld [vmem:[#allocation2 + $0xa80] sm:$0xff]
        %v493 = vld [vmem:[#allocation2 + $0xa88] sm:$0xff]
        %v494 = vld [vmem:[#allocation2 + $0xa90] sm:$0xff]
        %v495 = vld [vmem:[#allocation2 + $0xa98] sm:$0xff]
        %v496 = vld [vmem:[#allocation2 + $0xaa0] sm:$0xff]
        %v497 = vld [vmem:[#allocation2 + $0xaa8] sm:$0xff]
        %v498 = vld [vmem:[#allocation2 + $0xab0] sm:$0xff]
        %v499 = vld [vmem:[#allocation2 + $0xab8] sm:$0xff]
        %v500 = vld [vmem:[#allocation2 + $0xac0] sm:$0xff]
        %v501 = vld [vmem:[#allocation2 + $0xac8] sm:$0xff]
        %v502 = vld [vmem:[#allocation2 + $0xad0] sm:$0xff]
        %v503 = vld [vmem:[#allocation2 + $0xad8] sm:$0xff]
        %v504 = vld [vmem:[#allocation2 + $0xae0] sm:$0xff]
        %v505 = vld [vmem:[#allocation2 + $0xae8] sm:$0xff]
        %v506 = vld [vmem:[#allocation2 + $0xaf0] sm:$0xff]
        %v507 = vld [vmem:[#allocation2 + $0xaf8] sm:$0xff]
        %v508 = vld [vmem:[#allocation2 + $0xb00] sm:$0xff]
        %v509 = vld [vmem:[#allocation2 + $0xb08] sm:$0xff]
        %v510 = vld [vmem:[#allocation2 + $0xb10] sm:$0xff]
        %v511 = vld [vmem:[#allocation2 + $0xb18] sm:$0xff]
        %v512 = vld [vmem:[#allocation2 + $0xb20] sm:$0xff]
        %v513 = vld [vmem:[#allocation2 + $0xb28] sm:$0xff]
        %v514 = vld [vmem:[#allocation2 + $0xb30] sm:$0xff]
        %v515 = vld [vmem:[#allocation2 + $0xb38] sm:$0xff]
        %v516 = vld [vmem:[#allocation2 + $0xb40] sm:$0xff]
        %v517 = vld [vmem:[#allocation2 + $0xb48] sm:$0xff]
        %v518 = vld [vmem:[#allocation2 + $0xb50] sm:$0xff]
        %v519 = vld [vmem:[#allocation2 + $0xb58] sm:$0xff]
        %v520 = vld [vmem:[#allocation2 + $0xb60] sm:$0xff]
        %v521 = vld [vmem:[#allocation2 + $0xb68] sm:$0xff]
        %v522 = vld [vmem:[#allocation2 + $0xb70] sm:$0xff]
        %v523 = vld [vmem:[#allocation2 + $0xb78] sm:$0xff]
        %v524 = vld [vmem:[#allocation2 + $0xb80] sm:$0xff]
        %v525 = vld [vmem:[#allocation2 + $0xb88] sm:$0xff]
        %v526 = vld [vmem:[#allocation2 + $0xb90] sm:$0xff]
        %v527 = vld [vmem:[#allocation2 + $0xb98] sm:$0xff]
        %v528 = vld [vmem:[#allocation2 + $0xba0] sm:$0xff]
        %v529 = vld [vmem:[#allocation2 + $0xba8] sm:$0xff]
        %v530 = vld [vmem:[#allocation2 + $0xbb0] sm:$0xff]
        %v531 = vld [vmem:[#allocation2 + $0xbb8] sm:$0xff]
        %v532 = vld [vmem:[#allocation2 + $0xbc0] sm:$0xff]
        %v533 = vld [vmem:[#allocation2 + $0xbc8] sm:$0xff]
        %v534 = vld [vmem:[#allocation2 + $0xbd0] sm:$0xff]
        %v535 = vld [vmem:[#allocation2 + $0xbd8] sm:$0xff]
        %v536 = vld [vmem:[#allocation2 + $0xbe0] sm:$0xff]
        %v537 = vld [vmem:[#allocation2 + $0xbe8] sm:$0xff]
        %v538 = vld [vmem:[#allocation2 + $0xbf0] sm:$0xff]
        %v539 = vld [vmem:[#allocation2 + $0xbf8] sm:$0xff]
        %v540 = vld [vmem:[#allocation2 + $0xc00] sm:$0xff]
        %v541 = vld [vmem:[#allocation2 + $0xc08] sm:$0xff]
        %v542 = vld [vmem:[#allocation2 + $0xc10] sm:$0xff]
        %v543 = vld [vmem:[#allocation2 + $0xc18] sm:$0xff]
        %v544 = vld [vmem:[#allocation2 + $0xc20] sm:$0xff]
        %v545 = vld [vmem:[#allocation2 + $0xc28] sm:$0xff]
        %v546 = vld [vmem:[#allocation2 + $0xc30] sm:$0xff]
        %v547 = vld [vmem:[#allocation2 + $0xc38] sm:$0xff]
        %v548 = vld [vmem:[#allocation2 + $0xc40] sm:$0xff]
        %v549 = vld [vmem:[#allocation2 + $0xc48] sm:$0xff]
        %v550 = vld [vmem:[#allocation2 + $0xc50] sm:$0xff]
        %v551 = vld [vmem:[#allocation2 + $0xc58] sm:$0xff]
        %v552 = vld [vmem:[#allocation2 + $0xc60] sm:$0xff]
        %v553 = vld [vmem:[#allocation2 + $0xc68] sm:$0xff]
        %v554 = vld [vmem:[#allocation2 + $0xc70] sm:$0xff]
        %v555 = vld [vmem:[#allocation2 + $0xc78] sm:$0xff]
        %v556 = vld [vmem:[#allocation2 + $0xc80] sm:$0xff]
        %v557 = vld [vmem:[#allocation2 + $0xc88] sm:$0xff]
        %v558 = vld [vmem:[#allocation2 + $0xc90] sm:$0xff]
        %v559 = vld [vmem:[#allocation2 + $0xc98] sm:$0xff]
        %v560 = vld [vmem:[#allocation2 + $0xca0] sm:$0xff]
        %v561 = vld [vmem:[#allocation2 + $0xca8] sm:$0xff]
        %v562 = vld [vmem:[#allocation2 + $0xcb0] sm:$0xff]
        %v563 = vld [vmem:[#allocation2 + $0xcb8] sm:$0xff]
        %v564 = vld [vmem:[#allocation2 + $0xcc0] sm:$0xff]
        %v565 = vld [vmem:[#allocation2 + $0xcc8] sm:$0xff]
        %v566 = vld [vmem:[#allocation2 + $0xcd0] sm:$0xff]
        %v567 = vld [vmem:[#allocation2 + $0xcd8] sm:$0xff]
        %v568 = vld [vmem:[#allocation2 + $0xce0] sm:$0xff]
        %v569 = vld [vmem:[#allocation2 + $0xce8] sm:$0xff]
        %v570 = vld [vmem:[#allocation2 + $0xcf0] sm:$0xff]
        %v571 = vld [vmem:[#allocation2 + $0xcf8] sm:$0xff]
        %v572 = vld [vmem:[#allocation2 + $0xd00] sm:$0xff]
        %v573 = vld [vmem:[#allocation2 + $0xd08] sm:$0xff]
        %v574 = vld [vmem:[#allocation2 + $0xd10] sm:$0xff]
        %v575 = vld [vmem:[#allocation2 + $0xd18] sm:$0xff]
        %v576 = vld [vmem:[#allocation2 + $0xd20] sm:$0xff]
        %v577 = vld [vmem:[#allocation2 + $0xd28] sm:$0xff]
        %v578 = vld [vmem:[#allocation2 + $0xd30] sm:$0xff]
        %v579 = vld [vmem:[#allocation2 + $0xd38] sm:$0xff]
        %v580 = vld [vmem:[#allocation2 + $0xd40] sm:$0xff]
        %v581 = vld [vmem:[#allocation2 + $0xd48] sm:$0xff]
        %v582 = vld [vmem:[#allocation2 + $0xd50] sm:$0xff]
        %v583 = vld [vmem:[#allocation2 + $0xd58] sm:$0xff]
        %v584 = vld [vmem:[#allocation2 + $0xd60] sm:$0xff]
        %v585 = vld [vmem:[#allocation2 + $0xd68] sm:$0xff]
        %v586 = vld [vmem:[#allocation2 + $0xd70] sm:$0xff]
        %v587 = vld [vmem:[#allocation2 + $0xd78] sm:$0xff]
        %v588 = vld [vmem:[#allocation2 + $0xd80] sm:$0xff]
        %v589 = vld [vmem:[#allocation2 + $0xd88] sm:$0xff]
        %v590 = vld [vmem:[#allocation2 + $0xd90] sm:$0xff]
        %v591 = vld [vmem:[#allocation2 + $0xd98] sm:$0xff]
        %v592 = vld [vmem:[#allocation2 + $0xda0] sm:$0xff]
        %v593 = vld [vmem:[#allocation2 + $0xda8] sm:$0xff]
        %v594 = vld [vmem:[#allocation2 + $0xdb0] sm:$0xff]
        %v595 = vld [vmem:[#allocation2 + $0xdb8] sm:$0xff]
        %v596 = vld [vmem:[#allocation2 + $0xdc0] sm:$0xff]
        %v597 = vld [vmem:[#allocation2 + $0xdc8] sm:$0xff]
        %v598 = vld [vmem:[#allocation2 + $0xdd0] sm:$0xff]
        %v599 = vld [vmem:[#allocation2 + $0xdd8] sm:$0xff]
        %v600 = vld [vmem:[#allocation2 + $0xde0] sm:$0xff]
        %v601 = vld [vmem:[#allocation2 + $0xde8] sm:$0xff]
        %v602 = vld [vmem:[#allocation2 + $0xdf0] sm:$0xff]
        %v603 = vld [vmem:[#allocation2 + $0xdf8] sm:$0xff]
        %v604 = vld [vmem:[#allocation2 + $0xe00] sm:$0xff]
        %v605 = vld [vmem:[#allocation2 + $0xe08] sm:$0xff]
        %v606 = vld [vmem:[#allocation2 + $0xe10] sm:$0xff]
        %v607 = vld [vmem:[#allocation2 + $0xe18] sm:$0xff]
        %v608 = vld [vmem:[#allocation2 + $0xe20] sm:$0xff]
        %v609 = vld [vmem:[#allocation2 + $0xe28] sm:$0xff]
        %v610 = vld [vmem:[#allocation2 + $0xe30] sm:$0xff]
        %v611 = vld [vmem:[#allocation2 + $0xe38] sm:$0xff]
        %v612 = vld [vmem:[#allocation2 + $0xe40] sm:$0xff]
        %v613 = vld [vmem:[#allocation2 + $0xe48] sm:$0xff]
        %v614 = vld [vmem:[#allocation2 + $0xe50] sm:$0xff]
        %v615 = vld [vmem:[#allocation2 + $0xe58] sm:$0xff]
        %v616 = vld [vmem:[#allocation2 + $0xe60] sm:$0xff]
        %v617 = vld [vmem:[#allocation2 + $0xe68] sm:$0xff]
        %v618 = vld [vmem:[#allocation2 + $0xe70] sm:$0xff]
        %v619 = vld [vmem:[#allocation2 + $0xe78] sm:$0xff]
        %v620 = vld [vmem:[#allocation2 + $0xe80] sm:$0xff]
        %v621 = vld [vmem:[#allocation2 + $0xe88] sm:$0xff]
        %v622 = vld [vmem:[#allocation2 + $0xe90] sm:$0xff]
        %v623 = vld [vmem:[#allocation2 + $0xe98] sm:$0xff]
        %v624 = vld [vmem:[#allocation2 + $0xea0] sm:$0xff]
        %v625 = vld [vmem:[#allocation2 + $0xea8] sm:$0xff]
        %v626 = vld [vmem:[#allocation2 + $0xeb0] sm:$0xff]
        %v627 = vld [vmem:[#allocation2 + $0xeb8] sm:$0xff]
        %v628 = vld [vmem:[#allocation2 + $0xec0] sm:$0xff]
        %v629 = vld [vmem:[#allocation2 + $0xec8] sm:$0xff]
        %v630 = vld [vmem:[#allocation2 + $0xed0] sm:$0xff]
        %v631 = vld [vmem:[#allocation2 + $0xed8] sm:$0xff]
        %v632 = vld [vmem:[#allocation2 + $0xee0] sm:$0xff]
        %v633 = vld [vmem:[#allocation2 + $0xee8] sm:$0xff]
        %v634 = vld [vmem:[#allocation2 + $0xef0] sm:$0xff]
        %v635 = vld [vmem:[#allocation2 + $0xef8] sm:$0xff]
        %v636 = vld [vmem:[#allocation2 + $0xf00] sm:$0xff]
        %v637 = vld [vmem:[#allocation2 + $0xf08] sm:$0xff]
        %v638 = vld [vmem:[#allocation2 + $0xf10] sm:$0xff]
        %v639 = vld [vmem:[#allocation2 + $0xf18] sm:$0xff]
        %v640 = vld [vmem:[#allocation2 + $0xf20] sm:$0xff]
        %v641 = vld [vmem:[#allocation2 + $0xf28] sm:$0xff]
        %v642 = vld [vmem:[#allocation2 + $0xf30] sm:$0xff]
        %v643 = vld [vmem:[#allocation2 + $0xf38] sm:$0xff]
        %v644 = vld [vmem:[#allocation2 + $0xf40] sm:$0xff]
        %v645 = vld [vmem:[#allocation2 + $0xf48] sm:$0xff]
        %v646 = vld [vmem:[#allocation2 + $0xf50] sm:$0xff]
        %v647 = vld [vmem:[#allocation2 + $0xf58] sm:$0xff]
        %v648 = vld [vmem:[#allocation2 + $0xf60] sm:$0xff]
        %v649 = vld [vmem:[#allocation2 + $0xf68] sm:$0xff]
        %v650 = vld [vmem:[#allocation2 + $0xf70] sm:$0xff]
        %v651 = vld [vmem:[#allocation2 + $0xf78] sm:$0xff]
        %v652 = vld [vmem:[#allocation2 + $0xf80] sm:$0xff]
        %v653 = vld [vmem:[#allocation2 + $0xf88] sm:$0xff]
        %v654 = vld [vmem:[#allocation2 + $0xf90] sm:$0xff]
        %v655 = vld [vmem:[#allocation2 + $0xf98] sm:$0xff]
        %v656 = vld [vmem:[#allocation2 + $0xfa0] sm:$0xff]
        %v657 = vld [vmem:[#allocation2 + $0xfa8] sm:$0xff]
        %v658 = vld [vmem:[#allocation2 + $0xfb0] sm:$0xff]
        %v659 = vld [vmem:[#allocation2 + $0xfb8] sm:$0xff]
        %v660 = vld [vmem:[#allocation2 + $0xfc0] sm:$0xff]
        %v661 = vld [vmem:[#allocation2 + $0xfc8] sm:$0xff]
        %v662 = vld [vmem:[#allocation2 + $0xfd0] sm:$0xff]
        %v663 = vld [vmem:[#allocation2 + $0xfd8] sm:$0xff]
        %v664 = vld [vmem:[#allocation2 + $0xfe0] sm:$0xff]
        %v665 = vld [vmem:[#allocation2 + $0xfe8] sm:$0xff]
        %v666 = vld [vmem:[#allocation2 + $0xff0] sm:$0xff]
        %v667 = vld [vmem:[#allocation2 + $0xff8] sm:$0xff]
        %v670 = vcombine.high %v154, %v154
        %v672 = vunpack.c.l.s4 1966171168
        %v673 = vunpack.c.0.s8 %v672
        %v674 = vlaneseq
        %v675 = vshrl.u32 %v674, 7
        %v676 = vsub.s32 %v673, %v675
        %v677 = vrot.slane %v154, %v676
        %v679 = vunpack.c.l.s4 1966171168
        %v680 = vunpack.c.0.s8 %v679
        %v681 = vlaneseq
        %v682 = vshrl.u32 %v681, 7
        %v683 = vsub.s32 %v680, %v682
        %v684 = vrot.slane %v670, %v683
        %v685 = vcombine.high %v677, %v677
        %v686 = vcombine.high %v684, %v684
        %v688 = vunpack.c.l.s4 1966171168
        %v689 = vunpack.c.0.s8 %v688
        %v690 = vlaneseq
        %v691 = vshrl.u32 %v690, 7
        %v692 = vsub.s32 %v689, %v691
        %v693 = vrot.slane %v677, %v692
        %v695 = vunpack.c.l.s4 1966171168
        %v696 = vunpack.c.0.s8 %v695
        %v697 = vlaneseq
        %v698 = vshrl.u32 %v697, 7
        %v699 = vsub.s32 %v696, %v698
        %v700 = vrot.slane %v684, %v699
        %v702 = vunpack.c.l.s4 1966171168
        %v703 = vunpack.c.0.s8 %v702
        %v704 = vlaneseq
        %v705 = vshrl.u32 %v704, 7
        %v706 = vsub.s32 %v703, %v705
        %v707 = vrot.slane %v685, %v706
        %v709 = vunpack.c.l.s4 1966171168
        %v710 = vunpack.c.0.s8 %v709
        %v711 = vlaneseq
        %v712 = vshrl.u32 %v711, 7
        %v713 = vsub.s32 %v710, %v712
        %v714 = vrot.slane %v686, %v713
        %v715 = vcombine.high %v693, %v693
        %v716 = vcombine.high %v700, %v700
        %v717 = vcombine.high %v707, %v707
        %v718 = vcombine.high %v714, %v714
        %v719 = vcombine.high %v155, %v155
        %v721 = vunpack.c.l.s4 1966171168
        %v722 = vunpack.c.0.s8 %v721
        %v723 = vlaneseq
        %v724 = vshrl.u32 %v723, 7
        %v725 = vsub.s32 %v722, %v724
        %v726 = vrot.slane %v155, %v725
        %v728 = vunpack.c.l.s4 1966171168
        %v729 = vunpack.c.0.s8 %v728
        %v730 = vlaneseq
        %v731 = vshrl.u32 %v730, 7
        %v732 = vsub.s32 %v729, %v731
        %v733 = vrot.slane %v719, %v732
        %v734 = vcombine.high %v726, %v726
        %v735 = vcombine.high %v733, %v733
        %v737 = vunpack.c.l.s4 1966171168
        %v738 = vunpack.c.0.s8 %v737
        %v739 = vlaneseq
        %v740 = vshrl.u32 %v739, 7
        %v741 = vsub.s32 %v738, %v740
        %v742 = vrot.slane %v726, %v741
        %v744 = vunpack.c.l.s4 1966171168
        %v745 = vunpack.c.0.s8 %v744
        %v746 = vlaneseq
        %v747 = vshrl.u32 %v746, 7
        %v748 = vsub.s32 %v745, %v747
        %v749 = vrot.slane %v733, %v748
        %v751 = vunpack.c.l.s4 1966171168
        %v752 = vunpack.c.0.s8 %v751
        %v753 = vlaneseq
        %v754 = vshrl.u32 %v753, 7
        %v755 = vsub.s32 %v752, %v754
        %v756 = vrot.slane %v734, %v755
        %v758 = vunpack.c.l.s4 1966171168
        %v759 = vunpack.c.0.s8 %v758
        %v760 = vlaneseq
        %v761 = vshrl.u32 %v760, 7
        %v762 = vsub.s32 %v759, %v761
        %v763 = vrot.slane %v735, %v762
        %v764 = vcombine.high %v742, %v742
        %v765 = vcombine.high %v749, %v749
        %v766 = vcombine.high %v756, %v756
        %v767 = vcombine.high %v763, %v763
        %v1296 = vunpack.c.l.b16 %v156
        %v1297 = vunpack.c.h.b16 %v156
        %v1298 = vunpack.c.l.b16 %v157
        %v1299 = vunpack.c.h.b16 %v157
        %v1300 = vunpack.c.l.b16 %v158
        %v1301 = vunpack.c.h.b16 %v158
        %v1302 = vunpack.c.l.b16 %v159
        %v1303 = vunpack.c.h.b16 %v159
        %v1304 = vunpack.c.l.b16 %v160
        %v1305 = vunpack.c.h.b16 %v160
        %v1306 = vunpack.c.l.b16 %v161
        %v1307 = vunpack.c.h.b16 %v161
        %v1308 = vunpack.c.l.b16 %v162
        %v1309 = vunpack.c.h.b16 %v162
        %v1310 = vunpack.c.l.b16 %v163
        %v1311 = vunpack.c.h.b16 %v163
        %v1312 = vunpack.c.l.b16 %v164
        %v1313 = vunpack.c.h.b16 %v164
        %v1314 = vunpack.c.l.b16 %v165
        %v1315 = vunpack.c.h.b16 %v165
        %v1316 = vunpack.c.l.b16 %v166
        %v1317 = vunpack.c.h.b16 %v166
        %v1318 = vunpack.c.l.b16 %v167
        %v1319 = vunpack.c.h.b16 %v167
        %v1320 = vunpack.c.l.b16 %v168
        %v1321 = vunpack.c.h.b16 %v168
        %v1322 = vunpack.c.l.b16 %v169
        %v1323 = vunpack.c.h.b16 %v169
        %v1324 = vunpack.c.l.b16 %v170
        %v1325 = vunpack.c.h.b16 %v170
        %v1326 = vunpack.c.l.b16 %v171
        %v1327 = vunpack.c.h.b16 %v171
        %v1328 = vunpack.c.l.b16 %v172
        %v1329 = vunpack.c.h.b16 %v172
        %v1330 = vunpack.c.l.b16 %v173
        %v1331 = vunpack.c.h.b16 %v173
        %v1332 = vunpack.c.l.b16 %v174
        %v1333 = vunpack.c.h.b16 %v174
        %v1334 = vunpack.c.l.b16 %v175
        %v1335 = vunpack.c.h.b16 %v175
        %v1336 = vunpack.c.l.b16 %v176
        %v1337 = vunpack.c.h.b16 %v176
        %v1338 = vunpack.c.l.b16 %v177
        %v1339 = vunpack.c.h.b16 %v177
        %v1340 = vunpack.c.l.b16 %v178
        %v1341 = vunpack.c.h.b16 %v178
        %v1342 = vunpack.c.l.b16 %v179
        %v1343 = vunpack.c.h.b16 %v179
        %v1344 = vunpack.c.l.b16 %v180
        %v1345 = vunpack.c.h.b16 %v180
        %v1346 = vunpack.c.l.b16 %v181
        %v1347 = vunpack.c.h.b16 %v181
        %v1348 = vunpack.c.l.b16 %v182
        %v1349 = vunpack.c.h.b16 %v182
        %v1350 = vunpack.c.l.b16 %v183
        %v1351 = vunpack.c.h.b16 %v183
        %v1352 = vunpack.c.l.b16 %v184
        %v1353 = vunpack.c.h.b16 %v184
        %v1354 = vunpack.c.l.b16 %v185
        %v1355 = vunpack.c.h.b16 %v185
        %v1356 = vunpack.c.l.b16 %v186
        %v1357 = vunpack.c.h.b16 %v186
        %v1358 = vunpack.c.l.b16 %v187
        %v1359 = vunpack.c.h.b16 %v187
        %v1360 = vunpack.c.l.b16 %v188
        %v1361 = vunpack.c.h.b16 %v188
        %v1362 = vunpack.c.l.b16 %v189
        %v1363 = vunpack.c.h.b16 %v189
        %v1364 = vunpack.c.l.b16 %v190
        %v1365 = vunpack.c.h.b16 %v190
        %v1366 = vunpack.c.l.b16 %v191
        %v1367 = vunpack.c.h.b16 %v191
        %v1368 = vunpack.c.l.b16 %v192
        %v1369 = vunpack.c.h.b16 %v192
        %v1370 = vunpack.c.l.b16 %v193
        %v1371 = vunpack.c.h.b16 %v193
        %v1372 = vunpack.c.l.b16 %v194
        %v1373 = vunpack.c.h.b16 %v194
        %v1374 = vunpack.c.l.b16 %v195
        %v1375 = vunpack.c.h.b16 %v195
        %v1376 = vunpack.c.l.b16 %v196
        %v1377 = vunpack.c.h.b16 %v196
        %v1378 = vunpack.c.l.b16 %v197
        %v1379 = vunpack.c.h.b16 %v197
        %v1380 = vunpack.c.l.b16 %v198
        %v1381 = vunpack.c.h.b16 %v198
        %v1382 = vunpack.c.l.b16 %v199
        %v1383 = vunpack.c.h.b16 %v199
        %v1384 = vunpack.c.l.b16 %v200
        %v1385 = vunpack.c.h.b16 %v200
        %v1386 = vunpack.c.l.b16 %v201
        %v1387 = vunpack.c.h.b16 %v201
        %v1388 = vunpack.c.l.b16 %v202
        %v1389 = vunpack.c.h.b16 %v202
        %v1390 = vunpack.c.l.b16 %v203
        %v1391 = vunpack.c.h.b16 %v203
        %v1392 = vunpack.c.l.b16 %v204
        %v1393 = vunpack.c.h.b16 %v204
        %v1394 = vunpack.c.l.b16 %v205
        %v1395 = vunpack.c.h.b16 %v205
        %v1396 = vunpack.c.l.b16 %v206
        %v1397 = vunpack.c.h.b16 %v206
        %v1398 = vunpack.c.l.b16 %v207
        %v1399 = vunpack.c.h.b16 %v207
        %v1400 = vunpack.c.l.b16 %v208
        %v1401 = vunpack.c.h.b16 %v208
        %v1402 = vunpack.c.l.b16 %v209
        %v1403 = vunpack.c.h.b16 %v209
        %v1404 = vunpack.c.l.b16 %v210
        %v1405 = vunpack.c.h.b16 %v210
        %v1406 = vunpack.c.l.b16 %v211
        %v1407 = vunpack.c.h.b16 %v211
        %v1408 = vunpack.c.l.b16 %v212
        %v1409 = vunpack.c.h.b16 %v212
        %v1410 = vunpack.c.l.b16 %v213
        %v1411 = vunpack.c.h.b16 %v213
        %v1412 = vunpack.c.l.b16 %v214
        %v1413 = vunpack.c.h.b16 %v214
        %v1414 = vunpack.c.l.b16 %v215
        %v1415 = vunpack.c.h.b16 %v215
        %v1416 = vunpack.c.l.b16 %v216
        %v1417 = vunpack.c.h.b16 %v216
        %v1418 = vunpack.c.l.b16 %v217
        %v1419 = vunpack.c.h.b16 %v217
        %v1420 = vunpack.c.l.b16 %v218
        %v1421 = vunpack.c.h.b16 %v218
        %v1422 = vunpack.c.l.b16 %v219
        %v1423 = vunpack.c.h.b16 %v219
        %v1424 = vunpack.c.l.b16 %v220
        %v1425 = vunpack.c.h.b16 %v220
        %v1426 = vunpack.c.l.b16 %v221
        %v1427 = vunpack.c.h.b16 %v221
        %v1428 = vunpack.c.l.b16 %v222
        %v1429 = vunpack.c.h.b16 %v222
        %v1430 = vunpack.c.l.b16 %v223
        %v1431 = vunpack.c.h.b16 %v223
        %v1432 = vunpack.c.l.b16 %v224
        %v1433 = vunpack.c.h.b16 %v224
        %v1434 = vunpack.c.l.b16 %v225
        %v1435 = vunpack.c.h.b16 %v225
        %v1436 = vunpack.c.l.b16 %v226
        %v1437 = vunpack.c.h.b16 %v226
        %v1438 = vunpack.c.l.b16 %v227
        %v1439 = vunpack.c.h.b16 %v227
        %v1440 = vunpack.c.l.b16 %v228
        %v1441 = vunpack.c.h.b16 %v228
        %v1442 = vunpack.c.l.b16 %v229
        %v1443 = vunpack.c.h.b16 %v229
        %v1444 = vunpack.c.l.b16 %v230
        %v1445 = vunpack.c.h.b16 %v230
        %v1446 = vunpack.c.l.b16 %v231
        %v1447 = vunpack.c.h.b16 %v231
        %v1448 = vunpack.c.l.b16 %v232
        %v1449 = vunpack.c.h.b16 %v232
        %v1450 = vunpack.c.l.b16 %v233
        %v1451 = vunpack.c.h.b16 %v233
        %v1452 = vunpack.c.l.b16 %v234
        %v1453 = vunpack.c.h.b16 %v234
        %v1454 = vunpack.c.l.b16 %v235
        %v1455 = vunpack.c.h.b16 %v235
        %v1456 = vunpack.c.l.b16 %v236
        %v1457 = vunpack.c.h.b16 %v236
        %v1458 = vunpack.c.l.b16 %v237
        %v1459 = vunpack.c.h.b16 %v237
        %v1460 = vunpack.c.l.b16 %v238
        %v1461 = vunpack.c.h.b16 %v238
        %v1462 = vunpack.c.l.b16 %v239
        %v1463 = vunpack.c.h.b16 %v239
        %v1464 = vunpack.c.l.b16 %v240
        %v1465 = vunpack.c.h.b16 %v240
        %v1466 = vunpack.c.l.b16 %v241
        %v1467 = vunpack.c.h.b16 %v241
        %v1468 = vunpack.c.l.b16 %v242
        %v1469 = vunpack.c.h.b16 %v242
        %v1470 = vunpack.c.l.b16 %v243
        %v1471 = vunpack.c.h.b16 %v243
        %v1472 = vunpack.c.l.b16 %v244
        %v1473 = vunpack.c.h.b16 %v244
        %v1474 = vunpack.c.l.b16 %v245
        %v1475 = vunpack.c.h.b16 %v245
        %v1476 = vunpack.c.l.b16 %v246
        %v1477 = vunpack.c.h.b16 %v246
        %v1478 = vunpack.c.l.b16 %v247
        %v1479 = vunpack.c.h.b16 %v247
        %v1480 = vunpack.c.l.b16 %v248
        %v1481 = vunpack.c.h.b16 %v248
        %v1482 = vunpack.c.l.b16 %v249
        %v1483 = vunpack.c.h.b16 %v249
        %v1484 = vunpack.c.l.b16 %v250
        %v1485 = vunpack.c.h.b16 %v250
        %v1486 = vunpack.c.l.b16 %v251
        %v1487 = vunpack.c.h.b16 %v251
        %v1488 = vunpack.c.l.b16 %v252
        %v1489 = vunpack.c.h.b16 %v252
        %v1490 = vunpack.c.l.b16 %v253
        %v1491 = vunpack.c.h.b16 %v253
        %v1492 = vunpack.c.l.b16 %v254
        %v1493 = vunpack.c.h.b16 %v254
        %v1494 = vunpack.c.l.b16 %v255
        %v1495 = vunpack.c.h.b16 %v255
        %v1496 = vunpack.c.l.b16 %v256
        %v1497 = vunpack.c.h.b16 %v256
        %v1498 = vunpack.c.l.b16 %v257
        %v1499 = vunpack.c.h.b16 %v257
        %v1500 = vunpack.c.l.b16 %v258
        %v1501 = vunpack.c.h.b16 %v258
        %v1502 = vunpack.c.l.b16 %v259
        %v1503 = vunpack.c.h.b16 %v259
        %v1504 = vunpack.c.l.b16 %v260
        %v1505 = vunpack.c.h.b16 %v260
        %v1506 = vunpack.c.l.b16 %v261
        %v1507 = vunpack.c.h.b16 %v261
        %v1508 = vunpack.c.l.b16 %v262
        %v1509 = vunpack.c.h.b16 %v262
        %v1510 = vunpack.c.l.b16 %v263
        %v1511 = vunpack.c.h.b16 %v263
        %v1512 = vunpack.c.l.b16 %v264
        %v1513 = vunpack.c.h.b16 %v264
        %v1514 = vunpack.c.l.b16 %v265
        %v1515 = vunpack.c.h.b16 %v265
        %v1516 = vunpack.c.l.b16 %v266
        %v1517 = vunpack.c.h.b16 %v266
        %v1518 = vunpack.c.l.b16 %v267
        %v1519 = vunpack.c.h.b16 %v267
        %v1520 = vunpack.c.l.b16 %v268
        %v1521 = vunpack.c.h.b16 %v268
        %v1522 = vunpack.c.l.b16 %v269
        %v1523 = vunpack.c.h.b16 %v269
        %v1524 = vunpack.c.l.b16 %v270
        %v1525 = vunpack.c.h.b16 %v270
        %v1526 = vunpack.c.l.b16 %v271
        %v1527 = vunpack.c.h.b16 %v271
        %v1528 = vunpack.c.l.b16 %v272
        %v1529 = vunpack.c.h.b16 %v272
        %v1530 = vunpack.c.l.b16 %v273
        %v1531 = vunpack.c.h.b16 %v273
        %v1532 = vunpack.c.l.b16 %v274
        %v1533 = vunpack.c.h.b16 %v274
        %v1534 = vunpack.c.l.b16 %v275
        %v1535 = vunpack.c.h.b16 %v275
        %v1536 = vunpack.c.l.b16 %v276
        %v1537 = vunpack.c.h.b16 %v276
        %v1538 = vunpack.c.l.b16 %v277
        %v1539 = vunpack.c.h.b16 %v277
        %v1540 = vunpack.c.l.b16 %v278
        %v1541 = vunpack.c.h.b16 %v278
        %v1542 = vunpack.c.l.b16 %v279
        %v1543 = vunpack.c.h.b16 %v279
        %v1544 = vunpack.c.l.b16 %v280
        %v1545 = vunpack.c.h.b16 %v280
        %v1546 = vunpack.c.l.b16 %v281
        %v1547 = vunpack.c.h.b16 %v281
        %v1548 = vunpack.c.l.b16 %v282
        %v1549 = vunpack.c.h.b16 %v282
        %v1550 = vunpack.c.l.b16 %v283
        %v1551 = vunpack.c.h.b16 %v283
        %v1552 = vunpack.c.l.b16 %v284
        %v1553 = vunpack.c.h.b16 %v284
        %v1554 = vunpack.c.l.b16 %v285
        %v1555 = vunpack.c.h.b16 %v285
        %v1556 = vunpack.c.l.b16 %v286
        %v1557 = vunpack.c.h.b16 %v286
        %v1558 = vunpack.c.l.b16 %v287
        %v1559 = vunpack.c.h.b16 %v287
        %v1560 = vunpack.c.l.b16 %v288
        %v1561 = vunpack.c.h.b16 %v288
        %v1562 = vunpack.c.l.b16 %v289
        %v1563 = vunpack.c.h.b16 %v289
        %v1564 = vunpack.c.l.b16 %v290
        %v1565 = vunpack.c.h.b16 %v290
        %v1566 = vunpack.c.l.b16 %v291
        %v1567 = vunpack.c.h.b16 %v291
        %v1568 = vunpack.c.l.b16 %v292
        %v1569 = vunpack.c.h.b16 %v292
        %v1570 = vunpack.c.l.b16 %v293
        %v1571 = vunpack.c.h.b16 %v293
        %v1572 = vunpack.c.l.b16 %v294
        %v1573 = vunpack.c.h.b16 %v294
        %v1574 = vunpack.c.l.b16 %v295
        %v1575 = vunpack.c.h.b16 %v295
        %v1576 = vunpack.c.l.b16 %v296
        %v1577 = vunpack.c.h.b16 %v296
        %v1578 = vunpack.c.l.b16 %v297
        %v1579 = vunpack.c.h.b16 %v297
        %v1580 = vunpack.c.l.b16 %v298
        %v1581 = vunpack.c.h.b16 %v298
        %v1582 = vunpack.c.l.b16 %v299
        %v1583 = vunpack.c.h.b16 %v299
        %v1584 = vunpack.c.l.b16 %v300
        %v1585 = vunpack.c.h.b16 %v300
        %v1586 = vunpack.c.l.b16 %v301
        %v1587 = vunpack.c.h.b16 %v301
        %v1588 = vunpack.c.l.b16 %v302
        %v1589 = vunpack.c.h.b16 %v302
        %v1590 = vunpack.c.l.b16 %v303
        %v1591 = vunpack.c.h.b16 %v303
        %v1592 = vunpack.c.l.b16 %v304
        %v1593 = vunpack.c.h.b16 %v304
        %v1594 = vunpack.c.l.b16 %v305
        %v1595 = vunpack.c.h.b16 %v305
        %v1596 = vunpack.c.l.b16 %v306
        %v1597 = vunpack.c.h.b16 %v306
        %v1598 = vunpack.c.l.b16 %v307
        %v1599 = vunpack.c.h.b16 %v307
        %v1600 = vunpack.c.l.b16 %v308
        %v1601 = vunpack.c.h.b16 %v308
        %v1602 = vunpack.c.l.b16 %v309
        %v1603 = vunpack.c.h.b16 %v309
        %v1604 = vunpack.c.l.b16 %v310
        %v1605 = vunpack.c.h.b16 %v310
        %v1606 = vunpack.c.l.b16 %v311
        %v1607 = vunpack.c.h.b16 %v311
        %v1608 = vunpack.c.l.b16 %v312
        %v1609 = vunpack.c.h.b16 %v312
        %v1610 = vunpack.c.l.b16 %v313
        %v1611 = vunpack.c.h.b16 %v313
        %v1612 = vunpack.c.l.b16 %v314
        %v1613 = vunpack.c.h.b16 %v314
        %v1614 = vunpack.c.l.b16 %v315
        %v1615 = vunpack.c.h.b16 %v315
        %v1616 = vunpack.c.l.b16 %v316
        %v1617 = vunpack.c.h.b16 %v316
        %v1618 = vunpack.c.l.b16 %v317
        %v1619 = vunpack.c.h.b16 %v317
        %v1620 = vunpack.c.l.b16 %v318
        %v1621 = vunpack.c.h.b16 %v318
        %v1622 = vunpack.c.l.b16 %v319
        %v1623 = vunpack.c.h.b16 %v319
        %v1624 = vunpack.c.l.b16 %v320
        %v1625 = vunpack.c.h.b16 %v320
        %v1626 = vunpack.c.l.b16 %v321
        %v1627 = vunpack.c.h.b16 %v321
        %v1628 = vunpack.c.l.b16 %v322
        %v1629 = vunpack.c.h.b16 %v322
        %v1630 = vunpack.c.l.b16 %v323
        %v1631 = vunpack.c.h.b16 %v323
        %v1632 = vunpack.c.l.b16 %v324
        %v1633 = vunpack.c.h.b16 %v324
        %v1634 = vunpack.c.l.b16 %v325
        %v1635 = vunpack.c.h.b16 %v325
        %v1636 = vunpack.c.l.b16 %v326
        %v1637 = vunpack.c.h.b16 %v326
        %v1638 = vunpack.c.l.b16 %v327
        %v1639 = vunpack.c.h.b16 %v327
        %v1640 = vunpack.c.l.b16 %v328
        %v1641 = vunpack.c.h.b16 %v328
        %v1642 = vunpack.c.l.b16 %v329
        %v1643 = vunpack.c.h.b16 %v329
        %v1644 = vunpack.c.l.b16 %v330
        %v1645 = vunpack.c.h.b16 %v330
        %v1646 = vunpack.c.l.b16 %v331
        %v1647 = vunpack.c.h.b16 %v331
        %v1648 = vunpack.c.l.b16 %v332
        %v1649 = vunpack.c.h.b16 %v332
        %v1650 = vunpack.c.l.b16 %v333
        %v1651 = vunpack.c.h.b16 %v333
        %v1652 = vunpack.c.l.b16 %v334
        %v1653 = vunpack.c.h.b16 %v334
        %v1654 = vunpack.c.l.b16 %v335
        %v1655 = vunpack.c.h.b16 %v335
        %v1656 = vunpack.c.l.b16 %v336
        %v1657 = vunpack.c.h.b16 %v336
        %v1658 = vunpack.c.l.b16 %v337
        %v1659 = vunpack.c.h.b16 %v337
        %v1660 = vunpack.c.l.b16 %v338
        %v1661 = vunpack.c.h.b16 %v338
        %v1662 = vunpack.c.l.b16 %v339
        %v1663 = vunpack.c.h.b16 %v339
        %v1664 = vunpack.c.l.b16 %v340
        %v1665 = vunpack.c.h.b16 %v340
        %v1666 = vunpack.c.l.b16 %v341
        %v1667 = vunpack.c.h.b16 %v341
        %v1668 = vunpack.c.l.b16 %v342
        %v1669 = vunpack.c.h.b16 %v342
        %v1670 = vunpack.c.l.b16 %v343
        %v1671 = vunpack.c.h.b16 %v343
        %v1672 = vunpack.c.l.b16 %v344
        %v1673 = vunpack.c.h.b16 %v344
        %v1674 = vunpack.c.l.b16 %v345
        %v1675 = vunpack.c.h.b16 %v345
        %v1676 = vunpack.c.l.b16 %v346
        %v1677 = vunpack.c.h.b16 %v346
        %v1678 = vunpack.c.l.b16 %v347
        %v1679 = vunpack.c.h.b16 %v347
        %v1680 = vunpack.c.l.b16 %v348
        %v1681 = vunpack.c.h.b16 %v348
        %v1682 = vunpack.c.l.b16 %v349
        %v1683 = vunpack.c.h.b16 %v349
        %v1684 = vunpack.c.l.b16 %v350
        %v1685 = vunpack.c.h.b16 %v350
        %v1686 = vunpack.c.l.b16 %v351
        %v1687 = vunpack.c.h.b16 %v351
        %v1688 = vunpack.c.l.b16 %v352
        %v1689 = vunpack.c.h.b16 %v352
        %v1690 = vunpack.c.l.b16 %v353
        %v1691 = vunpack.c.h.b16 %v353
        %v1692 = vunpack.c.l.b16 %v354
        %v1693 = vunpack.c.h.b16 %v354
        %v1694 = vunpack.c.l.b16 %v355
        %v1695 = vunpack.c.h.b16 %v355
        %v1696 = vunpack.c.l.b16 %v356
        %v1697 = vunpack.c.h.b16 %v356
        %v1698 = vunpack.c.l.b16 %v357
        %v1699 = vunpack.c.h.b16 %v357
        %v1700 = vunpack.c.l.b16 %v358
        %v1701 = vunpack.c.h.b16 %v358
        %v1702 = vunpack.c.l.b16 %v359
        %v1703 = vunpack.c.h.b16 %v359
        %v1704 = vunpack.c.l.b16 %v360
        %v1705 = vunpack.c.h.b16 %v360
        %v1706 = vunpack.c.l.b16 %v361
        %v1707 = vunpack.c.h.b16 %v361
        %v1708 = vunpack.c.l.b16 %v362
        %v1709 = vunpack.c.h.b16 %v362
        %v1710 = vunpack.c.l.b16 %v363
        %v1711 = vunpack.c.h.b16 %v363
        %v1712 = vunpack.c.l.b16 %v364
        %v1713 = vunpack.c.h.b16 %v364
        %v1714 = vunpack.c.l.b16 %v365
        %v1715 = vunpack.c.h.b16 %v365
        %v1716 = vunpack.c.l.b16 %v366
        %v1717 = vunpack.c.h.b16 %v366
        %v1718 = vunpack.c.l.b16 %v367
        %v1719 = vunpack.c.h.b16 %v367
        %v1720 = vunpack.c.l.b16 %v368
        %v1721 = vunpack.c.h.b16 %v368
        %v1722 = vunpack.c.l.b16 %v369
        %v1723 = vunpack.c.h.b16 %v369
        %v1724 = vunpack.c.l.b16 %v370
        %v1725 = vunpack.c.h.b16 %v370
        %v1726 = vunpack.c.l.b16 %v371
        %v1727 = vunpack.c.h.b16 %v371
        %v1728 = vunpack.c.l.b16 %v372
        %v1729 = vunpack.c.h.b16 %v372
        %v1730 = vunpack.c.l.b16 %v373
        %v1731 = vunpack.c.h.b16 %v373
        %v1732 = vunpack.c.l.b16 %v374
        %v1733 = vunpack.c.h.b16 %v374
        %v1734 = vunpack.c.l.b16 %v375
        %v1735 = vunpack.c.h.b16 %v375
        %v1736 = vunpack.c.l.b16 %v376
        %v1737 = vunpack.c.h.b16 %v376
        %v1738 = vunpack.c.l.b16 %v377
        %v1739 = vunpack.c.h.b16 %v377
        %v1740 = vunpack.c.l.b16 %v378
        %v1741 = vunpack.c.h.b16 %v378
        %v1742 = vunpack.c.l.b16 %v379
        %v1743 = vunpack.c.h.b16 %v379
        %v1744 = vunpack.c.l.b16 %v380
        %v1745 = vunpack.c.h.b16 %v380
        %v1746 = vunpack.c.l.b16 %v381
        %v1747 = vunpack.c.h.b16 %v381
        %v1748 = vunpack.c.l.b16 %v382
        %v1749 = vunpack.c.h.b16 %v382
        %v1750 = vunpack.c.l.b16 %v383
        %v1751 = vunpack.c.h.b16 %v383
        %v1752 = vunpack.c.l.b16 %v384
        %v1753 = vunpack.c.h.b16 %v384
        %v1754 = vunpack.c.l.b16 %v385
        %v1755 = vunpack.c.h.b16 %v385
        %v1756 = vunpack.c.l.b16 %v386
        %v1757 = vunpack.c.h.b16 %v386
        %v1758 = vunpack.c.l.b16 %v387
        %v1759 = vunpack.c.h.b16 %v387
        %v1760 = vunpack.c.l.b16 %v388
        %v1761 = vunpack.c.h.b16 %v388
        %v1762 = vunpack.c.l.b16 %v389
        %v1763 = vunpack.c.h.b16 %v389
        %v1764 = vunpack.c.l.b16 %v390
        %v1765 = vunpack.c.h.b16 %v390
        %v1766 = vunpack.c.l.b16 %v391
        %v1767 = vunpack.c.h.b16 %v391
        %v1768 = vunpack.c.l.b16 %v392
        %v1769 = vunpack.c.h.b16 %v392
        %v1770 = vunpack.c.l.b16 %v393
        %v1771 = vunpack.c.h.b16 %v393
        %v1772 = vunpack.c.l.b16 %v394
        %v1773 = vunpack.c.h.b16 %v394
        %v1774 = vunpack.c.l.b16 %v395
        %v1775 = vunpack.c.h.b16 %v395
        %v1776 = vunpack.c.l.b16 %v396
        %v1777 = vunpack.c.h.b16 %v396
        %v1778 = vunpack.c.l.b16 %v397
        %v1779 = vunpack.c.h.b16 %v397
        %v1780 = vunpack.c.l.b16 %v398
        %v1781 = vunpack.c.h.b16 %v398
        %v1782 = vunpack.c.l.b16 %v399
        %v1783 = vunpack.c.h.b16 %v399
        %v1784 = vunpack.c.l.b16 %v400
        %v1785 = vunpack.c.h.b16 %v400
        %v1786 = vunpack.c.l.b16 %v401
        %v1787 = vunpack.c.h.b16 %v401
        %v1788 = vunpack.c.l.b16 %v402
        %v1789 = vunpack.c.h.b16 %v402
        %v1790 = vunpack.c.l.b16 %v403
        %v1791 = vunpack.c.h.b16 %v403
        %v1792 = vunpack.c.l.b16 %v404
        %v1793 = vunpack.c.h.b16 %v404
        %v1794 = vunpack.c.l.b16 %v405
        %v1795 = vunpack.c.h.b16 %v405
        %v1796 = vunpack.c.l.b16 %v406
        %v1797 = vunpack.c.h.b16 %v406
        %v1798 = vunpack.c.l.b16 %v407
        %v1799 = vunpack.c.h.b16 %v407
        %v1800 = vunpack.c.l.b16 %v408
        %v1801 = vunpack.c.h.b16 %v408
        %v1802 = vunpack.c.l.b16 %v409
        %v1803 = vunpack.c.h.b16 %v409
        %v1804 = vunpack.c.l.b16 %v410
        %v1805 = vunpack.c.h.b16 %v410
        %v1806 = vunpack.c.l.b16 %v411
        %v1807 = vunpack.c.h.b16 %v411
        %v1808 = vunpack.c.l.b16 %v412
        %v1809 = vunpack.c.h.b16 %v412
        %v1810 = vunpack.c.l.b16 %v413
        %v1811 = vunpack.c.h.b16 %v413
        %v1812 = vunpack.c.l.b16 %v414
        %v1813 = vunpack.c.h.b16 %v414
        %v1814 = vunpack.c.l.b16 %v415
        %v1815 = vunpack.c.h.b16 %v415
        %v1816 = vunpack.c.l.b16 %v416
        %v1817 = vunpack.c.h.b16 %v416
        %v1818 = vunpack.c.l.b16 %v417
        %v1819 = vunpack.c.h.b16 %v417
        %v1820 = vunpack.c.l.b16 %v418
        %v1821 = vunpack.c.h.b16 %v418
        %v1822 = vunpack.c.l.b16 %v419
        %v1823 = vunpack.c.h.b16 %v419
        %v1824 = vunpack.c.l.b16 %v420
        %v1825 = vunpack.c.h.b16 %v420
        %v1826 = vunpack.c.l.b16 %v421
        %v1827 = vunpack.c.h.b16 %v421
        %v1828 = vunpack.c.l.b16 %v422
        %v1829 = vunpack.c.h.b16 %v422
        %v1830 = vunpack.c.l.b16 %v423
        %v1831 = vunpack.c.h.b16 %v423
        %v1832 = vunpack.c.l.b16 %v424
        %v1833 = vunpack.c.h.b16 %v424
        %v1834 = vunpack.c.l.b16 %v425
        %v1835 = vunpack.c.h.b16 %v425
        %v1836 = vunpack.c.l.b16 %v426
        %v1837 = vunpack.c.h.b16 %v426
        %v1838 = vunpack.c.l.b16 %v427
        %v1839 = vunpack.c.h.b16 %v427
        %v1840 = vunpack.c.l.b16 %v428
        %v1841 = vunpack.c.h.b16 %v428
        %v1842 = vunpack.c.l.b16 %v429
        %v1843 = vunpack.c.h.b16 %v429
        %v1844 = vunpack.c.l.b16 %v430
        %v1845 = vunpack.c.h.b16 %v430
        %v1846 = vunpack.c.l.b16 %v431
        %v1847 = vunpack.c.h.b16 %v431
        %v1848 = vunpack.c.l.b16 %v432
        %v1849 = vunpack.c.h.b16 %v432
        %v1850 = vunpack.c.l.b16 %v433
        %v1851 = vunpack.c.h.b16 %v433
        %v1852 = vunpack.c.l.b16 %v434
        %v1853 = vunpack.c.h.b16 %v434
        %v1854 = vunpack.c.l.b16 %v435
        %v1855 = vunpack.c.h.b16 %v435
        %v1856 = vunpack.c.l.b16 %v436
        %v1857 = vunpack.c.h.b16 %v436
        %v1858 = vunpack.c.l.b16 %v437
        %v1859 = vunpack.c.h.b16 %v437
        %v1860 = vunpack.c.l.b16 %v438
        %v1861 = vunpack.c.h.b16 %v438
        %v1862 = vunpack.c.l.b16 %v439
        %v1863 = vunpack.c.h.b16 %v439
        %v1864 = vunpack.c.l.b16 %v440
        %v1865 = vunpack.c.h.b16 %v440
        %v1866 = vunpack.c.l.b16 %v441
        %v1867 = vunpack.c.h.b16 %v441
        %v1868 = vunpack.c.l.b16 %v442
        %v1869 = vunpack.c.h.b16 %v442
        %v1870 = vunpack.c.l.b16 %v443
        %v1871 = vunpack.c.h.b16 %v443
        %v1872 = vunpack.c.l.b16 %v444
        %v1873 = vunpack.c.h.b16 %v444
        %v1874 = vunpack.c.l.b16 %v445
        %v1875 = vunpack.c.h.b16 %v445
        %v1876 = vunpack.c.l.b16 %v446
        %v1877 = vunpack.c.h.b16 %v446
        %v1878 = vunpack.c.l.b16 %v447
        %v1879 = vunpack.c.h.b16 %v447
        %v1880 = vunpack.c.l.b16 %v448
        %v1881 = vunpack.c.h.b16 %v448
        %v1882 = vunpack.c.l.b16 %v449
        %v1883 = vunpack.c.h.b16 %v449
        %v1884 = vunpack.c.l.b16 %v450
        %v1885 = vunpack.c.h.b16 %v450
        %v1886 = vunpack.c.l.b16 %v451
        %v1887 = vunpack.c.h.b16 %v451
        %v1888 = vunpack.c.l.b16 %v452
        %v1889 = vunpack.c.h.b16 %v452
        %v1890 = vunpack.c.l.b16 %v453
        %v1891 = vunpack.c.h.b16 %v453
        %v1892 = vunpack.c.l.b16 %v454
        %v1893 = vunpack.c.h.b16 %v454
        %v1894 = vunpack.c.l.b16 %v455
        %v1895 = vunpack.c.h.b16 %v455
        %v1896 = vunpack.c.l.b16 %v456
        %v1897 = vunpack.c.h.b16 %v456
        %v1898 = vunpack.c.l.b16 %v457
        %v1899 = vunpack.c.h.b16 %v457
        %v1900 = vunpack.c.l.b16 %v458
        %v1901 = vunpack.c.h.b16 %v458
        %v1902 = vunpack.c.l.b16 %v459
        %v1903 = vunpack.c.h.b16 %v459
        %v1904 = vunpack.c.l.b16 %v460
        %v1905 = vunpack.c.h.b16 %v460
        %v1906 = vunpack.c.l.b16 %v461
        %v1907 = vunpack.c.h.b16 %v461
        %v1908 = vunpack.c.l.b16 %v462
        %v1909 = vunpack.c.h.b16 %v462
        %v1910 = vunpack.c.l.b16 %v463
        %v1911 = vunpack.c.h.b16 %v463
        %v1912 = vunpack.c.l.b16 %v464
        %v1913 = vunpack.c.h.b16 %v464
        %v1914 = vunpack.c.l.b16 %v465
        %v1915 = vunpack.c.h.b16 %v465
        %v1916 = vunpack.c.l.b16 %v466
        %v1917 = vunpack.c.h.b16 %v466
        %v1918 = vunpack.c.l.b16 %v467
        %v1919 = vunpack.c.h.b16 %v467
        %v1920 = vunpack.c.l.b16 %v468
        %v1921 = vunpack.c.h.b16 %v468
        %v1922 = vunpack.c.l.b16 %v469
        %v1923 = vunpack.c.h.b16 %v469
        %v1924 = vunpack.c.l.b16 %v470
        %v1925 = vunpack.c.h.b16 %v470
        %v1926 = vunpack.c.l.b16 %v471
        %v1927 = vunpack.c.h.b16 %v471
        %v1928 = vunpack.c.l.b16 %v472
        %v1929 = vunpack.c.h.b16 %v472
        %v1930 = vunpack.c.l.b16 %v473
        %v1931 = vunpack.c.h.b16 %v473
        %v1932 = vunpack.c.l.b16 %v474
        %v1933 = vunpack.c.h.b16 %v474
        %v1934 = vunpack.c.l.b16 %v475
        %v1935 = vunpack.c.h.b16 %v475
        %v1936 = vunpack.c.l.b16 %v476
        %v1937 = vunpack.c.h.b16 %v476
        %v1938 = vunpack.c.l.b16 %v477
        %v1939 = vunpack.c.h.b16 %v477
        %v1940 = vunpack.c.l.b16 %v478
        %v1941 = vunpack.c.h.b16 %v478
        %v1942 = vunpack.c.l.b16 %v479
        %v1943 = vunpack.c.h.b16 %v479
        %v1944 = vunpack.c.l.b16 %v480
        %v1945 = vunpack.c.h.b16 %v480
        %v1946 = vunpack.c.l.b16 %v481
        %v1947 = vunpack.c.h.b16 %v481
        %v1948 = vunpack.c.l.b16 %v482
        %v1949 = vunpack.c.h.b16 %v482
        %v1950 = vunpack.c.l.b16 %v483
        %v1951 = vunpack.c.h.b16 %v483
        %v1952 = vunpack.c.l.b16 %v484
        %v1953 = vunpack.c.h.b16 %v484
        %v1954 = vunpack.c.l.b16 %v485
        %v1955 = vunpack.c.h.b16 %v485
        %v1956 = vunpack.c.l.b16 %v486
        %v1957 = vunpack.c.h.b16 %v486
        %v1958 = vunpack.c.l.b16 %v487
        %v1959 = vunpack.c.h.b16 %v487
        %v1960 = vunpack.c.l.b16 %v488
        %v1961 = vunpack.c.h.b16 %v488
        %v1962 = vunpack.c.l.b16 %v489
        %v1963 = vunpack.c.h.b16 %v489
        %v1964 = vunpack.c.l.b16 %v490
        %v1965 = vunpack.c.h.b16 %v490
        %v1966 = vunpack.c.l.b16 %v491
        %v1967 = vunpack.c.h.b16 %v491
        %v1968 = vunpack.c.l.b16 %v492
        %v1969 = vunpack.c.h.b16 %v492
        %v1970 = vunpack.c.l.b16 %v493
        %v1971 = vunpack.c.h.b16 %v493
        %v1972 = vunpack.c.l.b16 %v494
        %v1973 = vunpack.c.h.b16 %v494
        %v1974 = vunpack.c.l.b16 %v495
        %v1975 = vunpack.c.h.b16 %v495
        %v1976 = vunpack.c.l.b16 %v496
        %v1977 = vunpack.c.h.b16 %v496
        %v1978 = vunpack.c.l.b16 %v497
        %v1979 = vunpack.c.h.b16 %v497
        %v1980 = vunpack.c.l.b16 %v498
        %v1981 = vunpack.c.h.b16 %v498
        %v1982 = vunpack.c.l.b16 %v499
        %v1983 = vunpack.c.h.b16 %v499
        %v1984 = vunpack.c.l.b16 %v500
        %v1985 = vunpack.c.h.b16 %v500
        %v1986 = vunpack.c.l.b16 %v501
        %v1987 = vunpack.c.h.b16 %v501
        %v1988 = vunpack.c.l.b16 %v502
        %v1989 = vunpack.c.h.b16 %v502
        %v1990 = vunpack.c.l.b16 %v503
        %v1991 = vunpack.c.h.b16 %v503
        %v1992 = vunpack.c.l.b16 %v504
        %v1993 = vunpack.c.h.b16 %v504
        %v1994 = vunpack.c.l.b16 %v505
        %v1995 = vunpack.c.h.b16 %v505
        %v1996 = vunpack.c.l.b16 %v506
        %v1997 = vunpack.c.h.b16 %v506
        %v1998 = vunpack.c.l.b16 %v507
        %v1999 = vunpack.c.h.b16 %v507
        %v2000 = vunpack.c.l.b16 %v508
        %v2001 = vunpack.c.h.b16 %v508
        %v2002 = vunpack.c.l.b16 %v509
        %v2003 = vunpack.c.h.b16 %v509
        %v2004 = vunpack.c.l.b16 %v510
        %v2005 = vunpack.c.h.b16 %v510
        %v2006 = vunpack.c.l.b16 %v511
        %v2007 = vunpack.c.h.b16 %v511
        %v2008 = vunpack.c.l.b16 %v512
        %v2009 = vunpack.c.h.b16 %v512
        %v2010 = vunpack.c.l.b16 %v513
        %v2011 = vunpack.c.h.b16 %v513
        %v2012 = vunpack.c.l.b16 %v514
        %v2013 = vunpack.c.h.b16 %v514
        %v2014 = vunpack.c.l.b16 %v515
        %v2015 = vunpack.c.h.b16 %v515
        %v2016 = vunpack.c.l.b16 %v516
        %v2017 = vunpack.c.h.b16 %v516
        %v2018 = vunpack.c.l.b16 %v517
        %v2019 = vunpack.c.h.b16 %v517
        %v2020 = vunpack.c.l.b16 %v518
        %v2021 = vunpack.c.h.b16 %v518
        %v2022 = vunpack.c.l.b16 %v519
        %v2023 = vunpack.c.h.b16 %v519
        %v2024 = vunpack.c.l.b16 %v520
        %v2025 = vunpack.c.h.b16 %v520
        %v2026 = vunpack.c.l.b16 %v521
        %v2027 = vunpack.c.h.b16 %v521
        %v2028 = vunpack.c.l.b16 %v522
        %v2029 = vunpack.c.h.b16 %v522
        %v2030 = vunpack.c.l.b16 %v523
        %v2031 = vunpack.c.h.b16 %v523
        %v2032 = vunpack.c.l.b16 %v524
        %v2033 = vunpack.c.h.b16 %v524
        %v2034 = vunpack.c.l.b16 %v525
        %v2035 = vunpack.c.h.b16 %v525
        %v2036 = vunpack.c.l.b16 %v526
        %v2037 = vunpack.c.h.b16 %v526
        %v2038 = vunpack.c.l.b16 %v527
        %v2039 = vunpack.c.h.b16 %v527
        %v2040 = vunpack.c.l.b16 %v528
        %v2041 = vunpack.c.h.b16 %v528
        %v2042 = vunpack.c.l.b16 %v529
        %v2043 = vunpack.c.h.b16 %v529
        %v2044 = vunpack.c.l.b16 %v530
        %v2045 = vunpack.c.h.b16 %v530
        %v2046 = vunpack.c.l.b16 %v531
        %v2047 = vunpack.c.h.b16 %v531
        %v2048 = vunpack.c.l.b16 %v532
        %v2049 = vunpack.c.h.b16 %v532
        %v2050 = vunpack.c.l.b16 %v533
        %v2051 = vunpack.c.h.b16 %v533
        %v2052 = vunpack.c.l.b16 %v534
        %v2053 = vunpack.c.h.b16 %v534
        %v2054 = vunpack.c.l.b16 %v535
        %v2055 = vunpack.c.h.b16 %v535
        %v2056 = vunpack.c.l.b16 %v536
        %v2057 = vunpack.c.h.b16 %v536
        %v2058 = vunpack.c.l.b16 %v537
        %v2059 = vunpack.c.h.b16 %v537
        %v2060 = vunpack.c.l.b16 %v538
        %v2061 = vunpack.c.h.b16 %v538
        %v2062 = vunpack.c.l.b16 %v539
        %v2063 = vunpack.c.h.b16 %v539
        %v2064 = vunpack.c.l.b16 %v540
        %v2065 = vunpack.c.h.b16 %v540
        %v2066 = vunpack.c.l.b16 %v541
        %v2067 = vunpack.c.h.b16 %v541
        %v2068 = vunpack.c.l.b16 %v542
        %v2069 = vunpack.c.h.b16 %v542
        %v2070 = vunpack.c.l.b16 %v543
        %v2071 = vunpack.c.h.b16 %v543
        %v2072 = vunpack.c.l.b16 %v544
        %v2073 = vunpack.c.h.b16 %v544
        %v2074 = vunpack.c.l.b16 %v545
        %v2075 = vunpack.c.h.b16 %v545
        %v2076 = vunpack.c.l.b16 %v546
        %v2077 = vunpack.c.h.b16 %v546
        %v2078 = vunpack.c.l.b16 %v547
        %v2079 = vunpack.c.h.b16 %v547
        %v2080 = vunpack.c.l.b16 %v548
        %v2081 = vunpack.c.h.b16 %v548
        %v2082 = vunpack.c.l.b16 %v549
        %v2083 = vunpack.c.h.b16 %v549
        %v2084 = vunpack.c.l.b16 %v550
        %v2085 = vunpack.c.h.b16 %v550
        %v2086 = vunpack.c.l.b16 %v551
        %v2087 = vunpack.c.h.b16 %v551
        %v2088 = vunpack.c.l.b16 %v552
        %v2089 = vunpack.c.h.b16 %v552
        %v2090 = vunpack.c.l.b16 %v553
        %v2091 = vunpack.c.h.b16 %v553
        %v2092 = vunpack.c.l.b16 %v554
        %v2093 = vunpack.c.h.b16 %v554
        %v2094 = vunpack.c.l.b16 %v555
        %v2095 = vunpack.c.h.b16 %v555
        %v2096 = vunpack.c.l.b16 %v556
        %v2097 = vunpack.c.h.b16 %v556
        %v2098 = vunpack.c.l.b16 %v557
        %v2099 = vunpack.c.h.b16 %v557
        %v2100 = vunpack.c.l.b16 %v558
        %v2101 = vunpack.c.h.b16 %v558
        %v2102 = vunpack.c.l.b16 %v559
        %v2103 = vunpack.c.h.b16 %v559
        %v2104 = vunpack.c.l.b16 %v560
        %v2105 = vunpack.c.h.b16 %v560
        %v2106 = vunpack.c.l.b16 %v561
        %v2107 = vunpack.c.h.b16 %v561
        %v2108 = vunpack.c.l.b16 %v562
        %v2109 = vunpack.c.h.b16 %v562
        %v2110 = vunpack.c.l.b16 %v563
        %v2111 = vunpack.c.h.b16 %v563
        %v2112 = vunpack.c.l.b16 %v564
        %v2113 = vunpack.c.h.b16 %v564
        %v2114 = vunpack.c.l.b16 %v565
        %v2115 = vunpack.c.h.b16 %v565
        %v2116 = vunpack.c.l.b16 %v566
        %v2117 = vunpack.c.h.b16 %v566
        %v2118 = vunpack.c.l.b16 %v567
        %v2119 = vunpack.c.h.b16 %v567
        %v2120 = vunpack.c.l.b16 %v568
        %v2121 = vunpack.c.h.b16 %v568
        %v2122 = vunpack.c.l.b16 %v569
        %v2123 = vunpack.c.h.b16 %v569
        %v2124 = vunpack.c.l.b16 %v570
        %v2125 = vunpack.c.h.b16 %v570
        %v2126 = vunpack.c.l.b16 %v571
        %v2127 = vunpack.c.h.b16 %v571
        %v2128 = vunpack.c.l.b16 %v572
        %v2129 = vunpack.c.h.b16 %v572
        %v2130 = vunpack.c.l.b16 %v573
        %v2131 = vunpack.c.h.b16 %v573
        %v2132 = vunpack.c.l.b16 %v574
        %v2133 = vunpack.c.h.b16 %v574
        %v2134 = vunpack.c.l.b16 %v575
        %v2135 = vunpack.c.h.b16 %v575
        %v2136 = vunpack.c.l.b16 %v576
        %v2137 = vunpack.c.h.b16 %v576
        %v2138 = vunpack.c.l.b16 %v577
        %v2139 = vunpack.c.h.b16 %v577
        %v2140 = vunpack.c.l.b16 %v578
        %v2141 = vunpack.c.h.b16 %v578
        %v2142 = vunpack.c.l.b16 %v579
        %v2143 = vunpack.c.h.b16 %v579
        %v2144 = vunpack.c.l.b16 %v580
        %v2145 = vunpack.c.h.b16 %v580
        %v2146 = vunpack.c.l.b16 %v581
        %v2147 = vunpack.c.h.b16 %v581
        %v2148 = vunpack.c.l.b16 %v582
        %v2149 = vunpack.c.h.b16 %v582
        %v2150 = vunpack.c.l.b16 %v583
        %v2151 = vunpack.c.h.b16 %v583
        %v2152 = vunpack.c.l.b16 %v584
        %v2153 = vunpack.c.h.b16 %v584
        %v2154 = vunpack.c.l.b16 %v585
        %v2155 = vunpack.c.h.b16 %v585
        %v2156 = vunpack.c.l.b16 %v586
        %v2157 = vunpack.c.h.b16 %v586
        %v2158 = vunpack.c.l.b16 %v587
        %v2159 = vunpack.c.h.b16 %v587
        %v2160 = vunpack.c.l.b16 %v588
        %v2161 = vunpack.c.h.b16 %v588
        %v2162 = vunpack.c.l.b16 %v589
        %v2163 = vunpack.c.h.b16 %v589
        %v2164 = vunpack.c.l.b16 %v590
        %v2165 = vunpack.c.h.b16 %v590
        %v2166 = vunpack.c.l.b16 %v591
        %v2167 = vunpack.c.h.b16 %v591
        %v2168 = vunpack.c.l.b16 %v592
        %v2169 = vunpack.c.h.b16 %v592
        %v2170 = vunpack.c.l.b16 %v593
        %v2171 = vunpack.c.h.b16 %v593
        %v2172 = vunpack.c.l.b16 %v594
        %v2173 = vunpack.c.h.b16 %v594
        %v2174 = vunpack.c.l.b16 %v595
        %v2175 = vunpack.c.h.b16 %v595
        %v2176 = vunpack.c.l.b16 %v596
        %v2177 = vunpack.c.h.b16 %v596
        %v2178 = vunpack.c.l.b16 %v597
        %v2179 = vunpack.c.h.b16 %v597
        %v2180 = vunpack.c.l.b16 %v598
        %v2181 = vunpack.c.h.b16 %v598
        %v2182 = vunpack.c.l.b16 %v599
        %v2183 = vunpack.c.h.b16 %v599
        %v2184 = vunpack.c.l.b16 %v600
        %v2185 = vunpack.c.h.b16 %v600
        %v2186 = vunpack.c.l.b16 %v601
        %v2187 = vunpack.c.h.b16 %v601
        %v2188 = vunpack.c.l.b16 %v602
        %v2189 = vunpack.c.h.b16 %v602
        %v2190 = vunpack.c.l.b16 %v603
        %v2191 = vunpack.c.h.b16 %v603
        %v2192 = vunpack.c.l.b16 %v604
        %v2193 = vunpack.c.h.b16 %v604
        %v2194 = vunpack.c.l.b16 %v605
        %v2195 = vunpack.c.h.b16 %v605
        %v2196 = vunpack.c.l.b16 %v606
        %v2197 = vunpack.c.h.b16 %v606
        %v2198 = vunpack.c.l.b16 %v607
        %v2199 = vunpack.c.h.b16 %v607
        %v2200 = vunpack.c.l.b16 %v608
        %v2201 = vunpack.c.h.b16 %v608
        %v2202 = vunpack.c.l.b16 %v609
        %v2203 = vunpack.c.h.b16 %v609
        %v2204 = vunpack.c.l.b16 %v610
        %v2205 = vunpack.c.h.b16 %v610
        %v2206 = vunpack.c.l.b16 %v611
        %v2207 = vunpack.c.h.b16 %v611
        %v2208 = vunpack.c.l.b16 %v612
        %v2209 = vunpack.c.h.b16 %v612
        %v2210 = vunpack.c.l.b16 %v613
        %v2211 = vunpack.c.h.b16 %v613
        %v2212 = vunpack.c.l.b16 %v614
        %v2213 = vunpack.c.h.b16 %v614
        %v2214 = vunpack.c.l.b16 %v615
        %v2215 = vunpack.c.h.b16 %v615
        %v2216 = vunpack.c.l.b16 %v616
        %v2217 = vunpack.c.h.b16 %v616
        %v2218 = vunpack.c.l.b16 %v617
        %v2219 = vunpack.c.h.b16 %v617
        %v2220 = vunpack.c.l.b16 %v618
        %v2221 = vunpack.c.h.b16 %v618
        %v2222 = vunpack.c.l.b16 %v619
        %v2223 = vunpack.c.h.b16 %v619
        %v2224 = vunpack.c.l.b16 %v620
        %v2225 = vunpack.c.h.b16 %v620
        %v2226 = vunpack.c.l.b16 %v621
        %v2227 = vunpack.c.h.b16 %v621
        %v2228 = vunpack.c.l.b16 %v622
        %v2229 = vunpack.c.h.b16 %v622
        %v2230 = vunpack.c.l.b16 %v623
        %v2231 = vunpack.c.h.b16 %v623
        %v2232 = vunpack.c.l.b16 %v624
        %v2233 = vunpack.c.h.b16 %v624
        %v2234 = vunpack.c.l.b16 %v625
        %v2235 = vunpack.c.h.b16 %v625
        %v2236 = vunpack.c.l.b16 %v626
        %v2237 = vunpack.c.h.b16 %v626
        %v2238 = vunpack.c.l.b16 %v627
        %v2239 = vunpack.c.h.b16 %v627
        %v2240 = vunpack.c.l.b16 %v628
        %v2241 = vunpack.c.h.b16 %v628
        %v2242 = vunpack.c.l.b16 %v629
        %v2243 = vunpack.c.h.b16 %v629
        %v2244 = vunpack.c.l.b16 %v630
        %v2245 = vunpack.c.h.b16 %v630
        %v2246 = vunpack.c.l.b16 %v631
        %v2247 = vunpack.c.h.b16 %v631
        %v2248 = vunpack.c.l.b16 %v632
        %v2249 = vunpack.c.h.b16 %v632
        %v2250 = vunpack.c.l.b16 %v633
        %v2251 = vunpack.c.h.b16 %v633
        %v2252 = vunpack.c.l.b16 %v634
        %v2253 = vunpack.c.h.b16 %v634
        %v2254 = vunpack.c.l.b16 %v635
        %v2255 = vunpack.c.h.b16 %v635
        %v2256 = vunpack.c.l.b16 %v636
        %v2257 = vunpack.c.h.b16 %v636
        %v2258 = vunpack.c.l.b16 %v637
        %v2259 = vunpack.c.h.b16 %v637
        %v2260 = vunpack.c.l.b16 %v638
        %v2261 = vunpack.c.h.b16 %v638
        %v2262 = vunpack.c.l.b16 %v639
        %v2263 = vunpack.c.h.b16 %v639
        %v2264 = vunpack.c.l.b16 %v640
        %v2265 = vunpack.c.h.b16 %v640
        %v2266 = vunpack.c.l.b16 %v641
        %v2267 = vunpack.c.h.b16 %v641
        %v2268 = vunpack.c.l.b16 %v642
        %v2269 = vunpack.c.h.b16 %v642
        %v2270 = vunpack.c.l.b16 %v643
        %v2271 = vunpack.c.h.b16 %v643
        %v2272 = vunpack.c.l.b16 %v644
        %v2273 = vunpack.c.h.b16 %v644
        %v2274 = vunpack.c.l.b16 %v645
        %v2275 = vunpack.c.h.b16 %v645
        %v2276 = vunpack.c.l.b16 %v646
        %v2277 = vunpack.c.h.b16 %v646
        %v2278 = vunpack.c.l.b16 %v647
        %v2279 = vunpack.c.h.b16 %v647
        %v2280 = vunpack.c.l.b16 %v648
        %v2281 = vunpack.c.h.b16 %v648
        %v2282 = vunpack.c.l.b16 %v649
        %v2283 = vunpack.c.h.b16 %v649
        %v2284 = vunpack.c.l.b16 %v650
        %v2285 = vunpack.c.h.b16 %v650
        %v2286 = vunpack.c.l.b16 %v651
        %v2287 = vunpack.c.h.b16 %v651
        %v2288 = vunpack.c.l.b16 %v652
        %v2289 = vunpack.c.h.b16 %v652
        %v2290 = vunpack.c.l.b16 %v653
        %v2291 = vunpack.c.h.b16 %v653
        %v2292 = vunpack.c.l.b16 %v654
        %v2293 = vunpack.c.h.b16 %v654
        %v2294 = vunpack.c.l.b16 %v655
        %v2295 = vunpack.c.h.b16 %v655
        %v2296 = vunpack.c.l.b16 %v656
        %v2297 = vunpack.c.h.b16 %v656
        %v2298 = vunpack.c.l.b16 %v657
        %v2299 = vunpack.c.h.b16 %v657
        %v2300 = vunpack.c.l.b16 %v658
        %v2301 = vunpack.c.h.b16 %v658
        %v2302 = vunpack.c.l.b16 %v659
        %v2303 = vunpack.c.h.b16 %v659
        %v2304 = vunpack.c.l.b16 %v660
        %v2305 = vunpack.c.h.b16 %v660
        %v2306 = vunpack.c.l.b16 %v661
        %v2307 = vunpack.c.h.b16 %v661
        %v2308 = vunpack.c.l.b16 %v662
        %v2309 = vunpack.c.h.b16 %v662
        %v2310 = vunpack.c.l.b16 %v663
        %v2311 = vunpack.c.h.b16 %v663
        %v2312 = vunpack.c.l.b16 %v664
        %v2313 = vunpack.c.h.b16 %v664
        %v2314 = vunpack.c.l.b16 %v665
        %v2315 = vunpack.c.h.b16 %v665
        %v2316 = vunpack.c.l.b16 %v666
        %v2317 = vunpack.c.h.b16 %v666
        %v2318 = vunpack.c.l.b16 %v667
        %v2319 = vunpack.c.h.b16 %v667
        %v2320 = vpack.c.b16 %v1300, %v1296
        %v2321 = vpack.c.b16 %v1301, %v1297
        %v2322 = vpack.c.b16 %v1302, %v1298
        %v2323 = vpack.c.b16 %v1303, %v1299
        %v2324 = vpack.c.b16 %v1308, %v1304
        %v2325 = vpack.c.b16 %v1309, %v1305
        %v2326 = vpack.c.b16 %v1310, %v1306
        %v2327 = vpack.c.b16 %v1311, %v1307
        %v2328 = vpack.c.b16 %v1316, %v1312
        %v2329 = vpack.c.b16 %v1317, %v1313
        %v2330 = vpack.c.b16 %v1318, %v1314
        %v2331 = vpack.c.b16 %v1319, %v1315
        %v2332 = vpack.c.b16 %v1324, %v1320
        %v2333 = vpack.c.b16 %v1325, %v1321
        %v2334 = vpack.c.b16 %v1326, %v1322
        %v2335 = vpack.c.b16 %v1327, %v1323
        %v2336 = vpack.c.b16 %v1332, %v1328
        %v2337 = vpack.c.b16 %v1333, %v1329
        %v2338 = vpack.c.b16 %v1334, %v1330
        %v2339 = vpack.c.b16 %v1335, %v1331
        %v2340 = vpack.c.b16 %v1340, %v1336
        %v2341 = vpack.c.b16 %v1341, %v1337
        %v2342 = vpack.c.b16 %v1342, %v1338
        %v2343 = vpack.c.b16 %v1343, %v1339
        %v2344 = vpack.c.b16 %v1348, %v1344
        %v2345 = vpack.c.b16 %v1349, %v1345
        %v2346 = vpack.c.b16 %v1350, %v1346
        %v2347 = vpack.c.b16 %v1351, %v1347
        %v2348 = vpack.c.b16 %v1356, %v1352
        %v2349 = vpack.c.b16 %v1357, %v1353
        %v2350 = vpack.c.b16 %v1358, %v1354
        %v2351 = vpack.c.b16 %v1359, %v1355
        %v2352 = vpack.c.b16 %v1364, %v1360
        %v2353 = vpack.c.b16 %v1365, %v1361
        %v2354 = vpack.c.b16 %v1366, %v1362
        %v2355 = vpack.c.b16 %v1367, %v1363
        %v2356 = vpack.c.b16 %v1372, %v1368
        %v2357 = vpack.c.b16 %v1373, %v1369
        %v2358 = vpack.c.b16 %v1374, %v1370
        %v2359 = vpack.c.b16 %v1375, %v1371
        %v2360 = vpack.c.b16 %v1380, %v1376
        %v2361 = vpack.c.b16 %v1381, %v1377
        %v2362 = vpack.c.b16 %v1382, %v1378
        %v2363 = vpack.c.b16 %v1383, %v1379
        %v2364 = vpack.c.b16 %v1388, %v1384
        %v2365 = vpack.c.b16 %v1389, %v1385
        %v2366 = vpack.c.b16 %v1390, %v1386
        %v2367 = vpack.c.b16 %v1391, %v1387
        %v2368 = vpack.c.b16 %v1396, %v1392
        %v2369 = vpack.c.b16 %v1397, %v1393
        %v2370 = vpack.c.b16 %v1398, %v1394
        %v2371 = vpack.c.b16 %v1399, %v1395
        %v2372 = vpack.c.b16 %v1404, %v1400
        %v2373 = vpack.c.b16 %v1405, %v1401
        %v2374 = vpack.c.b16 %v1406, %v1402
        %v2375 = vpack.c.b16 %v1407, %v1403
        %v2376 = vpack.c.b16 %v1412, %v1408
        %v2377 = vpack.c.b16 %v1413, %v1409
        %v2378 = vpack.c.b16 %v1414, %v1410
        %v2379 = vpack.c.b16 %v1415, %v1411
        %v2380 = vpack.c.b16 %v1420, %v1416
        %v2381 = vpack.c.b16 %v1421, %v1417
        %v2382 = vpack.c.b16 %v1422, %v1418
        %v2383 = vpack.c.b16 %v1423, %v1419
        %v2384 = vpack.c.b16 %v1428, %v1424
        %v2385 = vpack.c.b16 %v1429, %v1425
        %v2386 = vpack.c.b16 %v1430, %v1426
        %v2387 = vpack.c.b16 %v1431, %v1427
        %v2388 = vpack.c.b16 %v1436, %v1432
        %v2389 = vpack.c.b16 %v1437, %v1433
        %v2390 = vpack.c.b16 %v1438, %v1434
        %v2391 = vpack.c.b16 %v1439, %v1435
        %v2392 = vpack.c.b16 %v1444, %v1440
        %v2393 = vpack.c.b16 %v1445, %v1441
        %v2394 = vpack.c.b16 %v1446, %v1442
        %v2395 = vpack.c.b16 %v1447, %v1443
        %v2396 = vpack.c.b16 %v1452, %v1448
        %v2397 = vpack.c.b16 %v1453, %v1449
        %v2398 = vpack.c.b16 %v1454, %v1450
        %v2399 = vpack.c.b16 %v1455, %v1451
        %v2400 = vpack.c.b16 %v1460, %v1456
        %v2401 = vpack.c.b16 %v1461, %v1457
        %v2402 = vpack.c.b16 %v1462, %v1458
        %v2403 = vpack.c.b16 %v1463, %v1459
        %v2404 = vpack.c.b16 %v1468, %v1464
        %v2405 = vpack.c.b16 %v1469, %v1465
        %v2406 = vpack.c.b16 %v1470, %v1466
        %v2407 = vpack.c.b16 %v1471, %v1467
        %v2408 = vpack.c.b16 %v1476, %v1472
        %v2409 = vpack.c.b16 %v1477, %v1473
        %v2410 = vpack.c.b16 %v1478, %v1474
        %v2411 = vpack.c.b16 %v1479, %v1475
        %v2412 = vpack.c.b16 %v1484, %v1480
        %v2413 = vpack.c.b16 %v1485, %v1481
        %v2414 = vpack.c.b16 %v1486, %v1482
        %v2415 = vpack.c.b16 %v1487, %v1483
        %v2416 = vpack.c.b16 %v1492, %v1488
        %v2417 = vpack.c.b16 %v1493, %v1489
        %v2418 = vpack.c.b16 %v1494, %v1490
        %v2419 = vpack.c.b16 %v1495, %v1491
        %v2420 = vpack.c.b16 %v1500, %v1496
        %v2421 = vpack.c.b16 %v1501, %v1497
        %v2422 = vpack.c.b16 %v1502, %v1498
        %v2423 = vpack.c.b16 %v1503, %v1499
        %v2424 = vpack.c.b16 %v1508, %v1504
        %v2425 = vpack.c.b16 %v1509, %v1505
        %v2426 = vpack.c.b16 %v1510, %v1506
        %v2427 = vpack.c.b16 %v1511, %v1507
        %v2428 = vpack.c.b16 %v1516, %v1512
        %v2429 = vpack.c.b16 %v1517, %v1513
        %v2430 = vpack.c.b16 %v1518, %v1514
        %v2431 = vpack.c.b16 %v1519, %v1515
        %v2432 = vpack.c.b16 %v1524, %v1520
        %v2433 = vpack.c.b16 %v1525, %v1521
        %v2434 = vpack.c.b16 %v1526, %v1522
        %v2435 = vpack.c.b16 %v1527, %v1523
        %v2436 = vpack.c.b16 %v1532, %v1528
        %v2437 = vpack.c.b16 %v1533, %v1529
        %v2438 = vpack.c.b16 %v1534, %v1530
        %v2439 = vpack.c.b16 %v1535, %v1531
        %v2440 = vpack.c.b16 %v1540, %v1536
        %v2441 = vpack.c.b16 %v1541, %v1537
        %v2442 = vpack.c.b16 %v1542, %v1538
        %v2443 = vpack.c.b16 %v1543, %v1539
        %v2444 = vpack.c.b16 %v1548, %v1544
        %v2445 = vpack.c.b16 %v1549, %v1545
        %v2446 = vpack.c.b16 %v1550, %v1546
        %v2447 = vpack.c.b16 %v1551, %v1547
        %v2448 = vpack.c.b16 %v1556, %v1552
        %v2449 = vpack.c.b16 %v1557, %v1553
        %v2450 = vpack.c.b16 %v1558, %v1554
        %v2451 = vpack.c.b16 %v1559, %v1555
        %v2452 = vpack.c.b16 %v1564, %v1560
        %v2453 = vpack.c.b16 %v1565, %v1561
        %v2454 = vpack.c.b16 %v1566, %v1562
        %v2455 = vpack.c.b16 %v1567, %v1563
        %v2456 = vpack.c.b16 %v1572, %v1568
        %v2457 = vpack.c.b16 %v1573, %v1569
        %v2458 = vpack.c.b16 %v1574, %v1570
        %v2459 = vpack.c.b16 %v1575, %v1571
        %v2460 = vpack.c.b16 %v1580, %v1576
        %v2461 = vpack.c.b16 %v1581, %v1577
        %v2462 = vpack.c.b16 %v1582, %v1578
        %v2463 = vpack.c.b16 %v1583, %v1579
        %v2464 = vpack.c.b16 %v1588, %v1584
        %v2465 = vpack.c.b16 %v1589, %v1585
        %v2466 = vpack.c.b16 %v1590, %v1586
        %v2467 = vpack.c.b16 %v1591, %v1587
        %v2468 = vpack.c.b16 %v1596, %v1592
        %v2469 = vpack.c.b16 %v1597, %v1593
        %v2470 = vpack.c.b16 %v1598, %v1594
        %v2471 = vpack.c.b16 %v1599, %v1595
        %v2472 = vpack.c.b16 %v1604, %v1600
        %v2473 = vpack.c.b16 %v1605, %v1601
        %v2474 = vpack.c.b16 %v1606, %v1602
        %v2475 = vpack.c.b16 %v1607, %v1603
        %v2476 = vpack.c.b16 %v1612, %v1608
        %v2477 = vpack.c.b16 %v1613, %v1609
        %v2478 = vpack.c.b16 %v1614, %v1610
        %v2479 = vpack.c.b16 %v1615, %v1611
        %v2480 = vpack.c.b16 %v1620, %v1616
        %v2481 = vpack.c.b16 %v1621, %v1617
        %v2482 = vpack.c.b16 %v1622, %v1618
        %v2483 = vpack.c.b16 %v1623, %v1619
        %v2484 = vpack.c.b16 %v1628, %v1624
        %v2485 = vpack.c.b16 %v1629, %v1625
        %v2486 = vpack.c.b16 %v1630, %v1626
        %v2487 = vpack.c.b16 %v1631, %v1627
        %v2488 = vpack.c.b16 %v1636, %v1632
        %v2489 = vpack.c.b16 %v1637, %v1633
        %v2490 = vpack.c.b16 %v1638, %v1634
        %v2491 = vpack.c.b16 %v1639, %v1635
        %v2492 = vpack.c.b16 %v1644, %v1640
        %v2493 = vpack.c.b16 %v1645, %v1641
        %v2494 = vpack.c.b16 %v1646, %v1642
        %v2495 = vpack.c.b16 %v1647, %v1643
        %v2496 = vpack.c.b16 %v1652, %v1648
        %v2497 = vpack.c.b16 %v1653, %v1649
        %v2498 = vpack.c.b16 %v1654, %v1650
        %v2499 = vpack.c.b16 %v1655, %v1651
        %v2500 = vpack.c.b16 %v1660, %v1656
        %v2501 = vpack.c.b16 %v1661, %v1657
        %v2502 = vpack.c.b16 %v1662, %v1658
        %v2503 = vpack.c.b16 %v1663, %v1659
        %v2504 = vpack.c.b16 %v1668, %v1664
        %v2505 = vpack.c.b16 %v1669, %v1665
        %v2506 = vpack.c.b16 %v1670, %v1666
        %v2507 = vpack.c.b16 %v1671, %v1667
        %v2508 = vpack.c.b16 %v1676, %v1672
        %v2509 = vpack.c.b16 %v1677, %v1673
        %v2510 = vpack.c.b16 %v1678, %v1674
        %v2511 = vpack.c.b16 %v1679, %v1675
        %v2512 = vpack.c.b16 %v1684, %v1680
        %v2513 = vpack.c.b16 %v1685, %v1681
        %v2514 = vpack.c.b16 %v1686, %v1682
        %v2515 = vpack.c.b16 %v1687, %v1683
        %v2516 = vpack.c.b16 %v1692, %v1688
        %v2517 = vpack.c.b16 %v1693, %v1689
        %v2518 = vpack.c.b16 %v1694, %v1690
        %v2519 = vpack.c.b16 %v1695, %v1691
        %v2520 = vpack.c.b16 %v1700, %v1696
        %v2521 = vpack.c.b16 %v1701, %v1697
        %v2522 = vpack.c.b16 %v1702, %v1698
        %v2523 = vpack.c.b16 %v1703, %v1699
        %v2524 = vpack.c.b16 %v1708, %v1704
        %v2525 = vpack.c.b16 %v1709, %v1705
        %v2526 = vpack.c.b16 %v1710, %v1706
        %v2527 = vpack.c.b16 %v1711, %v1707
        %v2528 = vpack.c.b16 %v1716, %v1712
        %v2529 = vpack.c.b16 %v1717, %v1713
        %v2530 = vpack.c.b16 %v1718, %v1714
        %v2531 = vpack.c.b16 %v1719, %v1715
        %v2532 = vpack.c.b16 %v1724, %v1720
        %v2533 = vpack.c.b16 %v1725, %v1721
        %v2534 = vpack.c.b16 %v1726, %v1722
        %v2535 = vpack.c.b16 %v1727, %v1723
        %v2536 = vpack.c.b16 %v1732, %v1728
        %v2537 = vpack.c.b16 %v1733, %v1729
        %v2538 = vpack.c.b16 %v1734, %v1730
        %v2539 = vpack.c.b16 %v1735, %v1731
        %v2540 = vpack.c.b16 %v1740, %v1736
        %v2541 = vpack.c.b16 %v1741, %v1737
        %v2542 = vpack.c.b16 %v1742, %v1738
        %v2543 = vpack.c.b16 %v1743, %v1739
        %v2544 = vpack.c.b16 %v1748, %v1744
        %v2545 = vpack.c.b16 %v1749, %v1745
        %v2546 = vpack.c.b16 %v1750, %v1746
        %v2547 = vpack.c.b16 %v1751, %v1747
        %v2548 = vpack.c.b16 %v1756, %v1752
        %v2549 = vpack.c.b16 %v1757, %v1753
        %v2550 = vpack.c.b16 %v1758, %v1754
        %v2551 = vpack.c.b16 %v1759, %v1755
        %v2552 = vpack.c.b16 %v1764, %v1760
        %v2553 = vpack.c.b16 %v1765, %v1761
        %v2554 = vpack.c.b16 %v1766, %v1762
        %v2555 = vpack.c.b16 %v1767, %v1763
        %v2556 = vpack.c.b16 %v1772, %v1768
        %v2557 = vpack.c.b16 %v1773, %v1769
        %v2558 = vpack.c.b16 %v1774, %v1770
        %v2559 = vpack.c.b16 %v1775, %v1771
        %v2560 = vpack.c.b16 %v1780, %v1776
        %v2561 = vpack.c.b16 %v1781, %v1777
        %v2562 = vpack.c.b16 %v1782, %v1778
        %v2563 = vpack.c.b16 %v1783, %v1779
        %v2564 = vpack.c.b16 %v1788, %v1784
        %v2565 = vpack.c.b16 %v1789, %v1785
        %v2566 = vpack.c.b16 %v1790, %v1786
        %v2567 = vpack.c.b16 %v1791, %v1787
        %v2568 = vpack.c.b16 %v1796, %v1792
        %v2569 = vpack.c.b16 %v1797, %v1793
        %v2570 = vpack.c.b16 %v1798, %v1794
        %v2571 = vpack.c.b16 %v1799, %v1795
        %v2572 = vpack.c.b16 %v1804, %v1800
        %v2573 = vpack.c.b16 %v1805, %v1801
        %v2574 = vpack.c.b16 %v1806, %v1802
        %v2575 = vpack.c.b16 %v1807, %v1803
        %v2576 = vpack.c.b16 %v1812, %v1808
        %v2577 = vpack.c.b16 %v1813, %v1809
        %v2578 = vpack.c.b16 %v1814, %v1810
        %v2579 = vpack.c.b16 %v1815, %v1811
        %v2580 = vpack.c.b16 %v1820, %v1816
        %v2581 = vpack.c.b16 %v1821, %v1817
        %v2582 = vpack.c.b16 %v1822, %v1818
        %v2583 = vpack.c.b16 %v1823, %v1819
        %v2584 = vpack.c.b16 %v1828, %v1824
        %v2585 = vpack.c.b16 %v1829, %v1825
        %v2586 = vpack.c.b16 %v1830, %v1826
        %v2587 = vpack.c.b16 %v1831, %v1827
        %v2588 = vpack.c.b16 %v1836, %v1832
        %v2589 = vpack.c.b16 %v1837, %v1833
        %v2590 = vpack.c.b16 %v1838, %v1834
        %v2591 = vpack.c.b16 %v1839, %v1835
        %v2592 = vpack.c.b16 %v1844, %v1840
        %v2593 = vpack.c.b16 %v1845, %v1841
        %v2594 = vpack.c.b16 %v1846, %v1842
        %v2595 = vpack.c.b16 %v1847, %v1843
        %v2596 = vpack.c.b16 %v1852, %v1848
        %v2597 = vpack.c.b16 %v1853, %v1849
        %v2598 = vpack.c.b16 %v1854, %v1850
        %v2599 = vpack.c.b16 %v1855, %v1851
        %v2600 = vpack.c.b16 %v1860, %v1856
        %v2601 = vpack.c.b16 %v1861, %v1857
        %v2602 = vpack.c.b16 %v1862, %v1858
        %v2603 = vpack.c.b16 %v1863, %v1859
        %v2604 = vpack.c.b16 %v1868, %v1864
        %v2605 = vpack.c.b16 %v1869, %v1865
        %v2606 = vpack.c.b16 %v1870, %v1866
        %v2607 = vpack.c.b16 %v1871, %v1867
        %v2608 = vpack.c.b16 %v1876, %v1872
        %v2609 = vpack.c.b16 %v1877, %v1873
        %v2610 = vpack.c.b16 %v1878, %v1874
        %v2611 = vpack.c.b16 %v1879, %v1875
        %v2612 = vpack.c.b16 %v1884, %v1880
        %v2613 = vpack.c.b16 %v1885, %v1881
        %v2614 = vpack.c.b16 %v1886, %v1882
        %v2615 = vpack.c.b16 %v1887, %v1883
        %v2616 = vpack.c.b16 %v1892, %v1888
        %v2617 = vpack.c.b16 %v1893, %v1889
        %v2618 = vpack.c.b16 %v1894, %v1890
        %v2619 = vpack.c.b16 %v1895, %v1891
        %v2620 = vpack.c.b16 %v1900, %v1896
        %v2621 = vpack.c.b16 %v1901, %v1897
        %v2622 = vpack.c.b16 %v1902, %v1898
        %v2623 = vpack.c.b16 %v1903, %v1899
        %v2624 = vpack.c.b16 %v1908, %v1904
        %v2625 = vpack.c.b16 %v1909, %v1905
        %v2626 = vpack.c.b16 %v1910, %v1906
        %v2627 = vpack.c.b16 %v1911, %v1907
        %v2628 = vpack.c.b16 %v1916, %v1912
        %v2629 = vpack.c.b16 %v1917, %v1913
        %v2630 = vpack.c.b16 %v1918, %v1914
        %v2631 = vpack.c.b16 %v1919, %v1915
        %v2632 = vpack.c.b16 %v1924, %v1920
        %v2633 = vpack.c.b16 %v1925, %v1921
        %v2634 = vpack.c.b16 %v1926, %v1922
        %v2635 = vpack.c.b16 %v1927, %v1923
        %v2636 = vpack.c.b16 %v1932, %v1928
        %v2637 = vpack.c.b16 %v1933, %v1929
        %v2638 = vpack.c.b16 %v1934, %v1930
        %v2639 = vpack.c.b16 %v1935, %v1931
        %v2640 = vpack.c.b16 %v1940, %v1936
        %v2641 = vpack.c.b16 %v1941, %v1937
        %v2642 = vpack.c.b16 %v1942, %v1938
        %v2643 = vpack.c.b16 %v1943, %v1939
        %v2644 = vpack.c.b16 %v1948, %v1944
        %v2645 = vpack.c.b16 %v1949, %v1945
        %v2646 = vpack.c.b16 %v1950, %v1946
        %v2647 = vpack.c.b16 %v1951, %v1947
        %v2648 = vpack.c.b16 %v1956, %v1952
        %v2649 = vpack.c.b16 %v1957, %v1953
        %v2650 = vpack.c.b16 %v1958, %v1954
        %v2651 = vpack.c.b16 %v1959, %v1955
        %v2652 = vpack.c.b16 %v1964, %v1960
        %v2653 = vpack.c.b16 %v1965, %v1961
        %v2654 = vpack.c.b16 %v1966, %v1962
        %v2655 = vpack.c.b16 %v1967, %v1963
        %v2656 = vpack.c.b16 %v1972, %v1968
        %v2657 = vpack.c.b16 %v1973, %v1969
        %v2658 = vpack.c.b16 %v1974, %v1970
        %v2659 = vpack.c.b16 %v1975, %v1971
        %v2660 = vpack.c.b16 %v1980, %v1976
        %v2661 = vpack.c.b16 %v1981, %v1977
        %v2662 = vpack.c.b16 %v1982, %v1978
        %v2663 = vpack.c.b16 %v1983, %v1979
        %v2664 = vpack.c.b16 %v1988, %v1984
        %v2665 = vpack.c.b16 %v1989, %v1985
        %v2666 = vpack.c.b16 %v1990, %v1986
        %v2667 = vpack.c.b16 %v1991, %v1987
        %v2668 = vpack.c.b16 %v1996, %v1992
        %v2669 = vpack.c.b16 %v1997, %v1993
        %v2670 = vpack.c.b16 %v1998, %v1994
        %v2671 = vpack.c.b16 %v1999, %v1995
        %v2672 = vpack.c.b16 %v2004, %v2000
        %v2673 = vpack.c.b16 %v2005, %v2001
        %v2674 = vpack.c.b16 %v2006, %v2002
        %v2675 = vpack.c.b16 %v2007, %v2003
        %v2676 = vpack.c.b16 %v2012, %v2008
        %v2677 = vpack.c.b16 %v2013, %v2009
        %v2678 = vpack.c.b16 %v2014, %v2010
        %v2679 = vpack.c.b16 %v2015, %v2011
        %v2680 = vpack.c.b16 %v2020, %v2016
        %v2681 = vpack.c.b16 %v2021, %v2017
        %v2682 = vpack.c.b16 %v2022, %v2018
        %v2683 = vpack.c.b16 %v2023, %v2019
        %v2684 = vpack.c.b16 %v2028, %v2024
        %v2685 = vpack.c.b16 %v2029, %v2025
        %v2686 = vpack.c.b16 %v2030, %v2026
        %v2687 = vpack.c.b16 %v2031, %v2027
        %v2688 = vpack.c.b16 %v2036, %v2032
        %v2689 = vpack.c.b16 %v2037, %v2033
        %v2690 = vpack.c.b16 %v2038, %v2034
        %v2691 = vpack.c.b16 %v2039, %v2035
        %v2692 = vpack.c.b16 %v2044, %v2040
        %v2693 = vpack.c.b16 %v2045, %v2041
        %v2694 = vpack.c.b16 %v2046, %v2042
        %v2695 = vpack.c.b16 %v2047, %v2043
        %v2696 = vpack.c.b16 %v2052, %v2048
        %v2697 = vpack.c.b16 %v2053, %v2049
        %v2698 = vpack.c.b16 %v2054, %v2050
        %v2699 = vpack.c.b16 %v2055, %v2051
        %v2700 = vpack.c.b16 %v2060, %v2056
        %v2701 = vpack.c.b16 %v2061, %v2057
        %v2702 = vpack.c.b16 %v2062, %v2058
        %v2703 = vpack.c.b16 %v2063, %v2059
        %v2704 = vpack.c.b16 %v2068, %v2064
        %v2705 = vpack.c.b16 %v2069, %v2065
        %v2706 = vpack.c.b16 %v2070, %v2066
        %v2707 = vpack.c.b16 %v2071, %v2067
        %v2708 = vpack.c.b16 %v2076, %v2072
        %v2709 = vpack.c.b16 %v2077, %v2073
        %v2710 = vpack.c.b16 %v2078, %v2074
        %v2711 = vpack.c.b16 %v2079, %v2075
        %v2712 = vpack.c.b16 %v2084, %v2080
        %v2713 = vpack.c.b16 %v2085, %v2081
        %v2714 = vpack.c.b16 %v2086, %v2082
        %v2715 = vpack.c.b16 %v2087, %v2083
        %v2716 = vpack.c.b16 %v2092, %v2088
        %v2717 = vpack.c.b16 %v2093, %v2089
        %v2718 = vpack.c.b16 %v2094, %v2090
        %v2719 = vpack.c.b16 %v2095, %v2091
        %v2720 = vpack.c.b16 %v2100, %v2096
        %v2721 = vpack.c.b16 %v2101, %v2097
        %v2722 = vpack.c.b16 %v2102, %v2098
        %v2723 = vpack.c.b16 %v2103, %v2099
        %v2724 = vpack.c.b16 %v2108, %v2104
        %v2725 = vpack.c.b16 %v2109, %v2105
        %v2726 = vpack.c.b16 %v2110, %v2106
        %v2727 = vpack.c.b16 %v2111, %v2107
        %v2728 = vpack.c.b16 %v2116, %v2112
        %v2729 = vpack.c.b16 %v2117, %v2113
        %v2730 = vpack.c.b16 %v2118, %v2114
        %v2731 = vpack.c.b16 %v2119, %v2115
        %v2732 = vpack.c.b16 %v2124, %v2120
        %v2733 = vpack.c.b16 %v2125, %v2121
        %v2734 = vpack.c.b16 %v2126, %v2122
        %v2735 = vpack.c.b16 %v2127, %v2123
        %v2736 = vpack.c.b16 %v2132, %v2128
        %v2737 = vpack.c.b16 %v2133, %v2129
        %v2738 = vpack.c.b16 %v2134, %v2130
        %v2739 = vpack.c.b16 %v2135, %v2131
        %v2740 = vpack.c.b16 %v2140, %v2136
        %v2741 = vpack.c.b16 %v2141, %v2137
        %v2742 = vpack.c.b16 %v2142, %v2138
        %v2743 = vpack.c.b16 %v2143, %v2139
        %v2744 = vpack.c.b16 %v2148, %v2144
        %v2745 = vpack.c.b16 %v2149, %v2145
        %v2746 = vpack.c.b16 %v2150, %v2146
        %v2747 = vpack.c.b16 %v2151, %v2147
        %v2748 = vpack.c.b16 %v2156, %v2152
        %v2749 = vpack.c.b16 %v2157, %v2153
        %v2750 = vpack.c.b16 %v2158, %v2154
        %v2751 = vpack.c.b16 %v2159, %v2155
        %v2752 = vpack.c.b16 %v2164, %v2160
        %v2753 = vpack.c.b16 %v2165, %v2161
        %v2754 = vpack.c.b16 %v2166, %v2162
        %v2755 = vpack.c.b16 %v2167, %v2163
        %v2756 = vpack.c.b16 %v2172, %v2168
        %v2757 = vpack.c.b16 %v2173, %v2169
        %v2758 = vpack.c.b16 %v2174, %v2170
        %v2759 = vpack.c.b16 %v2175, %v2171
        %v2760 = vpack.c.b16 %v2180, %v2176
        %v2761 = vpack.c.b16 %v2181, %v2177
        %v2762 = vpack.c.b16 %v2182, %v2178
        %v2763 = vpack.c.b16 %v2183, %v2179
        %v2764 = vpack.c.b16 %v2188, %v2184
        %v2765 = vpack.c.b16 %v2189, %v2185
        %v2766 = vpack.c.b16 %v2190, %v2186
        %v2767 = vpack.c.b16 %v2191, %v2187
        %v2768 = vpack.c.b16 %v2196, %v2192
        %v2769 = vpack.c.b16 %v2197, %v2193
        %v2770 = vpack.c.b16 %v2198, %v2194
        %v2771 = vpack.c.b16 %v2199, %v2195
        %v2772 = vpack.c.b16 %v2204, %v2200
        %v2773 = vpack.c.b16 %v2205, %v2201
        %v2774 = vpack.c.b16 %v2206, %v2202
        %v2775 = vpack.c.b16 %v2207, %v2203
        %v2776 = vpack.c.b16 %v2212, %v2208
        %v2777 = vpack.c.b16 %v2213, %v2209
        %v2778 = vpack.c.b16 %v2214, %v2210
        %v2779 = vpack.c.b16 %v2215, %v2211
        %v2780 = vpack.c.b16 %v2220, %v2216
        %v2781 = vpack.c.b16 %v2221, %v2217
        %v2782 = vpack.c.b16 %v2222, %v2218
        %v2783 = vpack.c.b16 %v2223, %v2219
        %v2784 = vpack.c.b16 %v2228, %v2224
        %v2785 = vpack.c.b16 %v2229, %v2225
        %v2786 = vpack.c.b16 %v2230, %v2226
        %v2787 = vpack.c.b16 %v2231, %v2227
        %v2788 = vpack.c.b16 %v2236, %v2232
        %v2789 = vpack.c.b16 %v2237, %v2233
        %v2790 = vpack.c.b16 %v2238, %v2234
        %v2791 = vpack.c.b16 %v2239, %v2235
        %v2792 = vpack.c.b16 %v2244, %v2240
        %v2793 = vpack.c.b16 %v2245, %v2241
        %v2794 = vpack.c.b16 %v2246, %v2242
        %v2795 = vpack.c.b16 %v2247, %v2243
        %v2796 = vpack.c.b16 %v2252, %v2248
        %v2797 = vpack.c.b16 %v2253, %v2249
        %v2798 = vpack.c.b16 %v2254, %v2250
        %v2799 = vpack.c.b16 %v2255, %v2251
        %v2800 = vpack.c.b16 %v2260, %v2256
        %v2801 = vpack.c.b16 %v2261, %v2257
        %v2802 = vpack.c.b16 %v2262, %v2258
        %v2803 = vpack.c.b16 %v2263, %v2259
        %v2804 = vpack.c.b16 %v2268, %v2264
        %v2805 = vpack.c.b16 %v2269, %v2265
        %v2806 = vpack.c.b16 %v2270, %v2266
        %v2807 = vpack.c.b16 %v2271, %v2267
        %v2808 = vpack.c.b16 %v2276, %v2272
        %v2809 = vpack.c.b16 %v2277, %v2273
        %v2810 = vpack.c.b16 %v2278, %v2274
        %v2811 = vpack.c.b16 %v2279, %v2275
        %v2812 = vpack.c.b16 %v2284, %v2280
        %v2813 = vpack.c.b16 %v2285, %v2281
        %v2814 = vpack.c.b16 %v2286, %v2282
        %v2815 = vpack.c.b16 %v2287, %v2283
        %v2816 = vpack.c.b16 %v2292, %v2288
        %v2817 = vpack.c.b16 %v2293, %v2289
        %v2818 = vpack.c.b16 %v2294, %v2290
        %v2819 = vpack.c.b16 %v2295, %v2291
        %v2820 = vpack.c.b16 %v2300, %v2296
        %v2821 = vpack.c.b16 %v2301, %v2297
        %v2822 = vpack.c.b16 %v2302, %v2298
        %v2823 = vpack.c.b16 %v2303, %v2299
        %v2824 = vpack.c.b16 %v2308, %v2304
        %v2825 = vpack.c.b16 %v2309, %v2305
        %v2826 = vpack.c.b16 %v2310, %v2306
        %v2827 = vpack.c.b16 %v2311, %v2307
        %v2828 = vpack.c.b16 %v2316, %v2312
        %v2829 = vpack.c.b16 %v2317, %v2313
        %v2830 = vpack.c.b16 %v2318, %v2314
        %v2831 = vpack.c.b16 %v2319, %v2315
        %3344 = vmatprep.subr.bf16.mxu0 %v2349
        %3345 = vmatpush1.bf16.msra.mxu0 %v2348
        %3346 = vmatprep.subr.bf16.mxu0 %v2345
        %3347 = vmatpush1.bf16.msra.mxu0 %v2344
        %3348 = vmatprep.subr.bf16.mxu0 %v2341
        %3349 = vmatpush1.bf16.msra.mxu0 %v2340
        %3350 = vmatprep.subr.bf16.mxu0 %v2337
        %3351 = vmatpush1.bf16.msra.mxu0 %v2336
        %3352 = vmatprep.subr.bf16.mxu0 %v2333
        %3353 = vmatpush1.bf16.msra.mxu0 %v2332
        %3354 = vmatprep.subr.bf16.mxu0 %v2329
        %3355 = vmatpush1.bf16.msra.mxu0 %v2328
        %3356 = vmatprep.subr.bf16.mxu0 %v2325
        %3357 = vmatpush1.bf16.msra.mxu0 %v2324
        %3358 = vmatprep.subr.bf16.mxu0 %v2321
        %3359 = vmatpush1.bf16.msra.mxu0 %v2320
        %3360 = vmatprep.subr.bf16.mxu0 %v2381
        %3361 = vmatpush2.bf16.msra.mxu0 %v2380
        %3362 = vmatprep.subr.bf16.mxu0 %v2377
        %3363 = vmatpush2.bf16.msra.mxu0 %v2376
        %3364 = vmatprep.subr.bf16.mxu0 %v2373
        %3365 = vmatpush2.bf16.msra.mxu0 %v2372
        %3366 = vmatprep.subr.bf16.mxu0 %v2369
        %3367 = vmatpush2.bf16.msra.mxu0 %v2368
        %3368 = vmatprep.subr.bf16.mxu0 %v2365
        %3369 = vmatpush2.bf16.msra.mxu0 %v2364
        %3370 = vmatprep.subr.bf16.mxu0 %v2361
        %3371 = vmatpush2.bf16.msra.mxu0 %v2360
        %3372 = vmatprep.subr.bf16.mxu0 %v2357
        %3373 = vmatpush2.bf16.msra.mxu0 %v2356
        %3374 = vmatprep.subr.bf16.mxu0 %v2353
        %3375 = vmatpush2.bf16.msra.mxu0 %v2352
        %3376 = vmatprep.mubr.bf16.mxu0 %v707
        %3377 = vmatmul.mubr.bf16.gmra.mxu0 %v693
        %v3378 = vpop.f32.mrf.mxu0
        %v3379 = vadd.f32 0.0, %v3378
        %v3380 = vpop.f32.mrf.mxu0
        %v3381 = vadd.f32 0.0, %v3380
        %v3382 = vpop.f32.mrf.mxu0
        %v3383 = vpop.f32.mrf.mxu0
        %3384 = vdwg.mxu0
        %3385 = vmatprep.subr.bf16.mxu0 %v2413
        %3386 = vmatpush1.bf16.msra.mxu0 %v2412
        %3387 = vmatprep.subr.bf16.mxu0 %v2409
        %3388 = vmatpush1.bf16.msra.mxu0 %v2408
        %3389 = vmatprep.subr.bf16.mxu0 %v2405
        %3390 = vmatpush1.bf16.msra.mxu0 %v2404
        %3391 = vmatprep.subr.bf16.mxu0 %v2401
        %3392 = vmatpush1.bf16.msra.mxu0 %v2400
        %3393 = vmatprep.subr.bf16.mxu0 %v2397
        %3394 = vmatpush1.bf16.msra.mxu0 %v2396
        %3395 = vmatprep.subr.bf16.mxu0 %v2393
        %3396 = vmatpush1.bf16.msra.mxu0 %v2392
        %3397 = vmatprep.subr.bf16.mxu0 %v2389
        %3398 = vmatpush1.bf16.msra.mxu0 %v2388
        %3399 = vmatprep.subr.bf16.mxu0 %v2385
        %3400 = vmatpush1.bf16.msra.mxu0 %v2384
        %3401 = vmatprep.subr.bf16.mxu0 %v2445
        %3402 = vmatpush2.bf16.msra.mxu0 %v2444
        %3403 = vmatprep.subr.bf16.mxu0 %v2441
        %3404 = vmatpush2.bf16.msra.mxu0 %v2440
        %3405 = vmatprep.subr.bf16.mxu0 %v2437
        %3406 = vmatpush2.bf16.msra.mxu0 %v2436
        %3407 = vmatprep.subr.bf16.mxu0 %v2433
        %3408 = vmatpush2.bf16.msra.mxu0 %v2432
        %3409 = vmatprep.subr.bf16.mxu0 %v2429
        %3410 = vmatpush2.bf16.msra.mxu0 %v2428
        %3411 = vmatprep.subr.bf16.mxu0 %v2425
        %3412 = vmatpush2.bf16.msra.mxu0 %v2424
        %3413 = vmatprep.subr.bf16.mxu0 %v2421
        %3414 = vmatpush2.bf16.msra.mxu0 %v2420
        %3415 = vmatprep.subr.bf16.mxu0 %v2417
        %3416 = vmatpush2.bf16.msra.mxu0 %v2416
        %3417 = vmatprep.mubr.bf16.mxu0 %v717
        %3418 = vmatmul.mubr.bf16.gmra.mxu0 %v715
        %v3419 = vpop.f32.mrf.mxu0
        %v3420 = vadd.f32 %v3379, %v3419
        %v3421 = vpop.f32.mrf.mxu0
        %v3422 = vadd.f32 %v3381, %v3421
        %v3423 = vpop.f32.mrf.mxu0
        %v3424 = vpop.f32.mrf.mxu0
        %3425 = vdwg.mxu0
        %3426 = vmatprep.subr.bf16.mxu0 %v2477
        %3427 = vmatpush1.bf16.msra.mxu0 %v2476
        %3428 = vmatprep.subr.bf16.mxu0 %v2473
        %3429 = vmatpush1.bf16.msra.mxu0 %v2472
        %3430 = vmatprep.subr.bf16.mxu0 %v2469
        %3431 = vmatpush1.bf16.msra.mxu0 %v2468
        %3432 = vmatprep.subr.bf16.mxu0 %v2465
        %3433 = vmatpush1.bf16.msra.mxu0 %v2464
        %3434 = vmatprep.subr.bf16.mxu0 %v2461
        %3435 = vmatpush1.bf16.msra.mxu0 %v2460
        %3436 = vmatprep.subr.bf16.mxu0 %v2457
        %3437 = vmatpush1.bf16.msra.mxu0 %v2456
        %3438 = vmatprep.subr.bf16.mxu0 %v2453
        %3439 = vmatpush1.bf16.msra.mxu0 %v2452
        %3440 = vmatprep.subr.bf16.mxu0 %v2449
        %3441 = vmatpush1.bf16.msra.mxu0 %v2448
        %3442 = vmatprep.subr.bf16.mxu0 %v2509
        %3443 = vmatpush2.bf16.msra.mxu0 %v2508
        %3444 = vmatprep.subr.bf16.mxu0 %v2505
        %3445 = vmatpush2.bf16.msra.mxu0 %v2504
        %3446 = vmatprep.subr.bf16.mxu0 %v2501
        %3447 = vmatpush2.bf16.msra.mxu0 %v2500
        %3448 = vmatprep.subr.bf16.mxu0 %v2497
        %3449 = vmatpush2.bf16.msra.mxu0 %v2496
        %3450 = vmatprep.subr.bf16.mxu0 %v2493
        %3451 = vmatpush2.bf16.msra.mxu0 %v2492
        %3452 = vmatprep.subr.bf16.mxu0 %v2489
        %3453 = vmatpush2.bf16.msra.mxu0 %v2488
        %3454 = vmatprep.subr.bf16.mxu0 %v2485
        %3455 = vmatpush2.bf16.msra.mxu0 %v2484
        %3456 = vmatprep.subr.bf16.mxu0 %v2481
        %3457 = vmatpush2.bf16.msra.mxu0 %v2480
        %3458 = vmatprep.mubr.bf16.mxu0 %v714
        %3459 = vmatmul.mubr.bf16.gmra.mxu0 %v700
        %v3460 = vpop.f32.mrf.mxu0
        %v3461 = vadd.f32 %v3420, %v3460
        %v3462 = vpop.f32.mrf.mxu0
        %v3463 = vadd.f32 %v3422, %v3462
        %v3464 = vpop.f32.mrf.mxu0
        %v3465 = vpop.f32.mrf.mxu0
        %3466 = vdwg.mxu0
        %3467 = vmatprep.subr.bf16.mxu0 %v2541
        %3468 = vmatpush1.bf16.msra.mxu0 %v2540
        %3469 = vmatprep.subr.bf16.mxu0 %v2537
        %3470 = vmatpush1.bf16.msra.mxu0 %v2536
        %3471 = vmatprep.subr.bf16.mxu0 %v2533
        %3472 = vmatpush1.bf16.msra.mxu0 %v2532
        %3473 = vmatprep.subr.bf16.mxu0 %v2529
        %3474 = vmatpush1.bf16.msra.mxu0 %v2528
        %3475 = vmatprep.subr.bf16.mxu0 %v2525
        %3476 = vmatpush1.bf16.msra.mxu0 %v2524
        %3477 = vmatprep.subr.bf16.mxu0 %v2521
        %3478 = vmatpush1.bf16.msra.mxu0 %v2520
        %3479 = vmatprep.subr.bf16.mxu0 %v2517
        %3480 = vmatpush1.bf16.msra.mxu0 %v2516
        %3481 = vmatprep.subr.bf16.mxu0 %v2513
        %3482 = vmatpush1.bf16.msra.mxu0 %v2512
        %3483 = vmatprep.subr.bf16.mxu0 %v2573
        %3484 = vmatpush2.bf16.msra.mxu0 %v2572
        %3485 = vmatprep.subr.bf16.mxu0 %v2569
        %3486 = vmatpush2.bf16.msra.mxu0 %v2568
        %3487 = vmatprep.subr.bf16.mxu0 %v2565
        %3488 = vmatpush2.bf16.msra.mxu0 %v2564
        %3489 = vmatprep.subr.bf16.mxu0 %v2561
        %3490 = vmatpush2.bf16.msra.mxu0 %v2560
        %3491 = vmatprep.subr.bf16.mxu0 %v2557
        %3492 = vmatpush2.bf16.msra.mxu0 %v2556
        %3493 = vmatprep.subr.bf16.mxu0 %v2553
        %3494 = vmatpush2.bf16.msra.mxu0 %v2552
        %3495 = vmatprep.subr.bf16.mxu0 %v2549
        %3496 = vmatpush2.bf16.msra.mxu0 %v2548
        %3497 = vmatprep.subr.bf16.mxu0 %v2545
        %3498 = vmatpush2.bf16.msra.mxu0 %v2544
        %3499 = vmatprep.mubr.bf16.mxu0 %v718
        %3500 = vmatmul.mubr.bf16.gmra.mxu0 %v716
        %v3501 = vpop.f32.mrf.mxu0
        %v3502 = vadd.f32 %v3461, %v3501
        %v3503 = vpop.f32.mrf.mxu0
        %v3504 = vadd.f32 %v3463, %v3503
        %v3505 = vpop.f32.mrf.mxu0
        %v3506 = vpop.f32.mrf.mxu0
        %3507 = vdwg.mxu0
        %3508 = vmatprep.subr.bf16.mxu0 %v2605
        %3509 = vmatpush1.bf16.msra.mxu0 %v2604
        %3510 = vmatprep.subr.bf16.mxu0 %v2601
        %3511 = vmatpush1.bf16.msra.mxu0 %v2600
        %3512 = vmatprep.subr.bf16.mxu0 %v2597
        %3513 = vmatpush1.bf16.msra.mxu0 %v2596
        %3514 = vmatprep.subr.bf16.mxu0 %v2593
        %3515 = vmatpush1.bf16.msra.mxu0 %v2592
        %3516 = vmatprep.subr.bf16.mxu0 %v2589
        %3517 = vmatpush1.bf16.msra.mxu0 %v2588
        %3518 = vmatprep.subr.bf16.mxu0 %v2585
        %3519 = vmatpush1.bf16.msra.mxu0 %v2584
        %3520 = vmatprep.subr.bf16.mxu0 %v2581
        %3521 = vmatpush1.bf16.msra.mxu0 %v2580
        %3522 = vmatprep.subr.bf16.mxu0 %v2577
        %3523 = vmatpush1.bf16.msra.mxu0 %v2576
        %3524 = vmatprep.subr.bf16.mxu0 %v2637
        %3525 = vmatpush2.bf16.msra.mxu0 %v2636
        %3526 = vmatprep.subr.bf16.mxu0 %v2633
        %3527 = vmatpush2.bf16.msra.mxu0 %v2632
        %3528 = vmatprep.subr.bf16.mxu0 %v2629
        %3529 = vmatpush2.bf16.msra.mxu0 %v2628
        %3530 = vmatprep.subr.bf16.mxu0 %v2625
        %3531 = vmatpush2.bf16.msra.mxu0 %v2624
        %3532 = vmatprep.subr.bf16.mxu0 %v2621
        %3533 = vmatpush2.bf16.msra.mxu0 %v2620
        %3534 = vmatprep.subr.bf16.mxu0 %v2617
        %3535 = vmatpush2.bf16.msra.mxu0 %v2616
        %3536 = vmatprep.subr.bf16.mxu0 %v2613
        %3537 = vmatpush2.bf16.msra.mxu0 %v2612
        %3538 = vmatprep.subr.bf16.mxu0 %v2609
        %3539 = vmatpush2.bf16.msra.mxu0 %v2608
        %3540 = vmatprep.mubr.bf16.mxu0 %v756
        %3541 = vmatmul.mubr.bf16.gmra.mxu0 %v742
        %v3542 = vpop.f32.mrf.mxu0
        %v3543 = vadd.f32 %v3502, %v3542
        %v3544 = vpop.f32.mrf.mxu0
        %v3545 = vadd.f32 %v3504, %v3544
        %v3546 = vpop.f32.mrf.mxu0
        %v3547 = vpop.f32.mrf.mxu0
        %3548 = vdwg.mxu0
        %3549 = vmatprep.subr.bf16.mxu0 %v2669
        %3550 = vmatpush1.bf16.msra.mxu0 %v2668
        %3551 = vmatprep.subr.bf16.mxu0 %v2665
        %3552 = vmatpush1.bf16.msra.mxu0 %v2664
        %3553 = vmatprep.subr.bf16.mxu0 %v2661
        %3554 = vmatpush1.bf16.msra.mxu0 %v2660
        %3555 = vmatprep.subr.bf16.mxu0 %v2657
        %3556 = vmatpush1.bf16.msra.mxu0 %v2656
        %3557 = vmatprep.subr.bf16.mxu0 %v2653
        %3558 = vmatpush1.bf16.msra.mxu0 %v2652
        %3559 = vmatprep.subr.bf16.mxu0 %v2649
        %3560 = vmatpush1.bf16.msra.mxu0 %v2648
        %3561 = vmatprep.subr.bf16.mxu0 %v2645
        %3562 = vmatpush1.bf16.msra.mxu0 %v2644
        %3563 = vmatprep.subr.bf16.mxu0 %v2641
        %3564 = vmatpush1.bf16.msra.mxu0 %v2640
        %3565 = vmatprep.subr.bf16.mxu0 %v2701
        %3566 = vmatpush2.bf16.msra.mxu0 %v2700
        %3567 = vmatprep.subr.bf16.mxu0 %v2697
        %3568 = vmatpush2.bf16.msra.mxu0 %v2696
        %3569 = vmatprep.subr.bf16.mxu0 %v2693
        %3570 = vmatpush2.bf16.msra.mxu0 %v2692
        %3571 = vmatprep.subr.bf16.mxu0 %v2689
        %3572 = vmatpush2.bf16.msra.mxu0 %v2688
        %3573 = vmatprep.subr.bf16.mxu0 %v2685
        %3574 = vmatpush2.bf16.msra.mxu0 %v2684
        %3575 = vmatprep.subr.bf16.mxu0 %v2681
        %3576 = vmatpush2.bf16.msra.mxu0 %v2680
        %3577 = vmatprep.subr.bf16.mxu0 %v2677
        %3578 = vmatpush2.bf16.msra.mxu0 %v2676
        %3579 = vmatprep.subr.bf16.mxu0 %v2673
        %3580 = vmatpush2.bf16.msra.mxu0 %v2672
        %3581 = vmatprep.mubr.bf16.mxu0 %v766
        %3582 = vmatmul.mubr.bf16.gmra.mxu0 %v764
        %v3583 = vpop.f32.mrf.mxu0
        %v3584 = vadd.f32 %v3543, %v3583
        %v3585 = vpop.f32.mrf.mxu0
        %v3586 = vadd.f32 %v3545, %v3585
        %v3587 = vpop.f32.mrf.mxu0
        %v3588 = vpop.f32.mrf.mxu0
        %3589 = vdwg.mxu0
        %3590 = vmatprep.subr.bf16.mxu0 %v2733
        %3591 = vmatpush1.bf16.msra.mxu0 %v2732
        %3592 = vmatprep.subr.bf16.mxu0 %v2729
        %3593 = vmatpush1.bf16.msra.mxu0 %v2728
        %3594 = vmatprep.subr.bf16.mxu0 %v2725
        %3595 = vmatpush1.bf16.msra.mxu0 %v2724
        %3596 = vmatprep.subr.bf16.mxu0 %v2721
        %3597 = vmatpush1.bf16.msra.mxu0 %v2720
        %3598 = vmatprep.subr.bf16.mxu0 %v2717
        %3599 = vmatpush1.bf16.msra.mxu0 %v2716
        %3600 = vmatprep.subr.bf16.mxu0 %v2713
        %3601 = vmatpush1.bf16.msra.mxu0 %v2712
        %3602 = vmatprep.subr.bf16.mxu0 %v2709
        %3603 = vmatpush1.bf16.msra.mxu0 %v2708
        %3604 = vmatprep.subr.bf16.mxu0 %v2705
        %3605 = vmatpush1.bf16.msra.mxu0 %v2704
        %3606 = vmatprep.subr.bf16.mxu0 %v2765
        %3607 = vmatpush2.bf16.msra.mxu0 %v2764
        %3608 = vmatprep.subr.bf16.mxu0 %v2761
        %3609 = vmatpush2.bf16.msra.mxu0 %v2760
        %3610 = vmatprep.subr.bf16.mxu0 %v2757
        %3611 = vmatpush2.bf16.msra.mxu0 %v2756
        %3612 = vmatprep.subr.bf16.mxu0 %v2753
        %3613 = vmatpush2.bf16.msra.mxu0 %v2752
        %3614 = vmatprep.subr.bf16.mxu0 %v2749
        %3615 = vmatpush2.bf16.msra.mxu0 %v2748
        %3616 = vmatprep.subr.bf16.mxu0 %v2745
        %3617 = vmatpush2.bf16.msra.mxu0 %v2744
        %3618 = vmatprep.subr.bf16.mxu0 %v2741
        %3619 = vmatpush2.bf16.msra.mxu0 %v2740
        %3620 = vmatprep.subr.bf16.mxu0 %v2737
        %3621 = vmatpush2.bf16.msra.mxu0 %v2736
        %3622 = vmatprep.mubr.bf16.mxu0 %v763
        %3623 = vmatmul.mubr.bf16.gmra.mxu0 %v749
        %v3624 = vpop.f32.mrf.mxu0
        %v3625 = vadd.f32 %v3584, %v3624
        %v3626 = vpop.f32.mrf.mxu0
        %v3627 = vadd.f32 %v3586, %v3626
        %v3628 = vpop.f32.mrf.mxu0
        %v3629 = vpop.f32.mrf.mxu0
        %3630 = vdwg.mxu0
        %3631 = vmatprep.subr.bf16.mxu0 %v2797
        %3632 = vmatpush1.bf16.msra.mxu0 %v2796
        %3633 = vmatprep.subr.bf16.mxu0 %v2793
        %3634 = vmatpush1.bf16.msra.mxu0 %v2792
        %3635 = vmatprep.subr.bf16.mxu0 %v2789
        %3636 = vmatpush1.bf16.msra.mxu0 %v2788
        %3637 = vmatprep.subr.bf16.mxu0 %v2785
        %3638 = vmatpush1.bf16.msra.mxu0 %v2784
        %3639 = vmatprep.subr.bf16.mxu0 %v2781
        %3640 = vmatpush1.bf16.msra.mxu0 %v2780
        %3641 = vmatprep.subr.bf16.mxu0 %v2777
        %3642 = vmatpush1.bf16.msra.mxu0 %v2776
        %3643 = vmatprep.subr.bf16.mxu0 %v2773
        %3644 = vmatpush1.bf16.msra.mxu0 %v2772
        %3645 = vmatprep.subr.bf16.mxu0 %v2769
        %3646 = vmatpush1.bf16.msra.mxu0 %v2768
        %3647 = vmatprep.subr.bf16.mxu0 %v2829
        %3648 = vmatpush2.bf16.msra.mxu0 %v2828
        %3649 = vmatprep.subr.bf16.mxu0 %v2825
        %3650 = vmatpush2.bf16.msra.mxu0 %v2824
        %3651 = vmatprep.subr.bf16.mxu0 %v2821
        %3652 = vmatpush2.bf16.msra.mxu0 %v2820
        %3653 = vmatprep.subr.bf16.mxu0 %v2817
        %3654 = vmatpush2.bf16.msra.mxu0 %v2816
        %3655 = vmatprep.subr.bf16.mxu0 %v2813
        %3656 = vmatpush2.bf16.msra.mxu0 %v2812
        %3657 = vmatprep.subr.bf16.mxu0 %v2809
        %3658 = vmatpush2.bf16.msra.mxu0 %v2808
        %3659 = vmatprep.subr.bf16.mxu0 %v2805
        %3660 = vmatpush2.bf16.msra.mxu0 %v2804
        %3661 = vmatprep.subr.bf16.mxu0 %v2801
        %3662 = vmatpush2.bf16.msra.mxu0 %v2800
        %3663 = vmatprep.mubr.bf16.mxu0 %v767
        %3664 = vmatmul.mubr.bf16.gmra.mxu0 %v765
        %v3665 = vpop.f32.mrf.mxu0
        %v3666 = vadd.f32 %v3625, %v3665
        %v3667 = vpop.f32.mrf.mxu0
        %v3668 = vadd.f32 %v3627, %v3667
        %v3669 = vpop.f32.mrf.mxu0
        %v3670 = vpop.f32.mrf.mxu0
        %3671 = vdwg.mxu0
        %3672 = vmatprep.subr.bf16.mxu0 %v2351
        %3673 = vmatpush1.bf16.msra.mxu0 %v2350
        %3674 = vmatprep.subr.bf16.mxu0 %v2347
        %3675 = vmatpush1.bf16.msra.mxu0 %v2346
        %3676 = vmatprep.subr.bf16.mxu0 %v2343
        %3677 = vmatpush1.bf16.msra.mxu0 %v2342
        %3678 = vmatprep.subr.bf16.mxu0 %v2339
        %3679 = vmatpush1.bf16.msra.mxu0 %v2338
        %3680 = vmatprep.subr.bf16.mxu0 %v2335
        %3681 = vmatpush1.bf16.msra.mxu0 %v2334
        %3682 = vmatprep.subr.bf16.mxu0 %v2331
        %3683 = vmatpush1.bf16.msra.mxu0 %v2330
        %3684 = vmatprep.subr.bf16.mxu0 %v2327
        %3685 = vmatpush1.bf16.msra.mxu0 %v2326
        %3686 = vmatprep.subr.bf16.mxu0 %v2323
        %3687 = vmatpush1.bf16.msra.mxu0 %v2322
        %3688 = vmatprep.subr.bf16.mxu0 %v2383
        %3689 = vmatpush2.bf16.msra.mxu0 %v2382
        %3690 = vmatprep.subr.bf16.mxu0 %v2379
        %3691 = vmatpush2.bf16.msra.mxu0 %v2378
        %3692 = vmatprep.subr.bf16.mxu0 %v2375
        %3693 = vmatpush2.bf16.msra.mxu0 %v2374
        %3694 = vmatprep.subr.bf16.mxu0 %v2371
        %3695 = vmatpush2.bf16.msra.mxu0 %v2370
        %3696 = vmatprep.subr.bf16.mxu0 %v2367
        %3697 = vmatpush2.bf16.msra.mxu0 %v2366
        %3698 = vmatprep.subr.bf16.mxu0 %v2363
        %3699 = vmatpush2.bf16.msra.mxu0 %v2362
        %3700 = vmatprep.subr.bf16.mxu0 %v2359
        %3701 = vmatpush2.bf16.msra.mxu0 %v2358
        %3702 = vmatprep.subr.bf16.mxu0 %v2355
        %3703 = vmatpush2.bf16.msra.mxu0 %v2354
        %3704 = vmatprep.mubr.bf16.mxu0 %v707
        %3705 = vmatmul.mubr.bf16.gmra.mxu0 %v693
        %v3706 = vpop.f32.mrf.mxu0
        %v3707 = vadd.f32 0.0, %v3706
        %v3708 = vpop.f32.mrf.mxu0
        %v3709 = vadd.f32 0.0, %v3708
        %v3710 = vpop.f32.mrf.mxu0
        %v3711 = vpop.f32.mrf.mxu0
        %3712 = vdwg.mxu0
        %3713 = vmatprep.subr.bf16.mxu0 %v2415
        %3714 = vmatpush1.bf16.msra.mxu0 %v2414
        %3715 = vmatprep.subr.bf16.mxu0 %v2411
        %3716 = vmatpush1.bf16.msra.mxu0 %v2410
        %3717 = vmatprep.subr.bf16.mxu0 %v2407
        %3718 = vmatpush1.bf16.msra.mxu0 %v2406
        %3719 = vmatprep.subr.bf16.mxu0 %v2403
        %3720 = vmatpush1.bf16.msra.mxu0 %v2402
        %3721 = vmatprep.subr.bf16.mxu0 %v2399
        %3722 = vmatpush1.bf16.msra.mxu0 %v2398
        %3723 = vmatprep.subr.bf16.mxu0 %v2395
        %3724 = vmatpush1.bf16.msra.mxu0 %v2394
        %3725 = vmatprep.subr.bf16.mxu0 %v2391
        %3726 = vmatpush1.bf16.msra.mxu0 %v2390
        %3727 = vmatprep.subr.bf16.mxu0 %v2387
        %3728 = vmatpush1.bf16.msra.mxu0 %v2386
        %3729 = vmatprep.subr.bf16.mxu0 %v2447
        %3730 = vmatpush2.bf16.msra.mxu0 %v2446
        %3731 = vmatprep.subr.bf16.mxu0 %v2443
        %3732 = vmatpush2.bf16.msra.mxu0 %v2442
        %3733 = vmatprep.subr.bf16.mxu0 %v2439
        %3734 = vmatpush2.bf16.msra.mxu0 %v2438
        %3735 = vmatprep.subr.bf16.mxu0 %v2435
        %3736 = vmatpush2.bf16.msra.mxu0 %v2434
        %3737 = vmatprep.subr.bf16.mxu0 %v2431
        %3738 = vmatpush2.bf16.msra.mxu0 %v2430
        %3739 = vmatprep.subr.bf16.mxu0 %v2427
        %3740 = vmatpush2.bf16.msra.mxu0 %v2426
        %3741 = vmatprep.subr.bf16.mxu0 %v2423
        %3742 = vmatpush2.bf16.msra.mxu0 %v2422
        %3743 = vmatprep.subr.bf16.mxu0 %v2419
        %3744 = vmatpush2.bf16.msra.mxu0 %v2418
        %3745 = vmatprep.mubr.bf16.mxu0 %v717
        %3746 = vmatmul.mubr.bf16.gmra.mxu0 %v715
        %v3747 = vpop.f32.mrf.mxu0
        %v3748 = vadd.f32 %v3707, %v3747
        %v3749 = vpop.f32.mrf.mxu0
        %v3750 = vadd.f32 %v3709, %v3749
        %v3751 = vpop.f32.mrf.mxu0
        %v3752 = vpop.f32.mrf.mxu0
        %3753 = vdwg.mxu0
        %3754 = vmatprep.subr.bf16.mxu0 %v2479
        %3755 = vmatpush1.bf16.msra.mxu0 %v2478
        %3756 = vmatprep.subr.bf16.mxu0 %v2475
        %3757 = vmatpush1.bf16.msra.mxu0 %v2474
        %3758 = vmatprep.subr.bf16.mxu0 %v2471
        %3759 = vmatpush1.bf16.msra.mxu0 %v2470
        %3760 = vmatprep.subr.bf16.mxu0 %v2467
        %3761 = vmatpush1.bf16.msra.mxu0 %v2466
        %3762 = vmatprep.subr.bf16.mxu0 %v2463
        %3763 = vmatpush1.bf16.msra.mxu0 %v2462
        %3764 = vmatprep.subr.bf16.mxu0 %v2459
        %3765 = vmatpush1.bf16.msra.mxu0 %v2458
        %3766 = vmatprep.subr.bf16.mxu0 %v2455
        %3767 = vmatpush1.bf16.msra.mxu0 %v2454
        %3768 = vmatprep.subr.bf16.mxu0 %v2451
        %3769 = vmatpush1.bf16.msra.mxu0 %v2450
        %3770 = vmatprep.subr.bf16.mxu0 %v2511
        %3771 = vmatpush2.bf16.msra.mxu0 %v2510
        %3772 = vmatprep.subr.bf16.mxu0 %v2507
        %3773 = vmatpush2.bf16.msra.mxu0 %v2506
        %3774 = vmatprep.subr.bf16.mxu0 %v2503
        %3775 = vmatpush2.bf16.msra.mxu0 %v2502
        %3776 = vmatprep.subr.bf16.mxu0 %v2499
        %3777 = vmatpush2.bf16.msra.mxu0 %v2498
        %3778 = vmatprep.subr.bf16.mxu0 %v2495
        %3779 = vmatpush2.bf16.msra.mxu0 %v2494
        %3780 = vmatprep.subr.bf16.mxu0 %v2491
        %3781 = vmatpush2.bf16.msra.mxu0 %v2490
        %3782 = vmatprep.subr.bf16.mxu0 %v2487
        %3783 = vmatpush2.bf16.msra.mxu0 %v2486
        %3784 = vmatprep.subr.bf16.mxu0 %v2483
        %3785 = vmatpush2.bf16.msra.mxu0 %v2482
        %3786 = vmatprep.mubr.bf16.mxu0 %v714
        %3787 = vmatmul.mubr.bf16.gmra.mxu0 %v700
        %v3788 = vpop.f32.mrf.mxu0
        %v3789 = vadd.f32 %v3748, %v3788
        %v3790 = vpop.f32.mrf.mxu0
        %v3791 = vadd.f32 %v3750, %v3790
        %v3792 = vpop.f32.mrf.mxu0
        %v3793 = vpop.f32.mrf.mxu0
        %3794 = vdwg.mxu0
        %3795 = vmatprep.subr.bf16.mxu0 %v2543
        %3796 = vmatpush1.bf16.msra.mxu0 %v2542
        %3797 = vmatprep.subr.bf16.mxu0 %v2539
        %3798 = vmatpush1.bf16.msra.mxu0 %v2538
        %3799 = vmatprep.subr.bf16.mxu0 %v2535
        %3800 = vmatpush1.bf16.msra.mxu0 %v2534
        %3801 = vmatprep.subr.bf16.mxu0 %v2531
        %3802 = vmatpush1.bf16.msra.mxu0 %v2530
        %3803 = vmatprep.subr.bf16.mxu0 %v2527
        %3804 = vmatpush1.bf16.msra.mxu0 %v2526
        %3805 = vmatprep.subr.bf16.mxu0 %v2523
        %3806 = vmatpush1.bf16.msra.mxu0 %v2522
        %3807 = vmatprep.subr.bf16.mxu0 %v2519
        %3808 = vmatpush1.bf16.msra.mxu0 %v2518
        %3809 = vmatprep.subr.bf16.mxu0 %v2515
        %3810 = vmatpush1.bf16.msra.mxu0 %v2514
        %3811 = vmatprep.subr.bf16.mxu0 %v2575
        %3812 = vmatpush2.bf16.msra.mxu0 %v2574
        %3813 = vmatprep.subr.bf16.mxu0 %v2571
        %3814 = vmatpush2.bf16.msra.mxu0 %v2570
        %3815 = vmatprep.subr.bf16.mxu0 %v2567
        %3816 = vmatpush2.bf16.msra.mxu0 %v2566
        %3817 = vmatprep.subr.bf16.mxu0 %v2563
        %3818 = vmatpush2.bf16.msra.mxu0 %v2562
        %3819 = vmatprep.subr.bf16.mxu0 %v2559
        %3820 = vmatpush2.bf16.msra.mxu0 %v2558
        %3821 = vmatprep.subr.bf16.mxu0 %v2555
        %3822 = vmatpush2.bf16.msra.mxu0 %v2554
        %3823 = vmatprep.subr.bf16.mxu0 %v2551
        %3824 = vmatpush2.bf16.msra.mxu0 %v2550
        %3825 = vmatprep.subr.bf16.mxu0 %v2547
        %3826 = vmatpush2.bf16.msra.mxu0 %v2546
        %3827 = vmatprep.mubr.bf16.mxu0 %v718
        %3828 = vmatmul.mubr.bf16.gmra.mxu0 %v716
        %v3829 = vpop.f32.mrf.mxu0
        %v3830 = vadd.f32 %v3789, %v3829
        %v3831 = vpop.f32.mrf.mxu0
        %v3832 = vadd.f32 %v3791, %v3831
        %v3833 = vpop.f32.mrf.mxu0
        %v3834 = vpop.f32.mrf.mxu0
        %3835 = vdwg.mxu0
        %3836 = vmatprep.subr.bf16.mxu0 %v2607
        %3837 = vmatpush1.bf16.msra.mxu0 %v2606
        %3838 = vmatprep.subr.bf16.mxu0 %v2603
        %3839 = vmatpush1.bf16.msra.mxu0 %v2602
        %3840 = vmatprep.subr.bf16.mxu0 %v2599
        %3841 = vmatpush1.bf16.msra.mxu0 %v2598
        %3842 = vmatprep.subr.bf16.mxu0 %v2595
        %3843 = vmatpush1.bf16.msra.mxu0 %v2594
        %3844 = vmatprep.subr.bf16.mxu0 %v2591
        %3845 = vmatpush1.bf16.msra.mxu0 %v2590
        %3846 = vmatprep.subr.bf16.mxu0 %v2587
        %3847 = vmatpush1.bf16.msra.mxu0 %v2586
        %3848 = vmatprep.subr.bf16.mxu0 %v2583
        %3849 = vmatpush1.bf16.msra.mxu0 %v2582
        %3850 = vmatprep.subr.bf16.mxu0 %v2579
        %3851 = vmatpush1.bf16.msra.mxu0 %v2578
        %3852 = vmatprep.subr.bf16.mxu0 %v2639
        %3853 = vmatpush2.bf16.msra.mxu0 %v2638
        %3854 = vmatprep.subr.bf16.mxu0 %v2635
        %3855 = vmatpush2.bf16.msra.mxu0 %v2634
        %3856 = vmatprep.subr.bf16.mxu0 %v2631
        %3857 = vmatpush2.bf16.msra.mxu0 %v2630
        %3858 = vmatprep.subr.bf16.mxu0 %v2627
        %3859 = vmatpush2.bf16.msra.mxu0 %v2626
        %3860 = vmatprep.subr.bf16.mxu0 %v2623
        %3861 = vmatpush2.bf16.msra.mxu0 %v2622
        %3862 = vmatprep.subr.bf16.mxu0 %v2619
        %3863 = vmatpush2.bf16.msra.mxu0 %v2618
        %3864 = vmatprep.subr.bf16.mxu0 %v2615
        %3865 = vmatpush2.bf16.msra.mxu0 %v2614
        %3866 = vmatprep.subr.bf16.mxu0 %v2611
        %3867 = vmatpush2.bf16.msra.mxu0 %v2610
        %3868 = vmatprep.mubr.bf16.mxu0 %v756
        %3869 = vmatmul.mubr.bf16.gmra.mxu0 %v742
        %v3870 = vpop.f32.mrf.mxu0
        %v3871 = vadd.f32 %v3830, %v3870
        %v3872 = vpop.f32.mrf.mxu0
        %v3873 = vadd.f32 %v3832, %v3872
        %v3874 = vpop.f32.mrf.mxu0
        %v3875 = vpop.f32.mrf.mxu0
        %3876 = vdwg.mxu0
        %3877 = vmatprep.subr.bf16.mxu0 %v2671
        %3878 = vmatpush1.bf16.msra.mxu0 %v2670
        %3879 = vmatprep.subr.bf16.mxu0 %v2667
        %3880 = vmatpush1.bf16.msra.mxu0 %v2666
        %3881 = vmatprep.subr.bf16.mxu0 %v2663
        %3882 = vmatpush1.bf16.msra.mxu0 %v2662
        %3883 = vmatprep.subr.bf16.mxu0 %v2659
        %3884 = vmatpush1.bf16.msra.mxu0 %v2658
        %3885 = vmatprep.subr.bf16.mxu0 %v2655
        %3886 = vmatpush1.bf16.msra.mxu0 %v2654
        %3887 = vmatprep.subr.bf16.mxu0 %v2651
        %3888 = vmatpush1.bf16.msra.mxu0 %v2650
        %3889 = vmatprep.subr.bf16.mxu0 %v2647
        %3890 = vmatpush1.bf16.msra.mxu0 %v2646
        %3891 = vmatprep.subr.bf16.mxu0 %v2643
        %3892 = vmatpush1.bf16.msra.mxu0 %v2642
        %3893 = vmatprep.subr.bf16.mxu0 %v2703
        %3894 = vmatpush2.bf16.msra.mxu0 %v2702
        %3895 = vmatprep.subr.bf16.mxu0 %v2699
        %3896 = vmatpush2.bf16.msra.mxu0 %v2698
        %3897 = vmatprep.subr.bf16.mxu0 %v2695
        %3898 = vmatpush2.bf16.msra.mxu0 %v2694
        %3899 = vmatprep.subr.bf16.mxu0 %v2691
        %3900 = vmatpush2.bf16.msra.mxu0 %v2690
        %3901 = vmatprep.subr.bf16.mxu0 %v2687
        %3902 = vmatpush2.bf16.msra.mxu0 %v2686
        %3903 = vmatprep.subr.bf16.mxu0 %v2683
        %3904 = vmatpush2.bf16.msra.mxu0 %v2682
        %3905 = vmatprep.subr.bf16.mxu0 %v2679
        %3906 = vmatpush2.bf16.msra.mxu0 %v2678
        %3907 = vmatprep.subr.bf16.mxu0 %v2675
        %3908 = vmatpush2.bf16.msra.mxu0 %v2674
        %3909 = vmatprep.mubr.bf16.mxu0 %v766
        %3910 = vmatmul.mubr.bf16.gmra.mxu0 %v764
        %v3911 = vpop.f32.mrf.mxu0
        %v3912 = vadd.f32 %v3871, %v3911
        %v3913 = vpop.f32.mrf.mxu0
        %v3914 = vadd.f32 %v3873, %v3913
        %v3915 = vpop.f32.mrf.mxu0
        %v3916 = vpop.f32.mrf.mxu0
        %3917 = vdwg.mxu0
        %3918 = vmatprep.subr.bf16.mxu0 %v2735
        %3919 = vmatpush1.bf16.msra.mxu0 %v2734
        %3920 = vmatprep.subr.bf16.mxu0 %v2731
        %3921 = vmatpush1.bf16.msra.mxu0 %v2730
        %3922 = vmatprep.subr.bf16.mxu0 %v2727
        %3923 = vmatpush1.bf16.msra.mxu0 %v2726
        %3924 = vmatprep.subr.bf16.mxu0 %v2723
        %3925 = vmatpush1.bf16.msra.mxu0 %v2722
        %3926 = vmatprep.subr.bf16.mxu0 %v2719
        %3927 = vmatpush1.bf16.msra.mxu0 %v2718
        %3928 = vmatprep.subr.bf16.mxu0 %v2715
        %3929 = vmatpush1.bf16.msra.mxu0 %v2714
        %3930 = vmatprep.subr.bf16.mxu0 %v2711
        %3931 = vmatpush1.bf16.msra.mxu0 %v2710
        %3932 = vmatprep.subr.bf16.mxu0 %v2707
        %3933 = vmatpush1.bf16.msra.mxu0 %v2706
        %3934 = vmatprep.subr.bf16.mxu0 %v2767
        %3935 = vmatpush2.bf16.msra.mxu0 %v2766
        %3936 = vmatprep.subr.bf16.mxu0 %v2763
        %3937 = vmatpush2.bf16.msra.mxu0 %v2762
        %3938 = vmatprep.subr.bf16.mxu0 %v2759
        %3939 = vmatpush2.bf16.msra.mxu0 %v2758
        %3940 = vmatprep.subr.bf16.mxu0 %v2755
        %3941 = vmatpush2.bf16.msra.mxu0 %v2754
        %3942 = vmatprep.subr.bf16.mxu0 %v2751
        %3943 = vmatpush2.bf16.msra.mxu0 %v2750
        %3944 = vmatprep.subr.bf16.mxu0 %v2747
        %3945 = vmatpush2.bf16.msra.mxu0 %v2746
        %3946 = vmatprep.subr.bf16.mxu0 %v2743
        %3947 = vmatpush2.bf16.msra.mxu0 %v2742
        %3948 = vmatprep.subr.bf16.mxu0 %v2739
        %3949 = vmatpush2.bf16.msra.mxu0 %v2738
        %3950 = vmatprep.mubr.bf16.mxu0 %v763
        %3951 = vmatmul.mubr.bf16.gmra.mxu0 %v749
        %v3952 = vpop.f32.mrf.mxu0
        %v3953 = vadd.f32 %v3912, %v3952
        %v3954 = vpop.f32.mrf.mxu0
        %v3955 = vadd.f32 %v3914, %v3954
        %v3956 = vpop.f32.mrf.mxu0
        %v3957 = vpop.f32.mrf.mxu0
        %3958 = vdwg.mxu0
        %3959 = vmatprep.subr.bf16.mxu0 %v2799
        %3960 = vmatpush1.bf16.msra.mxu0 %v2798
        %3961 = vmatprep.subr.bf16.mxu0 %v2795
        %3962 = vmatpush1.bf16.msra.mxu0 %v2794
        %3963 = vmatprep.subr.bf16.mxu0 %v2791
        %3964 = vmatpush1.bf16.msra.mxu0 %v2790
        %3965 = vmatprep.subr.bf16.mxu0 %v2787
        %3966 = vmatpush1.bf16.msra.mxu0 %v2786
        %3967 = vmatprep.subr.bf16.mxu0 %v2783
        %3968 = vmatpush1.bf16.msra.mxu0 %v2782
        %3969 = vmatprep.subr.bf16.mxu0 %v2779
        %3970 = vmatpush1.bf16.msra.mxu0 %v2778
        %3971 = vmatprep.subr.bf16.mxu0 %v2775
        %3972 = vmatpush1.bf16.msra.mxu0 %v2774
        %3973 = vmatprep.subr.bf16.mxu0 %v2771
        %3974 = vmatpush1.bf16.msra.mxu0 %v2770
        %3975 = vmatprep.subr.bf16.mxu0 %v2831
        %3976 = vmatpush2.bf16.msra.mxu0 %v2830
        %3977 = vmatprep.subr.bf16.mxu0 %v2827
        %3978 = vmatpush2.bf16.msra.mxu0 %v2826
        %3979 = vmatprep.subr.bf16.mxu0 %v2823
        %3980 = vmatpush2.bf16.msra.mxu0 %v2822
        %3981 = vmatprep.subr.bf16.mxu0 %v2819
        %3982 = vmatpush2.bf16.msra.mxu0 %v2818
        %3983 = vmatprep.subr.bf16.mxu0 %v2815
        %3984 = vmatpush2.bf16.msra.mxu0 %v2814
        %3985 = vmatprep.subr.bf16.mxu0 %v2811
        %3986 = vmatpush2.bf16.msra.mxu0 %v2810
        %3987 = vmatprep.subr.bf16.mxu0 %v2807
        %3988 = vmatpush2.bf16.msra.mxu0 %v2806
        %3989 = vmatprep.subr.bf16.mxu0 %v2803
        %3990 = vmatpush2.bf16.msra.mxu0 %v2802
        %3991 = vmatprep.mubr.bf16.mxu0 %v767
        %3992 = vmatmul.mubr.bf16.gmra.mxu0 %v765
        %v3993 = vpop.f32.mrf.mxu0
        %v3994 = vadd.f32 %v3953, %v3993
        %v3995 = vpop.f32.mrf.mxu0
        %v3996 = vadd.f32 %v3955, %v3995
        %v3997 = vpop.f32.mrf.mxu0
        %v3998 = vpop.f32.mrf.mxu0
        %3999 = vdwg.mxu0
        %v4000 = vpack.c.bf16 %v3666, %v3666
        %v4001 = vpack.c.bf16 %v3668, %v3668
        %v4002 = vpack.c.bf16 %v3994, %v3994
        %v4003 = vpack.c.bf16 %v3996, %v3996
        %v4008 = vcombine.low %v4000, %v4001
        %v4009 = vcombine.low %v4002, %v4003
        %v4011 = vunpack.c.l.s4 1966171168
        %v4012 = vunpack.c.0.s8 %v4011
        %v4013 = vlaneseq
        %v4014 = vshrl.u32 %v4013, 7
        %v4015 = vsub.s32 %v4012, %v4014
        %v4016 = vrot.slane %v4008, %v4015
        %v4018 = vunpack.c.l.s4 1966171168
        %v4019 = vunpack.c.0.s8 %v4018
        %v4020 = vlaneseq
        %v4021 = vshrl.u32 %v4020, 7
        %v4022 = vsub.s32 %v4019, %v4021
        %v4023 = vrot.slane %v4009, %v4022
        %v4024 = vcombine.low %v4016, %v4023
        %v4026 = vunpack.c.l.s4 1966171168
        %v4027 = vunpack.c.0.s8 %v4026
        %v4028 = vlaneseq
        %v4029 = vshrl.u32 %v4028, 7
        %v4030 = vsub.s32 %v4027, %v4029
        %v4031 = vrot.slane %v4024, %v4030
        %vm4033 = vcmask 1040384
        %vm4034 = vsmask.f32 256
        %vm4035 = vmand %vm4033, %vm4034
        %vm4036 = vcmask 1041409
        %vm4037 = vsmask.f32 1280
        %vm4038 = vmand %vm4036, %vm4037
        %vm4039 = vmor %vm4038, %vm4035
        %vm4040 = vcmask 1042434
        %vm4041 = vsmask.f32 2304
        %vm4042 = vmand %vm4040, %vm4041
        %vm4043 = vmor %vm4042, %vm4039
        %vm4044 = vcmask 1043459
        %vm4045 = vsmask.f32 3328
        %vm4046 = vmand %vm4044, %vm4045
        %vm4047 = vmor %vm4046, %vm4043
        %v4048 = vld [vmem:[%s153] sm:$0xf]
        %v4049 = vsel %vm4047, %v4031, %v4048
        %4050 = vst [vmem:[%s153] sm:$0xf] %v4049
        %p4051 = scmp.lt.s32.totalorder %s14, 1
        %s4052 = scalar_select %p4051, %s14, 1
        %s4053 = smul.addr %s4052, 4
        %s4054 = scalar_lea.vmem %s2, %s4053
        // Predicated region
        $region33: #{tpu_custom_call.1} parent=27 // pred_check
          %p4055 = pneg %p79
        $region34: #{tpu_custom_call.1} parent=27 // pred_check_branch
          %4057 = sbr.rel (%p4055) target = $region36
        $region35: #{tpu_custom_call.1} parent=27 // pred_region
          _
        $region36: #{tpu_custom_call.1} parent=27 // pred_fallthru
          _
      $region28: #{tpu_custom_call.1} parent=5 // pred_fallthru
        _
      %p4058 = scmp.le.s32.totalorder 2, %s9
      // Predicated region
      $region37: #{tpu_custom_call.1} parent=5 // pred_check
        %p4059 = pneg %p4058
      $region38: #{tpu_custom_call.1} parent=5 // pred_check_branch
        %4061 = sbr.rel (%p4059) target = $region40
      $region39: #{tpu_custom_call.1} parent=5 // pred_region
        %s4062 = ssub.s32 %s9, 2
        // Predicated region
        $region41: #{tpu_custom_call.1} parent=39 // pred_check
          %p4063 = pneg %p85
        $region42: #{tpu_custom_call.1} parent=39 // pred_check_branch
          %4065 = sbr.rel (%p4063) target = $region44
        $region43: #{tpu_custom_call.1} parent=39 // pred_region
          %p4066 = scmp.lt.s32.totalorder %s15, 1
          %s4067 = scalar_select %p4066, %s15, 1
          %s4068 = smul.addr %s4067, 4
          %s4069 = scalar_lea.vmem %s2, %s4068
        $region44: #{tpu_custom_call.1} parent=39 // pred_fallthru
          _
      $region40: #{tpu_custom_call.1} parent=5 // pred_fallthru
        _
    $region6: #{tpu_custom_call.1} parent=1 // loop_footer
      %s13 = sadd.s32 1, %s9
    $region7: #{tpu_custom_call.1} parent=1 // loop_footer_branch
      %8 = sbr.rel target = $region3
    $region8: #{tpu_custom_call.1} parent=1 // loop_exit
      _
    %4070 = vsyncpa [#allocation3], 1
    %s4071 = scalar_lea.sflag [#allocation3], 1
    %4072 = vsyncpa %s4071, 1

</llo_original>
